<compile_context>
chip_gen: v7x
topology: tpu7x:2x2x1
jax: 0.10.0
libtpu: 0.0.40
codegen_flags: <defaults>
</compile_context>

<pallas_src>
import functools

import jax
import jax.numpy as jnp
import numpy as np
from jax import lax
from jax.experimental import pallas as pl
from jax.experimental.pallas import tpu as pltpu


VMEM_LIMIT_BYTES = 32 * 1024 * 1024   # explicit scoped-VMEM budget (v5e default is 16 MiB)


def _round_up(x, m):
    return (x + m - 1) // m * m


def _pick_tile(m, t_max, unit=8):
    """Largest tile (multiple of `unit`, <= t_max) for an m-row problem, but
    prefer >= 2 grid steps so v7x's two TensorCores both get work."""
    t = min(t_max, _round_up(m, unit))
    if m >= 2 * unit and _round_up(m, t) // t < 2:
        t = min(t, max(unit, _round_up(-(-m // 2), unit)))
    return t


# ---------------------------------------------------------------------------
# Kernel 1/2: conv (im2col matmul) + bias + ReLU + 2x2/2 max-pool, fused.
# The four pooling phases arrive stacked along a leading dim; one fused matmul
# computes all of them, then a 4-way max over tm-aligned row blocks implements
# the pool (bias-add and ReLU commute with the max, applied once).
# ---------------------------------------------------------------------------
def _conv_pool_kernel(c_ref, w_ref, b_ref, o_ref):
    tm = o_ref.shape[0]
    k = c_ref.shape[-1]
    cols = c_ref[...].reshape(4 * tm, k)          # merge leading phase dim (layout no-op)
    acc = jnp.dot(cols, w_ref[...], preferred_element_type=jnp.float32)   # (4*tm, Cout)
    m = jnp.maximum(jnp.maximum(acc[0 * tm:1 * tm], acc[1 * tm:2 * tm]),
                    jnp.maximum(acc[2 * tm:3 * tm], acc[3 * tm:4 * tm]))
    o_ref[...] = jnp.maximum(m + b_ref[...], 0.0).astype(o_ref.dtype)


def _im2col_pooled_stacked(x, hp, wp, k_out, mp, kh=3, kw=3):
    """Stacked phase-shifted im2col: (4, mp, k_out) bf16.  Phase (a, b) row
    (n, i, j) is the patch whose conv output lands at (2i+a, 2j+b); the kernel
    max-reduces over phases == conv -> 2x2/2 max-pool (floor).  The K zero pad
    is folded into the concatenate; the M pad is applied once to the stack."""
    n, h, w, c = x.shape
    m = n * hp * wp
    k = kh * kw * c
    zpad = jnp.zeros((n, hp, wp, k_out - k), x.dtype) if k_out > k else None
    cols = []
    for a in range(2):
        for b in range(2):
            patches = [x[:, a + dy:a + dy + 2 * hp:2, b + dx:b + dx + 2 * wp:2, :]
                       for dy in range(kh) for dx in range(kw)]
            if zpad is not None:
                patches.append(zpad)
            cols.append(jnp.concatenate(patches, axis=-1).reshape(m, k_out))
    stacked = jnp.stack(cols, axis=0)                     # (4, m, k_out)
    if mp > m:
        stacked = jnp.pad(stacked, ((0, 0), (0, mp - m), (0, 0)))
    return stacked


def conv_pool_relu(x, w, b, *, k_out=None, tm_max=512):
    """x: (N, H, W, Cin) bf16.  Returns (N, Hp, Wp, Cout) bf16 = maxpool2x2(relu(conv3x3(x)+b))."""
    n, h, wd, c = x.shape
    hp, wp = (h - 2) // 2, (wd - 2) // 2
    m = n * hp * wp
    k_out = 9 * c if k_out is None else k_out
    cout = w.shape[1]

    tm = _pick_tile(m, tm_max)
    mp = _round_up(m, tm)
    cols = _im2col_pooled_stacked(x, hp, wp, k_out, mp)   # (4, mp, k_out) bf16
    grid = (mp // tm,)

    out = pl.pallas_call(
        _conv_pool_kernel,
        out_shape=jax.ShapeDtypeStruct((mp, cout), jnp.bfloat16),
        grid=grid,
        in_specs=[
            pl.BlockSpec((4, tm, k_out), lambda i: (0, i, 0)),   # all 4 phases, one DMA
            pl.BlockSpec((k_out, cout), lambda i: (0, 0)),       # weights: resident
            pl.BlockSpec((1, cout), lambda i: (0, 0)),           # bias
        ],
        out_specs=pl.BlockSpec((tm, cout), lambda i: (i, 0)),
        compiler_params=pltpu.CompilerParams(
            dimension_semantics=("parallel",),
            vmem_limit_bytes=VMEM_LIMIT_BYTES),
        cost_estimate=pl.CostEstimate(
            flops=2 * 4 * mp * k_out * cout,
            transcendentals=0,
            bytes_accessed=(4 * mp * k_out + k_out * cout + mp * cout) * 2 + cout * 4,
        ),
    )(cols, w, b)
    return out[:m].reshape(n, hp, wp, cout)


# ---------------------------------------------------------------------------
# Kernel 3: fused head = conv3 + ReLU + SPP + fc1 + ReLU + fc2 + softmax.
# SPP is fully vectorized over the batch tile: no per-image loop, no per-row
# masked stores.  Each of the 16 conv3 positions is read for the whole tile via
# one stride-16 sublane slice; the (tb, 672) feature block is built with a
# single lane concatenate.
# ---------------------------------------------------------------------------
def _head_kernel(tb, cols3_ref, w3_ref, b3_ref, w1_ref, b1_ref, w2_ref, b2_ref,
                 o_ref, y_scr):
    # conv3 + bias + ReLU.  Rows ordered (image t, position p = i*4 + j).
    y = jnp.dot(cols3_ref[...], w3_ref[...], preferred_element_type=jnp.float32)
    y_scr[...] = jnp.maximum(y + b3_ref[...], 0.0)          # (tb*16, 32) f32

    # SPP (assumed (1,2,4) max pyramid), vectorized over the batch tile.
    # pos(p): conv3 output at grid position p for every image in the tile.
    def pos(p):
        return y_scr[pl.ds(p, tb, 16), :]                   # strided sublane read -> (tb, 32)

    rows = [pos(p) for p in range(16)]
    # level-2 bins of the 4x4 grid (p = i*4 + j)
    b00 = jnp.maximum(jnp.maximum(rows[0], rows[1]), jnp.maximum(rows[4], rows[5]))
    b01 = jnp.maximum(jnp.maximum(rows[2], rows[3]), jnp.maximum(rows[6], rows[7]))
    b10 = jnp.maximum(jnp.maximum(rows[8], rows[9]), jnp.maximum(rows[12], rows[13]))
    b11 = jnp.maximum(jnp.maximum(rows[10], rows[11]), jnp.maximum(rows[14], rows[15]))
    glob = jnp.maximum(jnp.maximum(b00, b01), jnp.maximum(b10, b11))

    # Lane-dense (tb, 672) feature block, bin-major ([glob, 4 level-2 bins,
    # 16 level-4 bins] x 32 channels).  fc1's weight rows are pre-permuted to
    # this order in prepare_params.
    feat = jnp.concatenate([glob, b00, b01, b10, b11] + rows, axis=-1)
    featb = feat.astype(jnp.bfloat16)                       # (tb, 672)

    # fc1 + ReLU   (Dropout(p=0.5) = eval-mode identity)
    h = jnp.dot(featb, w1_ref[...], preferred_element_type=jnp.float32)
    h = jnp.maximum(h + b1_ref[...], 0.0)                   # (tb, 200) f32

    # fc2 + softmax
    logits = jnp.dot(h.astype(jnp.bfloat16), w2_ref[...],
                     preferred_element_type=jnp.float32) + b2_ref[...]
    mx = jnp.max(logits, axis=-1, keepdims=True)
    e = jnp.exp(logits - mx)
    s = jnp.sum(e, axis=-1, keepdims=True)
    inv = pl.reciprocal(s, approx=True)      # EUP slot
    inv = inv * (2.0 - s * inv)              # one Newton step -> ~f32-exact 1/s
    o_ref[...] = (e * inv).astype(o_ref.dtype)


def head(cols3, params, n, *, tb_max=128):
    k3 = cols3.shape[1]                                     # 432
    tb = _pick_tile(n, tb_max)                              # multiple of 8, >=2 steps if possible
    n_pad = _round_up(n, tb)
    if n_pad != n:
        cols3 = jnp.pad(cols3, ((0, (n_pad - n) * 16), (0, 0)))
    grid = (n_pad // tb,)
    out = pl.pallas_call(
        functools.partial(_head_kernel, tb),
        out_shape=jax.ShapeDtypeStruct((n_pad, 5), jnp.float32),
        grid=grid,
        in_specs=[
            pl.BlockSpec((tb * 16, k3), lambda g: (g, 0)),
            pl.BlockSpec((k3, 32), lambda g: (0, 0)),
            pl.BlockSpec((1, 32), lambda g: (0, 0)),
            pl.BlockSpec((672, 200), lambda g: (0, 0)),
            pl.BlockSpec((1, 200), lambda g: (0, 0)),
            pl.BlockSpec((200, 5), lambda g: (0, 0)),
            pl.BlockSpec((1, 5), lambda g: (0, 0)),
        ],
        out_specs=pl.BlockSpec((tb, 5), lambda g: (g, 0)),
        scratch_shapes=[pltpu.VMEM((tb * 16, 32), jnp.float32)],
        compiler_params=pltpu.CompilerParams(
            dimension_semantics=("parallel",),
            vmem_limit_bytes=VMEM_LIMIT_BYTES),
        cost_estimate=pl.CostEstimate(
            flops=2 * n_pad * (16 * k3 * 32 + 672 * 200 + 200 * 5),
            transcendentals=n_pad * 5,
            bytes_accessed=(n_pad * 16 * k3 + k3 * 32 + 672 * 200 + 200 * 5) * 2
            + n_pad * 5 * 4,
        ),
    )(cols3, params["conv3_wm"], params["conv3_b"],
      params["fc1_wm"], params["fc1_b"],
      params["fc2_wm"], params["fc2_b"])
    return out[:n]


# ---------------------------------------------------------------------------
# XLA-side glue: plain im2col for conv3.
# ---------------------------------------------------------------------------
def _im2col(x, kh=3, kw=3):
    """x: (N, H, W, C) -> (N*Ho*Wo, kh*kw*C), patch order (dy, dx, c)."""
    n, h, w, c = x.shape
    ho, wo = h - kh + 1, w - kw + 1
    patches = [x[:, dy:dy + ho, dx:dx + wo, :] for dy in range(kh) for dx in range(kw)]
    return jnp.concatenate(patches, axis=-1).reshape(n * ho * wo, kh * kw * c)


# ---------------------------------------------------------------------------
# Parameters (PyTorch layouts) and conversion to kernel layouts.
# ---------------------------------------------------------------------------
def init_torch_params(key):
    ks = jax.random.split(key, 10)

    def u(k, shape, fan_in):
        bound = 1.0 / float(fan_in) ** 0.5
        return jax.random.uniform(k, shape, jnp.float32, -bound, bound)

    return {
        "c1w": u(ks[0], (64, 3, 3, 3), 27),   "c1b": u(ks[1], (64,), 27),
        "c2w": u(ks[2], (48, 64, 3, 3), 576), "c2b": u(ks[3], (48,), 576),
        "c3w": u(ks[4], (32, 48, 3, 3), 432), "c3b": u(ks[5], (32,), 432),
        "f1w": u(ks[6], (200, 672), 672),     "f1b": u(ks[7], (200,), 672),
        "f2w": u(ks[8], (5, 200), 200),       "f2b": u(ks[9], (5,), 200),
    }


def _conv_to_mat(w):
    # (Cout, Cin, kh, kw) -> (kh*kw*Cin, Cout), row order (dy, dx, cin) to match im2col.
    cout, cin, kh, kw = w.shape
    return jnp.transpose(w, (2, 3, 1, 0)).reshape(kh * kw * cin, cout)


def prepare_params(tp):
    c1 = jnp.pad(_conv_to_mat(tp["c1w"]), ((0, 5), (0, 0)))   # K: 27 -> 32
    c2 = _conv_to_mat(tp["c2w"])                              # (576, 48)
    c3 = _conv_to_mat(tp["c3w"])                              # (432, 32)

    # Permute fc1 rows: kernel emits SPP features bin-major ([global, 4 level-2
    # bins, 16 level-4 bins] x 32 channels); PyTorch's .view() is channel-major
    # per level.  perm[kernel_idx] = torch_idx.
    perm = np.empty((672,), np.int32)
    c = 32
    for ch in range(c):
        perm[ch] = ch                                          # level 1
    for b in range(4):
        for ch in range(c):
            perm[(1 + b) * c + ch] = 32 + ch * 4 + b           # level 2
    for b in range(16):
        for ch in range(c):
            perm[(5 + b) * c + ch] = 160 + ch * 16 + b         # level 4
    f1 = tp["f1w"].T[perm, :]                                  # (672, 200)
    f2 = tp["f2w"].T                                           # (200, 5)

    bf = jnp.bfloat16
    return {
        "conv1_wm": c1.astype(bf), "conv1_b": tp["c1b"].reshape(1, -1),
        "conv2_wm": c2.astype(bf), "conv2_b": tp["c2b"].reshape(1, -1),
        "conv3_wm": c3.astype(bf), "conv3_b": tp["c3b"].reshape(1, -1),
        "fc1_wm": f1.astype(bf),   "fc1_b": tp["f1b"].reshape(1, -1),
        "fc2_wm": f2.astype(bf),   "fc2_b": tp["f2b"].reshape(1, -1),
    }


# ---------------------------------------------------------------------------
# Forward pass (Pallas) and a pure-JAX f32 reference for validation.
# ---------------------------------------------------------------------------
def net_forward(params, x_nchw, *, tm_max=512, tb_max=128):
    n = x_nchw.shape[0]
    x = jnp.transpose(x_nchw, (0, 2, 3, 1)).astype(jnp.bfloat16)   # NHWC, bf16

    # conv1 + bias + ReLU + pool1 (fused; K padded 27 -> 32 inside the im2col)
    p1 = conv_pool_relu(x, params["conv1_wm"], params["conv1_b"],
                        k_out=32, tm_max=tm_max)                   # (N, 15, 15, 64)

    # conv2 + bias + ReLU + pool2 (fused)
    p2 = conv_pool_relu(p1, params["conv2_wm"], params["conv2_b"],
                        tm_max=tm_max)                             # (N, 6, 6, 48)

    # conv3 + ReLU + SPP + fc1 + ReLU + (dropout=id) + fc2 + softmax (fused head)
    cols3 = _im2col(p2)                                            # (N*16, 432)
    return head(cols3, params, n, tb_max=tb_max)                   # (N, 5) f32


def net_forward_ref(tp, x_nchw):
    """Pure-JAX f32 reference with the same assumed SPP semantics."""
    dn = ("NCHW", "OIHW", "NCHW")
    x = lax.conv_general_dilated(x_nchw, tp["c1w"], (1, 1), "VALID", dimension_numbers=dn)
    x = jax.nn.relu(x + tp["c1b"][None, :, None, None])
    x = lax.reduce_window(x, -jnp.inf, lax.max, (1, 1, 2, 2), (1, 1, 2, 2), "VALID")
    x = lax.conv_general_dilated(x, tp["c2w"], (1, 1), "VALID", dimension_numbers=dn)
    x = jax.nn.relu(x + tp["c2b"][None, :, None, None])
    x = lax.reduce_window(x, -jnp.inf, lax.max, (1, 1, 2, 2), (1, 1, 2, 2), "VALID")
    x = lax.conv_general_dilated(x, tp["c3w"], (1, 1), "VALID", dimension_numbers=dn)
    x = jax.nn.relu(x + tp["c3b"][None, :, None, None])            # (N, 32, 4, 4)

    n, c = x.shape[0], x.shape[1]
    l1 = jnp.max(x, axis=(2, 3))                                   # (N, 32)
    l2 = lax.reduce_window(x, -jnp.inf, lax.max, (1, 1, 2, 2), (1, 1, 2, 2),
                           "VALID").reshape(n, c * 4)              # (N, 128)
    l4 = x.reshape(n, c * 16)                                      # (N, 512)
    feat = jnp.concatenate([l1, l2, l4], axis=1)                   # (N, 672)

    h = jax.nn.relu(feat @ tp["f1w"].T + tp["f1b"])
    logits = h @ tp["f2w"].T + tp["f2b"]
    return jax.nn.softmax(logits, axis=-1)


if __name__ == "__main__":
    key = jax.random.PRNGKey(0)
    pkey, xkey = jax.random.split(key)
    torch_params = init_torch_params(pkey)
    params = prepare_params(torch_params)

    # Smallest input that yields the 4x4 conv3 output the 21-bin SPP implies.
    x = jax.random.normal(xkey, (2, 3, 32, 32), jnp.float32)

    out = jax.block_until_ready(jax.jit(net_forward)(params, x))
    ref = jax.block_until_ready(jax.jit(net_forward_ref)(torch_params, x))

    assert out.shape == (2, 5)
    assert bool(jnp.all(jnp.isfinite(out)))
    assert bool(jnp.allclose(jnp.sum(out, axis=-1), 1.0, atol=1e-4))
    assert bool(jnp.allclose(out, ref, atol=2e-2)), (np.asarray(out), np.asarray(ref))
    print("KERNEL_OK")
</pallas_src>

<mosaic_0001>
module attributes {stable_mosaic.version = 11 : i64} {
  func.func @_conv_pool_kernel(%arg0: i32, %arg1: memref<4x232x32xbf16, #tpu.memory_space<vmem>>, %arg2: memref<32x64xbf16, #tpu.memory_space<vmem>>, %arg3: memref<1x64xf32, #tpu.memory_space<vmem>>, %arg4: memref<232x64xbf16, #tpu.memory_space<vmem>>) attributes {dimension_semantics = [#tpu.dimension_semantics<parallel>], iteration_bounds = array<i64: 2>, scalar_prefetch = 0 : i64, scratch_operands = 0 : i64, tpu.core_type = #tpu.core_type<tc>, window_params = [{transform_indices = @transform_0, window_bounds = array<i64: 4, 232, 32>}, {pipeline_mode = #tpu.pipeline_mode<synchronous>, transform_indices = @transform_1, window_bounds = array<i64: 32, 64>}, {pipeline_mode = #tpu.pipeline_mode<synchronous>, transform_indices = @transform_2, window_bounds = array<i64: 1, 64>}, {transform_indices = @transform_3, window_bounds = array<i64: 232, 64>}]} {
    %c0 = arith.constant 0 : index
    %c0_0 = arith.constant 0 : index
    %c0_1 = arith.constant 0 : index
    %0 = vector.load %arg1[%c0, %c0_0, %c0_1] : memref<4x232x32xbf16, #tpu.memory_space<vmem>>, vector<4x232x32xbf16>
    %1 = vector.shape_cast %0 : vector<4x232x32xbf16> to vector<928x32xbf16>
    %c0_2 = arith.constant 0 : index
    %c0_3 = arith.constant 0 : index
    %2 = vector.load %arg2[%c0_2, %c0_3] : memref<32x64xbf16, #tpu.memory_space<vmem>>, vector<32x64xbf16>
    %cst = arith.constant dense<0.000000e+00> : vector<928x64xf32>
    %3 = tpu.matmul %1, %2, %cst {dimension_numbers = #tpu.dot_dimension_numbers<[1], [0], [0], [1], [0, 0, 1, 1], [], []>} : vector<928x32xbf16>, vector<32x64xbf16>, vector<928x64xf32> -> vector<928x64xf32>
    %4 = vector.extract_strided_slice %3 {offsets = [0, 0], sizes = [232, 64], strides = [1, 1]} : vector<928x64xf32> to vector<232x64xf32>
    %5 = vector.extract_strided_slice %3 {offsets = [232, 0], sizes = [232, 64], strides = [1, 1]} : vector<928x64xf32> to vector<232x64xf32>
    %6 = arith.maximumf %4, %5 : vector<232x64xf32>
    %7 = vector.extract_strided_slice %3 {offsets = [464, 0], sizes = [232, 64], strides = [1, 1]} : vector<928x64xf32> to vector<232x64xf32>
    %8 = vector.extract_strided_slice %3 {offsets = [696, 0], sizes = [232, 64], strides = [1, 1]} : vector<928x64xf32> to vector<232x64xf32>
    %9 = arith.maximumf %7, %8 : vector<232x64xf32>
    %10 = arith.maximumf %6, %9 : vector<232x64xf32>
    %c0_4 = arith.constant 0 : index
    %c0_5 = arith.constant 0 : index
    %11 = vector.load %arg3[%c0_4, %c0_5] : memref<1x64xf32, #tpu.memory_space<vmem>>, vector<1x64xf32>
    %12 = vector.broadcast %11 : vector<1x64xf32> to vector<232x64xf32>
    %13 = arith.addf %10, %12 : vector<232x64xf32>
    %cst_6 = arith.constant 0.000000e+00 : f32
    %14 = vector.broadcast %cst_6 : f32 to vector<232x64xf32>
    %15 = arith.maximumf %13, %14 : vector<232x64xf32>
    %16 = arith.truncf %15 : vector<232x64xf32> to vector<232x64xbf16>
    %c0_7 = arith.constant 0 : index
    %c0_8 = arith.constant 0 : index
    %17 = vector.load %arg4[%c0_7, %c0_8] : memref<232x64xbf16, #tpu.memory_space<vmem>>, vector<232x64xbf16>
    tpu.vector_store %arg4[%c0_7, %c0_8], %16 {strides = array<i32>} : memref<232x64xbf16, #tpu.memory_space<vmem>>, vector<232x64xbf16>,
    return
  }
  func.func @transform_0(%arg0: i32) -> (i32, i32, i32) {
    %c0_i32 = arith.constant 0 : i32
    %c0_i32_0 = arith.constant 0 : i32
    %c0_i32_1 = arith.constant 0 : i32
    return %c0_i32, %arg0, %c0_i32_0 : i32, i32, i32
  }
  func.func @transform_1(%arg0: i32) -> (i32, i32) {
    %c0_i32 = arith.constant 0 : i32
    %c0_i32_0 = arith.constant 0 : i32
    %c0_i32_1 = arith.constant 0 : i32
    return %c0_i32, %c0_i32_0 : i32, i32
  }
  func.func @transform_2(%arg0: i32) -> (i32, i32) {
    %c0_i32 = arith.constant 0 : i32
    %c0_i32_0 = arith.constant 0 : i32
    %c0_i32_1 = arith.constant 0 : i32
    return %c0_i32, %c0_i32_0 : i32, i32
  }
  func.func @transform_3(%arg0: i32) -> (i32, i32) {
    %c0_i32 = arith.constant 0 : i32
    %c0_i32_0 = arith.constant 0 : i32
    return %arg0, %c0_i32 : i32, i32
  }
}

module attributes {stable_mosaic.version = 11 : i64} {
  func.func @_conv_pool_kernel(%arg0: i32, %arg1: memref<4x40x576xbf16, #tpu.memory_space<vmem>>, %arg2: memref<576x48xbf16, #tpu.memory_space<vmem>>, %arg3: memref<1x48xf32, #tpu.memory_space<vmem>>, %arg4: memref<40x48xbf16, #tpu.memory_space<vmem>>) attributes {dimension_semantics = [#tpu.dimension_semantics<parallel>], iteration_bounds = array<i64: 2>, scalar_prefetch = 0 : i64, scratch_operands = 0 : i64, tpu.core_type = #tpu.core_type<tc>, window_params = [{transform_indices = @transform_0, window_bounds = array<i64: 4, 40, 576>}, {pipeline_mode = #tpu.pipeline_mode<synchronous>, transform_indices = @transform_1, window_bounds = array<i64: 576, 48>}, {pipeline_mode = #tpu.pipeline_mode<synchronous>, transform_indices = @transform_2, window_bounds = array<i64: 1, 48>}, {transform_indices = @transform_3, window_bounds = array<i64: 40, 48>}]} {
    %c0 = arith.constant 0 : index
    %c0_0 = arith.constant 0 : index
    %c0_1 = arith.constant 0 : index
    %0 = vector.load %arg1[%c0, %c0_0, %c0_1] : memref<4x40x576xbf16, #tpu.memory_space<vmem>>, vector<4x40x576xbf16>
    %1 = vector.shape_cast %0 : vector<4x40x576xbf16> to vector<160x576xbf16>
    %c0_2 = arith.constant 0 : index
    %c0_3 = arith.constant 0 : index
    %2 = vector.load %arg2[%c0_2, %c0_3] : memref<576x48xbf16, #tpu.memory_space<vmem>>, vector<576x48xbf16>
    %cst = arith.constant dense<0.000000e+00> : vector<160x48xf32>
    %3 = tpu.matmul %1, %2, %cst {dimension_numbers = #tpu.dot_dimension_numbers<[1], [0], [0], [1], [0, 0, 1, 1], [], []>} : vector<160x576xbf16>, vector<576x48xbf16>, vector<160x48xf32> -> vector<160x48xf32>
    %4 = vector.extract_strided_slice %3 {offsets = [0, 0], sizes = [40, 48], strides = [1, 1]} : vector<160x48xf32> to vector<40x48xf32>
    %5 = vector.extract_strided_slice %3 {offsets = [40, 0], sizes = [40, 48], strides = [1, 1]} : vector<160x48xf32> to vector<40x48xf32>
    %6 = arith.maximumf %4, %5 : vector<40x48xf32>
    %7 = vector.extract_strided_slice %3 {offsets = [80, 0], sizes = [40, 48], strides = [1, 1]} : vector<160x48xf32> to vector<40x48xf32>
    %8 = vector.extract_strided_slice %3 {offsets = [120, 0], sizes = [40, 48], strides = [1, 1]} : vector<160x48xf32> to vector<40x48xf32>
    %9 = arith.maximumf %7, %8 : vector<40x48xf32>
    %10 = arith.maximumf %6, %9 : vector<40x48xf32>
    %c0_4 = arith.constant 0 : index
    %c0_5 = arith.constant 0 : index
    %11 = vector.load %arg3[%c0_4, %c0_5] : memref<1x48xf32, #tpu.memory_space<vmem>>, vector<1x48xf32>
    %12 = vector.broadcast %11 : vector<1x48xf32> to vector<40x48xf32>
    %13 = arith.addf %10, %12 : vector<40x48xf32>
    %cst_6 = arith.constant 0.000000e+00 : f32
    %14 = vector.broadcast %cst_6 : f32 to vector<40x48xf32>
    %15 = arith.maximumf %13, %14 : vector<40x48xf32>
    %16 = arith.truncf %15 : vector<40x48xf32> to vector<40x48xbf16>
    %c0_7 = arith.constant 0 : index
    %c0_8 = arith.constant 0 : index
    %17 = vector.load %arg4[%c0_7, %c0_8] : memref<40x48xbf16, #tpu.memory_space<vmem>>, vector<40x48xbf16>
    tpu.vector_store %arg4[%c0_7, %c0_8], %16 {strides = array<i32>} : memref<40x48xbf16, #tpu.memory_space<vmem>>, vector<40x48xbf16>,
    return
  }
  func.func @transform_0(%arg0: i32) -> (i32, i32, i32) {
    %c0_i32 = arith.constant 0 : i32
    %c0_i32_0 = arith.constant 0 : i32
    %c0_i32_1 = arith.constant 0 : i32
    return %c0_i32, %arg0, %c0_i32_0 : i32, i32, i32
  }
  func.func @transform_1(%arg0: i32) -> (i32, i32) {
    %c0_i32 = arith.constant 0 : i32
    %c0_i32_0 = arith.constant 0 : i32
    %c0_i32_1 = arith.constant 0 : i32
    return %c0_i32, %c0_i32_0 : i32, i32
  }
  func.func @transform_2(%arg0: i32) -> (i32, i32) {
    %c0_i32 = arith.constant 0 : i32
    %c0_i32_0 = arith.constant 0 : i32
    %c0_i32_1 = arith.constant 0 : i32
    return %c0_i32, %c0_i32_0 : i32, i32
  }
  func.func @transform_3(%arg0: i32) -> (i32, i32) {
    %c0_i32 = arith.constant 0 : i32
    %c0_i32_0 = arith.constant 0 : i32
    return %arg0, %c0_i32 : i32, i32
  }
}

module attributes {stable_mosaic.version = 11 : i64} {
  func.func @_head_kernel(%arg0: i32, %arg1: memref<128x432xbf16, #tpu.memory_space<vmem>>, %arg2: memref<432x32xbf16, #tpu.memory_space<vmem>>, %arg3: memref<1x32xf32, #tpu.memory_space<vmem>>, %arg4: memref<672x200xbf16, #tpu.memory_space<vmem>>, %arg5: memref<1x200xf32, #tpu.memory_space<vmem>>, %arg6: memref<200x5xbf16, #tpu.memory_space<vmem>>, %arg7: memref<1x5xf32, #tpu.memory_space<vmem>>, %arg8: memref<8x5xf32, #tpu.memory_space<vmem>>, %arg9: memref<128x32xf32, #tpu.memory_space<vmem>>) attributes {dimension_semantics = [#tpu.dimension_semantics<parallel>], iteration_bounds = array<i64: 1>, scalar_prefetch = 0 : i64, scratch_operands = 1 : i64, tpu.core_type = #tpu.core_type<tc>, window_params = [{transform_indices = @transform_0, window_bounds = array<i64: 128, 432>}, {pipeline_mode = #tpu.pipeline_mode<synchronous>, transform_indices = @transform_1, window_bounds = array<i64: 432, 32>}, {pipeline_mode = #tpu.pipeline_mode<synchronous>, transform_indices = @transform_2, window_bounds = array<i64: 1, 32>}, {pipeline_mode = #tpu.pipeline_mode<synchronous>, transform_indices = @transform_3, window_bounds = array<i64: 672, 200>}, {pipeline_mode = #tpu.pipeline_mode<synchronous>, transform_indices = @transform_4, window_bounds = array<i64: 1, 200>}, {pipeline_mode = #tpu.pipeline_mode<synchronous>, transform_indices = @transform_5, window_bounds = array<i64: 200, 5>}, {pipeline_mode = #tpu.pipeline_mode<synchronous>, transform_indices = @transform_6, window_bounds = array<i64: 1, 5>}, {transform_indices = @transform_7, window_bounds = array<i64: 8, 5>}]} {
    %c0 = arith.constant 0 : index
    %c0_0 = arith.constant 0 : index
    %0 = vector.load %arg1[%c0, %c0_0] : memref<128x432xbf16, #tpu.memory_space<vmem>>, vector<128x432xbf16>
    %c0_1 = arith.constant 0 : index
    %c0_2 = arith.constant 0 : index
    %1 = vector.load %arg2[%c0_1, %c0_2] : memref<432x32xbf16, #tpu.memory_space<vmem>>, vector<432x32xbf16>
    %cst = arith.constant dense<0.000000e+00> : vector<128x32xf32>
    %2 = tpu.matmul %0, %1, %cst {dimension_numbers = #tpu.dot_dimension_numbers<[1], [0], [0], [1], [0, 0, 1, 1], [], []>} : vector<128x432xbf16>, vector<432x32xbf16>, vector<128x32xf32> -> vector<128x32xf32>
    %c0_3 = arith.constant 0 : index
    %c0_4 = arith.constant 0 : index
    %3 = vector.load %arg3[%c0_3, %c0_4] : memref<1x32xf32, #tpu.memory_space<vmem>>, vector<1x32xf32>
    %4 = vector.broadcast %3 : vector<1x32xf32> to vector<128x32xf32>
    %5 = arith.addf %2, %4 : vector<128x32xf32>
    %cst_5 = arith.constant 0.000000e+00 : f32
    %6 = vector.broadcast %cst_5 : f32 to vector<128x32xf32>
    %7 = arith.maximumf %5, %6 : vector<128x32xf32>
    %c0_6 = arith.constant 0 : index
    %c0_7 = arith.constant 0 : index
    %8 = vector.load %arg9[%c0_6, %c0_7] : memref<128x32xf32, #tpu.memory_space<vmem>>, vector<128x32xf32>
    tpu.vector_store %arg9[%c0_6, %c0_7], %7 {strides = array<i32>} : memref<128x32xf32, #tpu.memory_space<vmem>>, vector<128x32xf32>,
    %c0_8 = arith.constant 0 : index
    %c0_9 = arith.constant 0 : index
    %9 = tpu.strided_load %arg9[%c0_8, %c0_9] {strides = array<i32: 16, 1>} : memref<128x32xf32, #tpu.memory_space<vmem>>, vector<8x32xf32>
    %c1 = arith.constant 1 : index
    %c0_10 = arith.constant 0 : index
    %10 = tpu.strided_load %arg9[%c1, %c0_10] {strides = array<i32: 16, 1>} : memref<128x32xf32, #tpu.memory_space<vmem>>, vector<8x32xf32>
    %c2 = arith.constant 2 : index
    %c0_11 = arith.constant 0 : index
    %11 = tpu.strided_load %arg9[%c2, %c0_11] {strides = array<i32: 16, 1>} : memref<128x32xf32, #tpu.memory_space<vmem>>, vector<8x32xf32>
    %c3 = arith.constant 3 : index
    %c0_12 = arith.constant 0 : index
    %12 = tpu.strided_load %arg9[%c3, %c0_12] {strides = array<i32: 16, 1>} : memref<128x32xf32, #tpu.memory_space<vmem>>, vector<8x32xf32>
    %c4 = arith.constant 4 : index
    %c0_13 = arith.constant 0 : index
    %13 = tpu.strided_load %arg9[%c4, %c0_13] {strides = array<i32: 16, 1>} : memref<128x32xf32, #tpu.memory_space<vmem>>, vector<8x32xf32>
    %c5 = arith.constant 5 : index
    %c0_14 = arith.constant 0 : index
    %14 = tpu.strided_load %arg9[%c5, %c0_14] {strides = array<i32: 16, 1>} : memref<128x32xf32, #tpu.memory_space<vmem>>, vector<8x32xf32>
    %c6 = arith.constant 6 : index
    %c0_15 = arith.constant 0 : index
    %15 = tpu.strided_load %arg9[%c6, %c0_15] {strides = array<i32: 16, 1>} : memref<128x32xf32, #tpu.memory_space<vmem>>, vector<8x32xf32>
    %c7 = arith.constant 7 : index
    %c0_16 = arith.constant 0 : index
    %16 = tpu.strided_load %arg9[%c7, %c0_16] {strides = array<i32: 16, 1>} : memref<128x32xf32, #tpu.memory_space<vmem>>, vector<8x32xf32>
    %c8 = arith.constant 8 : index
    %c0_17 = arith.constant 0 : index
    %17 = tpu.strided_load %arg9[%c8, %c0_17] {strides = array<i32: 16, 1>} : memref<128x32xf32, #tpu.memory_space<vmem>>, vector<8x32xf32>
    %c9 = arith.constant 9 : index
    %c0_18 = arith.constant 0 : index
    %18 = tpu.strided_load %arg9[%c9, %c0_18] {strides = array<i32: 16, 1>} : memref<128x32xf32, #tpu.memory_space<vmem>>, vector<8x32xf32>
    %c10 = arith.constant 10 : index
    %c0_19 = arith.constant 0 : index
    %19 = tpu.strided_load %arg9[%c10, %c0_19] {strides = array<i32: 16, 1>} : memref<128x32xf32, #tpu.memory_space<vmem>>, vector<8x32xf32>
    %c11 = arith.constant 11 : index
    %c0_20 = arith.constant 0 : index
    %20 = tpu.strided_load %arg9[%c11, %c0_20] {strides = array<i32: 16, 1>} : memref<128x32xf32, #tpu.memory_space<vmem>>, vector<8x32xf32>
    %c12 = arith.constant 12 : index
    %c0_21 = arith.constant 0 : index
    %21 = tpu.strided_load %arg9[%c12, %c0_21] {strides = array<i32: 16, 1>} : memref<128x32xf32, #tpu.memory_space<vmem>>, vector<8x32xf32>
    %c13 = arith.constant 13 : index
    %c0_22 = arith.constant 0 : index
    %22 = tpu.strided_load %arg9[%c13, %c0_22] {strides = array<i32: 16, 1>} : memref<128x32xf32, #tpu.memory_space<vmem>>, vector<8x32xf32>
    %c14 = arith.constant 14 : index
    %c0_23 = arith.constant 0 : index
    %23 = tpu.strided_load %arg9[%c14, %c0_23] {strides = array<i32: 16, 1>} : memref<128x32xf32, #tpu.memory_space<vmem>>, vector<8x32xf32>
    %c15 = arith.constant 15 : index
    %c0_24 = arith.constant 0 : index
    %24 = tpu.strided_load %arg9[%c15, %c0_24] {strides = array<i32: 16, 1>} : memref<128x32xf32, #tpu.memory_space<vmem>>, vector<8x32xf32>
    %25 = arith.maximumf %9, %10 : vector<8x32xf32>
    %26 = arith.maximumf %13, %14 : vector<8x32xf32>
    %27 = arith.maximumf %25, %26 : vector<8x32xf32>
    %28 = arith.maximumf %11, %12 : vector<8x32xf32>
    %29 = arith.maximumf %15, %16 : vector<8x32xf32>
    %30 = arith.maximumf %28, %29 : vector<8x32xf32>
    %31 = arith.maximumf %17, %18 : vector<8x32xf32>
    %32 = arith.maximumf %21, %22 : vector<8x32xf32>
    %33 = arith.maximumf %31, %32 : vector<8x32xf32>
    %34 = arith.maximumf %19, %20 : vector<8x32xf32>
    %35 = arith.maximumf %23, %24 : vector<8x32xf32>
    %36 = arith.maximumf %34, %35 : vector<8x32xf32>
    %37 = arith.maximumf %27, %30 : vector<8x32xf32>
    %38 = arith.maximumf %33, %36 : vector<8x32xf32>
    %39 = arith.maximumf %37, %38 : vector<8x32xf32>
    %40 = tpu.concatenate %39, %27, %30, %33, %36, %9, %10, %11, %12, %13, %14, %15, %16, %17, %18, %19 in 1 : vector<8x32xf32>, vector<8x32xf32>, vector<8x32xf32>, vector<8x32xf32>, vector<8x32xf32>, vector<8x32xf32>, vector<8x32xf32>, vector<8x32xf32>, vector<8x32xf32>, vector<8x32xf32>, vector<8x32xf32>, vector<8x32xf32>, vector<8x32xf32>, vector<8x32xf32>, vector<8x32xf32>, vector<8x32xf32> -> vector<8x512xf32>
    %41 = tpu.concatenate %20, %21, %22, %23, %24 in 1 : vector<8x32xf32>, vector<8x32xf32>, vector<8x32xf32>, vector<8x32xf32>, vector<8x32xf32> -> vector<8x160xf32>
    %42 = tpu.concatenate %40, %41 in 1 : vector<8x512xf32>, vector<8x160xf32> -> vector<8x672xf32>
    %43 = arith.truncf %42 : vector<8x672xf32> to vector<8x672xbf16>
    %c0_25 = arith.constant 0 : index
    %c0_26 = arith.constant 0 : index
    %44 = vector.load %arg4[%c0_25, %c0_26] : memref<672x200xbf16, #tpu.memory_space<vmem>>, vector<672x200xbf16>
    %cst_27 = arith.constant dense<0.000000e+00> : vector<8x200xf32>
    %45 = tpu.matmul %43, %44, %cst_27 {dimension_numbers = #tpu.dot_dimension_numbers<[1], [0], [0], [1], [0, 0, 1, 1], [], []>} : vector<8x672xbf16>, vector<672x200xbf16>, vector<8x200xf32> -> vector<8x200xf32>
    %c0_28 = arith.constant 0 : index
    %c0_29 = arith.constant 0 : index
    %46 = vector.load %arg5[%c0_28, %c0_29] : memref<1x200xf32, #tpu.memory_space<vmem>>, vector<1x200xf32>
    %47 = vector.broadcast %46 : vector<1x200xf32> to vector<8x200xf32>
    %48 = arith.addf %45, %47 : vector<8x200xf32>
    %cst_30 = arith.constant 0.000000e+00 : f32
    %49 = vector.broadcast %cst_30 : f32 to vector<8x200xf32>
    %50 = arith.maximumf %48, %49 : vector<8x200xf32>
    %51 = arith.truncf %50 : vector<8x200xf32> to vector<8x200xbf16>
    %c0_31 = arith.constant 0 : index
    %c0_32 = arith.constant 0 : index
    %52 = vector.load %arg6[%c0_31, %c0_32] : memref<200x5xbf16, #tpu.memory_space<vmem>>, vector<200x5xbf16>
    %cst_33 = arith.constant dense<0.000000e+00> : vector<8x5xf32>
    %53 = tpu.matmul %51, %52, %cst_33 {dimension_numbers = #tpu.dot_dimension_numbers<[1], [0], [0], [1], [0, 0, 1, 1], [], []>} : vector<8x200xbf16>, vector<200x5xbf16>, vector<8x5xf32> -> vector<8x5xf32>
    %c0_34 = arith.constant 0 : index
    %c0_35 = arith.constant 0 : index
    %54 = vector.load %arg7[%c0_34, %c0_35] : memref<1x5xf32, #tpu.memory_space<vmem>>, vector<1x5xf32>
    %55 = vector.broadcast %54 : vector<1x5xf32> to vector<8x5xf32>
    %56 = arith.addf %53, %55 : vector<8x5xf32>
    %cst_36 = arith.constant dense<0xFF800000> : vector<8xf32>
    %57 = vector.multi_reduction <maximumf>, %56, %cst_36 [1] : vector<8x5xf32> to vector<8xf32>
    %58 = vector.shape_cast %57 : vector<8xf32> to vector<8x1xf32>
    %59 = vector.broadcast %58 : vector<8x1xf32> to vector<8x5xf32>
    %60 = arith.subf %56, %59 : vector<8x5xf32>
    %61 = math.exp %60 : vector<8x5xf32>
    %cst_37 = arith.constant dense<0.000000e+00> : vector<8xf32>
    %62 = vector.multi_reduction <add>, %61, %cst_37 [1] : vector<8x5xf32> to vector<8xf32>
    %63 = vector.shape_cast %62 : vector<8xf32> to vector<8x1xf32>
    %64 = tpu.reciprocal %63 {approx = true} : vector<8x1xf32> -> vector<8x1xf32>
    %65 = arith.mulf %63, %64 : vector<8x1xf32>
    %cst_38 = arith.constant 2.000000e+00 : f32
    %66 = vector.broadcast %cst_38 : f32 to vector<8x1xf32>
    %67 = arith.subf %66, %65 : vector<8x1xf32>
    %68 = arith.mulf %64, %67 : vector<8x1xf32>
    %69 = vector.broadcast %68 : vector<8x1xf32> to vector<8x5xf32>
    %70 = arith.mulf %61, %69 : vector<8x5xf32>
    %c0_39 = arith.constant 0 : index
    %c0_40 = arith.constant 0 : index
    %71 = vector.load %arg8[%c0_39, %c0_40] : memref<8x5xf32, #tpu.memory_space<vmem>>, vector<8x5xf32>
    tpu.vector_store %arg8[%c0_39, %c0_40], %70 {strides = array<i32>} : memref<8x5xf32, #tpu.memory_space<vmem>>, vector<8x5xf32>,
    return
  }
  func.func @transform_0(%arg0: i32) -> (i32, i32) {
    %c0_i32 = arith.constant 0 : i32
    %c0_i32_0 = arith.constant 0 : i32
    return %arg0, %c0_i32 : i32, i32
  }
  func.func @transform_1(%arg0: i32) -> (i32, i32) {
    %c0_i32 = arith.constant 0 : i32
    %c0_i32_0 = arith.constant 0 : i32
    %c0_i32_1 = arith.constant 0 : i32
    return %c0_i32, %c0_i32_0 : i32, i32
  }
  func.func @transform_2(%arg0: i32) -> (i32, i32) {
    %c0_i32 = arith.constant 0 : i32
    %c0_i32_0 = arith.constant 0 : i32
    %c0_i32_1 = arith.constant 0 : i32
    return %c0_i32, %c0_i32_0 : i32, i32
  }
  func.func @transform_3(%arg0: i32) -> (i32, i32) {
    %c0_i32 = arith.constant 0 : i32
    %c0_i32_0 = arith.constant 0 : i32
    %c0_i32_1 = arith.constant 0 : i32
    return %c0_i32, %c0_i32_0 : i32, i32
  }
  func.func @transform_4(%arg0: i32) -> (i32, i32) {
    %c0_i32 = arith.constant 0 : i32
    %c0_i32_0 = arith.constant 0 : i32
    %c0_i32_1 = arith.constant 0 : i32
    return %c0_i32, %c0_i32_0 : i32, i32
  }
  func.func @transform_5(%arg0: i32) -> (i32, i32) {
    %c0_i32 = arith.constant 0 : i32
    %c0_i32_0 = arith.constant 0 : i32
    %c0_i32_1 = arith.constant 0 : i32
    return %c0_i32, %c0_i32_0 : i32, i32
  }
  func.func @transform_6(%arg0: i32) -> (i32, i32) {
    %c0_i32 = arith.constant 0 : i32
    %c0_i32_0 = arith.constant 0 : i32
    %c0_i32_1 = arith.constant 0 : i32
    return %c0_i32, %c0_i32_0 : i32, i32
  }
  func.func @transform_7(%arg0: i32) -> (i32, i32) {
    %c0_i32 = arith.constant 0 : i32
    %c0_i32_0 = arith.constant 0 : i32
    return %arg0, %c0_i32 : i32, i32
  }
}

</mosaic_0001>

<llo_original>
// kernel: net_forward.3
$region0: #{net_forward.3}
  #allocation0 [shape = 'u32[]', space=smem, size = 0x4, offset = 0x4, fixed_abs, tag = 'smem constant byte address 0x4 - core index']
  #allocation1 [shape = 'u32[144,128]{1,0:T(1,128)}', space=vmem, size = 0x12000, scoped, tag = 'internal scratch']
  %s0 = inlined_call_operand.vmem [shape: bf16[4,464,32], index: 0, kind: input, shape index: {}]
  %s1 = inlined_call_operand.vmem [shape: bf16[32,64], index: 1, kind: input, shape index: {}]
  %s2 = inlined_call_operand.vmem [shape: f32[1,64], index: 2, kind: input, shape index: {}]
  %s3 = inlined_call_operand.vmem [shape: bf16[464,64], index: 3, kind: output, shape index: {}]
  %s4 = sld [smem:[#allocation0]]
  $region86: #{net_forward.3} parent=0
    _
  %s6 = ssub.s32 1, %s4
  %s7 = scalar_select 0, %s6, %s4
  $region1: #{net_forward.3} parent=0
    #allocation2 [shape = 'u8[475136]{0}', space=vmem, size = 0x74000, scoped, tag = 'input window, operand 0']
    loop: start=0, step=1, limit=4
    $region2: #{net_forward.3} parent=1 // loop_pre_header
      _
    $region3: #{net_forward.3} parent=1 // loop_header
      %s9 = sphi 0, %s13
      %p10 = scmp.ge.s32.totalorder %s9, 4
      %s19 = sphi 0, %s21
      %s22 = sphi 0, %s19
      %s23 = sphi 0, %s22
      %s39 = sphi 0, %s23
      %s43 = sphi 0, %s43
      %s45 = sphi 0, %s43
      %s46 = sphi 0, %s45
      %s60 = sphi 0, %s46
      %s64 = sphi 0, %s64
      %s66 = sphi 0, %s64
      %s67 = sphi 0, %s66
      %s81 = sphi 0, %s67
      %s87 = sphi 0, %s89
      %s90 = sphi 0, %s87
      %s91 = sphi 0, %s90
      %s107 = sphi 0, %s91
    $region4: #{net_forward.3} parent=1 // loop_header_branch
      %12 = sbr.rel (%p10) target = $region8
    $region5: #{net_forward.3} parent=1 // loop_body
      %s14 = ssub.s32 %s9, 1
      %s15 = ssub.s32 %s9, 2
      %s16 = sadd.s32 %s9, 1
      %s17 = ssub.s32 %s9, %s16
      %p18 = scmp.eq.s32.totalorder %s17, 0
      %s20 = sadd.s32 %s19, 1
      %s21 = scalar_select %p18, %s19, %s20
      %p24 = pneg %p18
      %p25 = scmp.eq.s32.totalorder %s9, 1
      %p26 = por %p24, %p25
      %p27 = scmp.ne.s32.totalorder %s19, %s22
      %p28 = scmp.eq.s32.totalorder %s9, 0
      %p29 = por %p27, %p28
      %p30 = scmp.ne.s32.totalorder %s19, %s22
      %p31 = scmp.eq.s32.totalorder %s14, 1
      %p32 = por %p30, %p31
      %p33 = scmp.ne.s32.totalorder %s22, %s23
      %p34 = scmp.eq.s32.totalorder %s14, 0
      %p35 = por %p33, %p34
      %p36 = scmp.ne.s32.totalorder %s22, %s23
      %p37 = scmp.eq.s32.totalorder %s15, 1
      %p38 = por %p36, %p37
      %p40 = scmp.ne.s32.totalorder %s23, %s39
      %p41 = scmp.eq.s32.totalorder %s15, 0
      %p42 = por %p40, %p41
      %s44 = sadd.s32 %s43, 1
      %p47 = scmp.eq.s32.totalorder %s9, 1
      %p48 = scmp.ne.s32.totalorder %s43, %s45
      %p49 = scmp.eq.s32.totalorder %s9, 0
      %p50 = por %p48, %p49
      %p51 = scmp.ne.s32.totalorder %s43, %s45
      %p52 = scmp.eq.s32.totalorder %s14, 1
      %p53 = por %p51, %p52
      %p54 = scmp.ne.s32.totalorder %s45, %s46
      %p55 = scmp.eq.s32.totalorder %s14, 0
      %p56 = por %p54, %p55
      %p57 = scmp.ne.s32.totalorder %s45, %s46
      %p58 = scmp.eq.s32.totalorder %s15, 1
      %p59 = por %p57, %p58
      %p61 = scmp.ne.s32.totalorder %s46, %s60
      %p62 = scmp.eq.s32.totalorder %s15, 0
      %p63 = por %p61, %p62
      %s65 = sadd.s32 %s64, 1
      %p68 = scmp.eq.s32.totalorder %s9, 1
      %p69 = scmp.ne.s32.totalorder %s64, %s66
      %p70 = scmp.eq.s32.totalorder %s9, 0
      %p71 = por %p69, %p70
      %p72 = scmp.ne.s32.totalorder %s64, %s66
      %p73 = scmp.eq.s32.totalorder %s14, 1
      %p74 = por %p72, %p73
      %p75 = scmp.ne.s32.totalorder %s66, %s67
      %p76 = scmp.eq.s32.totalorder %s14, 0
      %p77 = por %p75, %p76
      %p78 = scmp.ne.s32.totalorder %s66, %s67
      %p79 = scmp.eq.s32.totalorder %s15, 1
      %p80 = por %p78, %p79
      %p82 = scmp.ne.s32.totalorder %s67, %s81
      %p83 = scmp.eq.s32.totalorder %s15, 0
      %p84 = por %p82, %p83
      %s85 = ssub.s32 %s9, %s16
      %p86 = scmp.eq.s32.totalorder %s85, 0
      %s88 = sadd.s32 %s87, 1
      %s89 = scalar_select %p86, %s87, %s88
      %p92 = pneg %p86
      %p93 = scmp.eq.s32.totalorder %s9, 1
      %p94 = por %p92, %p93
      %p95 = scmp.ne.s32.totalorder %s87, %s90
      %p96 = scmp.eq.s32.totalorder %s9, 0
      %p97 = por %p95, %p96
      %p98 = scmp.ne.s32.totalorder %s87, %s90
      %p99 = scmp.eq.s32.totalorder %s14, 1
      %p100 = por %p98, %p99
      %p101 = scmp.ne.s32.totalorder %s90, %s91
      %p102 = scmp.eq.s32.totalorder %s14, 0
      %p103 = por %p101, %p102
      %p104 = scmp.ne.s32.totalorder %s90, %s91
      %p105 = scmp.eq.s32.totalorder %s15, 1
      %p106 = por %p104, %p105
      %p108 = scmp.ne.s32.totalorder %s91, %s107
      %p109 = scmp.eq.s32.totalorder %s15, 0
      %p110 = por %p108, %p109
      %p111 = scmp.le.s32.totalorder 1, %s9
      %p112 = scmp.lt.s32.totalorder %s9, 3
      %p113 = pnand %p111, %p112
      %p114 = pneg %p113
      // Predicated region
      $region9: #{net_forward.3} parent=5 // pred_check
        _
      $region10: #{net_forward.3} parent=5 // pred_check_branch
        %116 = sbr.rel (%p113) target = $region12
      $region11: #{net_forward.3} parent=5 // pred_region
        %s117 = ssub.s32 %s9, 1
        // Predicated region
        $region13: #{net_forward.3} parent=11 // pred_check
          %p118 = pneg %p56
        $region14: #{net_forward.3} parent=11 // pred_check_branch
          %120 = sbr.rel (%p118) target = $region16
        $region15: #{net_forward.3} parent=11 // pred_region
          _
        $region16: #{net_forward.3} parent=11 // pred_fallthru
          _
        // Predicated region
        $region17: #{net_forward.3} parent=11 // pred_check
          %p121 = pneg %p77
        $region18: #{net_forward.3} parent=11 // pred_check_branch
          %123 = sbr.rel (%p121) target = $region20
        $region19: #{net_forward.3} parent=11 // pred_region
          _
        $region20: #{net_forward.3} parent=11 // pred_fallthru
          _
      $region12: #{net_forward.3} parent=5 // pred_fallthru
        _
      %p124 = scmp.lt.s32.totalorder %s9, 2
      // Predicated region
      $region21: #{net_forward.3} parent=5 // pred_check
        %p125 = pneg %p124
      $region22: #{net_forward.3} parent=5 // pred_check_branch
        %127 = sbr.rel (%p125) target = $region24
      $region23: #{net_forward.3} parent=5 // pred_region
        // Predicated region
        $region25: #{net_forward.3} parent=23 // pred_check
          %p128 = pneg %p29
        $region26: #{net_forward.3} parent=23 // pred_check_branch
          %130 = sbr.rel (%p128) target = $region28
        $region27: #{net_forward.3} parent=23 // pred_region
          %s131 = sand.u32 %s19, 1
          %s132 = sand.u32 %s19, 1
          %s133 = smul.addr %s132, 464
          %s134 = scalar_lea.vmem [#allocation2], %s133
          %s135 = smul.u32 29, %s9
          %s136 = smul.addr %s135, 4
          %s137 = scalar_lea.vmem %s0, %s136
          // Predicated region
          $region29: #{net_forward.3} parent=27 // pred_check
            _
          $region30: #{net_forward.3} parent=27 // pred_check_branch
            %139 = sbr.rel (0) target = $region32
          $region31: #{net_forward.3} parent=27 // pred_region
            // Predicated region
            $region33: #{net_forward.3} parent=31 // pred_check
              _
            $region34: #{net_forward.3} parent=31 // pred_check_branch
              %141 = sbr.rel target = $region36
            $region35: #{net_forward.3} parent=31 // pred_region
              // Predicated region
              $region48: #{net_forward.3} parent=35 // pred_check
                _
              $region49: #{net_forward.3} parent=35 // pred_check_branch
                %386 = sbr.rel (0) target = $region51
              $region50: #{net_forward.3} parent=35 // pred_region
                loop: start=0, step=1, limit=1
                $region52: #{net_forward.3} parent=50 // loop_pre_header
                  _
                $region53: #{net_forward.3} parent=50 // loop_header
                  %s388 = sphi 0, %s392
                  %p389 = scmp.ge.s32.totalorder %s388, 1
                  %s393 = sphi %s137, %s137
                  %s394 = sphi %s134, %s134
                $region54: #{net_forward.3} parent=50 // loop_header_branch
                  %391 = sbr.rel (%p389) target = $region58
                $region55: #{net_forward.3} parent=50 // loop_body
                  _
                $region56: #{net_forward.3} parent=50 // loop_footer
                  %s392 = sadd.s32 1, %s388
                $region57: #{net_forward.3} parent=50 // loop_footer_branch
                  %387 = sbr.rel target = $region53
                $region58: #{net_forward.3} parent=50 // loop_exit
                  _
                loop: start=0, step=1, limit=1
                $region59: #{net_forward.3} parent=50 // loop_pre_header
                  _
                $region60: #{net_forward.3} parent=50 // loop_header
                  %s397 = sphi 0, %s401
                  %p398 = scmp.ge.s32.totalorder %s397, 1
                  %s402 = sphi %s137, %s137
                  %s403 = sphi %s134, %s134
                $region61: #{net_forward.3} parent=50 // loop_header_branch
                  %400 = sbr.rel (%p398) target = $region65
                $region62: #{net_forward.3} parent=50 // loop_body
                  %v404 = vld [vmem:[%s402] sm:$0xf]
                  %405 = vst [vmem:[%s403] sm:$0xf] %v404
                  %v406 = vld [vmem:[%s402 + $0x4] sm:$0xf]
                  %407 = vst [vmem:[%s403 + $0x4] sm:$0xf] %v406
                  %v408 = vld [vmem:[%s402 + $0x8] sm:$0xf]
                  %409 = vst [vmem:[%s403 + $0x8] sm:$0xf] %v408
                  %v410 = vld [vmem:[%s402 + $0xc] sm:$0xf]
                  %411 = vst [vmem:[%s403 + $0xc] sm:$0xf] %v410
                  %v412 = vld [vmem:[%s402 + $0x10] sm:$0xf]
                  %413 = vst [vmem:[%s403 + $0x10] sm:$0xf] %v412
                  %v414 = vld [vmem:[%s402 + $0x14] sm:$0xf]
                  %415 = vst [vmem:[%s403 + $0x14] sm:$0xf] %v414
                  %v416 = vld [vmem:[%s402 + $0x18] sm:$0xf]
                  %417 = vst [vmem:[%s403 + $0x18] sm:$0xf] %v416
                  %v418 = vld [vmem:[%s402 + $0x1c] sm:$0xf]
                  %419 = vst [vmem:[%s403 + $0x1c] sm:$0xf] %v418
                  %v420 = vld [vmem:[%s402 + $0x20] sm:$0xf]
                  %421 = vst [vmem:[%s403 + $0x20] sm:$0xf] %v420
                  %v422 = vld [vmem:[%s402 + $0x24] sm:$0xf]
                  %423 = vst [vmem:[%s403 + $0x24] sm:$0xf] %v422
                  %v424 = vld [vmem:[%s402 + $0x28] sm:$0xf]
                  %425 = vst [vmem:[%s403 + $0x28] sm:$0xf] %v424
                  %v426 = vld [vmem:[%s402 + $0x2c] sm:$0xf]
                  %427 = vst [vmem:[%s403 + $0x2c] sm:$0xf] %v426
                  %v428 = vld [vmem:[%s402 + $0x30] sm:$0xf]
                  %429 = vst [vmem:[%s403 + $0x30] sm:$0xf] %v428
                  %v430 = vld [vmem:[%s402 + $0x34] sm:$0xf]
                  %431 = vst [vmem:[%s403 + $0x34] sm:$0xf] %v430
                  %v432 = vld [vmem:[%s402 + $0x38] sm:$0xf]
                  %433 = vst [vmem:[%s403 + $0x38] sm:$0xf] %v432
                  %v434 = vld [vmem:[%s402 + $0x3c] sm:$0xf]
                  %435 = vst [vmem:[%s403 + $0x3c] sm:$0xf] %v434
                  %v436 = vld [vmem:[%s402 + $0x40] sm:$0xf]
                  %437 = vst [vmem:[%s403 + $0x40] sm:$0xf] %v436
                  %v438 = vld [vmem:[%s402 + $0x44] sm:$0xf]
                  %439 = vst [vmem:[%s403 + $0x44] sm:$0xf] %v438
                  %v440 = vld [vmem:[%s402 + $0x48] sm:$0xf]
                  %441 = vst [vmem:[%s403 + $0x48] sm:$0xf] %v440
                  %v442 = vld [vmem:[%s402 + $0x4c] sm:$0xf]
                  %443 = vst [vmem:[%s403 + $0x4c] sm:$0xf] %v442
                  %v444 = vld [vmem:[%s402 + $0x50] sm:$0xf]
                  %445 = vst [vmem:[%s403 + $0x50] sm:$0xf] %v444
                  %v446 = vld [vmem:[%s402 + $0x54] sm:$0xf]
                  %447 = vst [vmem:[%s403 + $0x54] sm:$0xf] %v446
                  %v448 = vld [vmem:[%s402 + $0x58] sm:$0xf]
                  %449 = vst [vmem:[%s403 + $0x58] sm:$0xf] %v448
                  %v450 = vld [vmem:[%s402 + $0x5c] sm:$0xf]
                  %451 = vst [vmem:[%s403 + $0x5c] sm:$0xf] %v450
                  %v452 = vld [vmem:[%s402 + $0x60] sm:$0xf]
                  %453 = vst [vmem:[%s403 + $0x60] sm:$0xf] %v452
                  %v454 = vld [vmem:[%s402 + $0x64] sm:$0xf]
                  %455 = vst [vmem:[%s403 + $0x64] sm:$0xf] %v454
                  %v456 = vld [vmem:[%s402 + $0x68] sm:$0xf]
                  %457 = vst [vmem:[%s403 + $0x68] sm:$0xf] %v456
                  %v458 = vld [vmem:[%s402 + $0x6c] sm:$0xf]
                  %459 = vst [vmem:[%s403 + $0x6c] sm:$0xf] %v458
                  %v460 = vld [vmem:[%s402 + $0x70] sm:$0xf]
                  %461 = vst [vmem:[%s403 + $0x70] sm:$0xf] %v460
                  %v462 = vld [vmem:[%s402 + $0xe8] sm:$0xf]
                  %463 = vst [vmem:[%s403 + $0x74] sm:$0xf] %v462
                  %v464 = vld [vmem:[%s402 + $0xec] sm:$0xf]
                  %465 = vst [vmem:[%s403 + $0x78] sm:$0xf] %v464
                  %v466 = vld [vmem:[%s402 + $0xf0] sm:$0xf]
                  %467 = vst [vmem:[%s403 + $0x7c] sm:$0xf] %v466
                  %v468 = vld [vmem:[%s402 + $0xf4] sm:$0xf]
                  %469 = vst [vmem:[%s403 + $0x80] sm:$0xf] %v468
                  %v470 = vld [vmem:[%s402 + $0xf8] sm:$0xf]
                  %471 = vst [vmem:[%s403 + $0x84] sm:$0xf] %v470
                  %v472 = vld [vmem:[%s402 + $0xfc] sm:$0xf]
                  %473 = vst [vmem:[%s403 + $0x88] sm:$0xf] %v472
                  %v474 = vld [vmem:[%s402 + $0x100] sm:$0xf]
                  %475 = vst [vmem:[%s403 + $0x8c] sm:$0xf] %v474
                  %v476 = vld [vmem:[%s402 + $0x104] sm:$0xf]
                  %477 = vst [vmem:[%s403 + $0x90] sm:$0xf] %v476
                  %v478 = vld [vmem:[%s402 + $0x108] sm:$0xf]
                  %479 = vst [vmem:[%s403 + $0x94] sm:$0xf] %v478
                  %v480 = vld [vmem:[%s402 + $0x10c] sm:$0xf]
                  %481 = vst [vmem:[%s403 + $0x98] sm:$0xf] %v480
                  %v482 = vld [vmem:[%s402 + $0x110] sm:$0xf]
                  %483 = vst [vmem:[%s403 + $0x9c] sm:$0xf] %v482
                  %v484 = vld [vmem:[%s402 + $0x114] sm:$0xf]
                  %485 = vst [vmem:[%s403 + $0xa0] sm:$0xf] %v484
                  %v486 = vld [vmem:[%s402 + $0x118] sm:$0xf]
                  %487 = vst [vmem:[%s403 + $0xa4] sm:$0xf] %v486
                  %v488 = vld [vmem:[%s402 + $0x11c] sm:$0xf]
                  %489 = vst [vmem:[%s403 + $0xa8] sm:$0xf] %v488
                  %v490 = vld [vmem:[%s402 + $0x120] sm:$0xf]
                  %491 = vst [vmem:[%s403 + $0xac] sm:$0xf] %v490
                  %v492 = vld [vmem:[%s402 + $0x124] sm:$0xf]
                  %493 = vst [vmem:[%s403 + $0xb0] sm:$0xf] %v492
                  %v494 = vld [vmem:[%s402 + $0x128] sm:$0xf]
                  %495 = vst [vmem:[%s403 + $0xb4] sm:$0xf] %v494
                  %v496 = vld [vmem:[%s402 + $0x12c] sm:$0xf]
                  %497 = vst [vmem:[%s403 + $0xb8] sm:$0xf] %v496
                  %v498 = vld [vmem:[%s402 + $0x130] sm:$0xf]
                  %499 = vst [vmem:[%s403 + $0xbc] sm:$0xf] %v498
                  %v500 = vld [vmem:[%s402 + $0x134] sm:$0xf]
                  %501 = vst [vmem:[%s403 + $0xc0] sm:$0xf] %v500
                  %v502 = vld [vmem:[%s402 + $0x138] sm:$0xf]
                  %503 = vst [vmem:[%s403 + $0xc4] sm:$0xf] %v502
                  %v504 = vld [vmem:[%s402 + $0x13c] sm:$0xf]
                  %505 = vst [vmem:[%s403 + $0xc8] sm:$0xf] %v504
                  %v506 = vld [vmem:[%s402 + $0x140] sm:$0xf]
                  %507 = vst [vmem:[%s403 + $0xcc] sm:$0xf] %v506
                  %v508 = vld [vmem:[%s402 + $0x144] sm:$0xf]
                  %509 = vst [vmem:[%s403 + $0xd0] sm:$0xf] %v508
                  %v510 = vld [vmem:[%s402 + $0x148] sm:$0xf]
                  %511 = vst [vmem:[%s403 + $0xd4] sm:$0xf] %v510
                  %v512 = vld [vmem:[%s402 + $0x14c] sm:$0xf]
                  %513 = vst [vmem:[%s403 + $0xd8] sm:$0xf] %v512
                  %v514 = vld [vmem:[%s402 + $0x150] sm:$0xf]
                  %515 = vst [vmem:[%s403 + $0xdc] sm:$0xf] %v514
                  %v516 = vld [vmem:[%s402 + $0x154] sm:$0xf]
                  %517 = vst [vmem:[%s403 + $0xe0] sm:$0xf] %v516
                  %v518 = vld [vmem:[%s402 + $0x158] sm:$0xf]
                  %519 = vst [vmem:[%s403 + $0xe4] sm:$0xf] %v518
                  %v520 = vld [vmem:[%s402 + $0x1d0] sm:$0xf]
                  %521 = vst [vmem:[%s403 + $0xe8] sm:$0xf] %v520
                  %v522 = vld [vmem:[%s402 + $0x1d4] sm:$0xf]
                  %523 = vst [vmem:[%s403 + $0xec] sm:$0xf] %v522
                  %v524 = vld [vmem:[%s402 + $0x1d8] sm:$0xf]
                  %525 = vst [vmem:[%s403 + $0xf0] sm:$0xf] %v524
                  %v526 = vld [vmem:[%s402 + $0x1dc] sm:$0xf]
                  %527 = vst [vmem:[%s403 + $0xf4] sm:$0xf] %v526
                  %v528 = vld [vmem:[%s402 + $0x1e0] sm:$0xf]
                  %529 = vst [vmem:[%s403 + $0xf8] sm:$0xf] %v528
                  %v530 = vld [vmem:[%s402 + $0x1e4] sm:$0xf]
                  %531 = vst [vmem:[%s403 + $0xfc] sm:$0xf] %v530
                  %v532 = vld [vmem:[%s402 + $0x1e8] sm:$0xf]
                  %533 = vst [vmem:[%s403 + $0x100] sm:$0xf] %v532
                  %v534 = vld [vmem:[%s402 + $0x1ec] sm:$0xf]
                  %535 = vst [vmem:[%s403 + $0x104] sm:$0xf] %v534
                  %v536 = vld [vmem:[%s402 + $0x1f0] sm:$0xf]
                  %537 = vst [vmem:[%s403 + $0x108] sm:$0xf] %v536
                  %v538 = vld [vmem:[%s402 + $0x1f4] sm:$0xf]
                  %539 = vst [vmem:[%s403 + $0x10c] sm:$0xf] %v538
                  %v540 = vld [vmem:[%s402 + $0x1f8] sm:$0xf]
                  %541 = vst [vmem:[%s403 + $0x110] sm:$0xf] %v540
                  %v542 = vld [vmem:[%s402 + $0x1fc] sm:$0xf]
                  %543 = vst [vmem:[%s403 + $0x114] sm:$0xf] %v542
                  %v544 = vld [vmem:[%s402 + $0x200] sm:$0xf]
                  %545 = vst [vmem:[%s403 + $0x118] sm:$0xf] %v544
                  %v546 = vld [vmem:[%s402 + $0x204] sm:$0xf]
                  %547 = vst [vmem:[%s403 + $0x11c] sm:$0xf] %v546
                  %v548 = vld [vmem:[%s402 + $0x208] sm:$0xf]
                  %549 = vst [vmem:[%s403 + $0x120] sm:$0xf] %v548
                  %v550 = vld [vmem:[%s402 + $0x20c] sm:$0xf]
                  %551 = vst [vmem:[%s403 + $0x124] sm:$0xf] %v550
                  %v552 = vld [vmem:[%s402 + $0x210] sm:$0xf]
                  %553 = vst [vmem:[%s403 + $0x128] sm:$0xf] %v552
                  %v554 = vld [vmem:[%s402 + $0x214] sm:$0xf]
                  %555 = vst [vmem:[%s403 + $0x12c] sm:$0xf] %v554
                  %v556 = vld [vmem:[%s402 + $0x218] sm:$0xf]
                  %557 = vst [vmem:[%s403 + $0x130] sm:$0xf] %v556
                  %v558 = vld [vmem:[%s402 + $0x21c] sm:$0xf]
                  %559 = vst [vmem:[%s403 + $0x134] sm:$0xf] %v558
                  %v560 = vld [vmem:[%s402 + $0x220] sm:$0xf]
                  %561 = vst [vmem:[%s403 + $0x138] sm:$0xf] %v560
                  %v562 = vld [vmem:[%s402 + $0x224] sm:$0xf]
                  %563 = vst [vmem:[%s403 + $0x13c] sm:$0xf] %v562
                  %v564 = vld [vmem:[%s402 + $0x228] sm:$0xf]
                  %565 = vst [vmem:[%s403 + $0x140] sm:$0xf] %v564
                  %v566 = vld [vmem:[%s402 + $0x22c] sm:$0xf]
                  %567 = vst [vmem:[%s403 + $0x144] sm:$0xf] %v566
                  %v568 = vld [vmem:[%s402 + $0x230] sm:$0xf]
                  %569 = vst [vmem:[%s403 + $0x148] sm:$0xf] %v568
                  %v570 = vld [vmem:[%s402 + $0x234] sm:$0xf]
                  %571 = vst [vmem:[%s403 + $0x14c] sm:$0xf] %v570
                  %v572 = vld [vmem:[%s402 + $0x238] sm:$0xf]
                  %573 = vst [vmem:[%s403 + $0x150] sm:$0xf] %v572
                  %v574 = vld [vmem:[%s402 + $0x23c] sm:$0xf]
                  %575 = vst [vmem:[%s403 + $0x154] sm:$0xf] %v574
                  %v576 = vld [vmem:[%s402 + $0x240] sm:$0xf]
                  %577 = vst [vmem:[%s403 + $0x158] sm:$0xf] %v576
                  %v578 = vld [vmem:[%s402 + $0x2b8] sm:$0xf]
                  %579 = vst [vmem:[%s403 + $0x15c] sm:$0xf] %v578
                  %v580 = vld [vmem:[%s402 + $0x2bc] sm:$0xf]
                  %581 = vst [vmem:[%s403 + $0x160] sm:$0xf] %v580
                  %v582 = vld [vmem:[%s402 + $0x2c0] sm:$0xf]
                  %583 = vst [vmem:[%s403 + $0x164] sm:$0xf] %v582
                  %v584 = vld [vmem:[%s402 + $0x2c4] sm:$0xf]
                  %585 = vst [vmem:[%s403 + $0x168] sm:$0xf] %v584
                  %v586 = vld [vmem:[%s402 + $0x2c8] sm:$0xf]
                  %587 = vst [vmem:[%s403 + $0x16c] sm:$0xf] %v586
                  %v588 = vld [vmem:[%s402 + $0x2cc] sm:$0xf]
                  %589 = vst [vmem:[%s403 + $0x170] sm:$0xf] %v588
                  %v590 = vld [vmem:[%s402 + $0x2d0] sm:$0xf]
                  %591 = vst [vmem:[%s403 + $0x174] sm:$0xf] %v590
                  %v592 = vld [vmem:[%s402 + $0x2d4] sm:$0xf]
                  %593 = vst [vmem:[%s403 + $0x178] sm:$0xf] %v592
                  %v594 = vld [vmem:[%s402 + $0x2d8] sm:$0xf]
                  %595 = vst [vmem:[%s403 + $0x17c] sm:$0xf] %v594
                  %v596 = vld [vmem:[%s402 + $0x2dc] sm:$0xf]
                  %597 = vst [vmem:[%s403 + $0x180] sm:$0xf] %v596
                  %v598 = vld [vmem:[%s402 + $0x2e0] sm:$0xf]
                  %599 = vst [vmem:[%s403 + $0x184] sm:$0xf] %v598
                  %v600 = vld [vmem:[%s402 + $0x2e4] sm:$0xf]
                  %601 = vst [vmem:[%s403 + $0x188] sm:$0xf] %v600
                  %v602 = vld [vmem:[%s402 + $0x2e8] sm:$0xf]
                  %603 = vst [vmem:[%s403 + $0x18c] sm:$0xf] %v602
                  %v604 = vld [vmem:[%s402 + $0x2ec] sm:$0xf]
                  %605 = vst [vmem:[%s403 + $0x190] sm:$0xf] %v604
                  %v606 = vld [vmem:[%s402 + $0x2f0] sm:$0xf]
                  %607 = vst [vmem:[%s403 + $0x194] sm:$0xf] %v606
                  %v608 = vld [vmem:[%s402 + $0x2f4] sm:$0xf]
                  %609 = vst [vmem:[%s403 + $0x198] sm:$0xf] %v608
                  %v610 = vld [vmem:[%s402 + $0x2f8] sm:$0xf]
                  %611 = vst [vmem:[%s403 + $0x19c] sm:$0xf] %v610
                  %v612 = vld [vmem:[%s402 + $0x2fc] sm:$0xf]
                  %613 = vst [vmem:[%s403 + $0x1a0] sm:$0xf] %v612
                  %v614 = vld [vmem:[%s402 + $0x300] sm:$0xf]
                  %615 = vst [vmem:[%s403 + $0x1a4] sm:$0xf] %v614
                  %v616 = vld [vmem:[%s402 + $0x304] sm:$0xf]
                  %617 = vst [vmem:[%s403 + $0x1a8] sm:$0xf] %v616
                  %v618 = vld [vmem:[%s402 + $0x308] sm:$0xf]
                  %619 = vst [vmem:[%s403 + $0x1ac] sm:$0xf] %v618
                  %v620 = vld [vmem:[%s402 + $0x30c] sm:$0xf]
                  %621 = vst [vmem:[%s403 + $0x1b0] sm:$0xf] %v620
                  %v622 = vld [vmem:[%s402 + $0x310] sm:$0xf]
                  %623 = vst [vmem:[%s403 + $0x1b4] sm:$0xf] %v622
                  %v624 = vld [vmem:[%s402 + $0x314] sm:$0xf]
                  %625 = vst [vmem:[%s403 + $0x1b8] sm:$0xf] %v624
                  %v626 = vld [vmem:[%s402 + $0x318] sm:$0xf]
                  %627 = vst [vmem:[%s403 + $0x1bc] sm:$0xf] %v626
                  %v628 = vld [vmem:[%s402 + $0x31c] sm:$0xf]
                  %629 = vst [vmem:[%s403 + $0x1c0] sm:$0xf] %v628
                  %v630 = vld [vmem:[%s402 + $0x320] sm:$0xf]
                  %631 = vst [vmem:[%s403 + $0x1c4] sm:$0xf] %v630
                  %v632 = vld [vmem:[%s402 + $0x324] sm:$0xf]
                  %633 = vst [vmem:[%s403 + $0x1c8] sm:$0xf] %v632
                  %v634 = vld [vmem:[%s402 + $0x328] sm:$0xf]
                  %635 = vst [vmem:[%s403 + $0x1cc] sm:$0xf] %v634
                $region63: #{net_forward.3} parent=50 // loop_footer
                  %s401 = sadd.s32 1, %s397
                $region64: #{net_forward.3} parent=50 // loop_footer_branch
                  %396 = sbr.rel target = $region60
                $region65: #{net_forward.3} parent=50 // loop_exit
                  _
              $region51: #{net_forward.3} parent=35 // pred_fallthru
                _
            $region36: #{net_forward.3} parent=31 // pred_fallthru
              _
            // Predicated region
            $region37: #{net_forward.3} parent=31 // pred_check
              _
            $region38: #{net_forward.3} parent=31 // pred_check_branch
              %143 = sbr.rel (0) target = $region40
            $region39: #{net_forward.3} parent=31 // pred_region
              loop: start=0, step=1, limit=1
              $region41: #{net_forward.3} parent=39 // loop_pre_header
                _
              $region42: #{net_forward.3} parent=39 // loop_header
                %s146 = sphi 0, %s150
                %p147 = scmp.ge.s32.totalorder %s146, 1
                %s151 = sphi %s137, %s137
                %s152 = sphi %s134, %s134
              $region43: #{net_forward.3} parent=39 // loop_header_branch
                %149 = sbr.rel (%p147) target = $region47
              $region44: #{net_forward.3} parent=39 // loop_body
                %v153 = vld [vmem:[%s151] sm:$0xf]
                %154 = vst [vmem:[%s152] sm:$0xf] %v153
                %v155 = vld [vmem:[%s151 + $0x4] sm:$0xf]
                %156 = vst [vmem:[%s152 + $0x4] sm:$0xf] %v155
                %v157 = vld [vmem:[%s151 + $0x8] sm:$0xf]
                %158 = vst [vmem:[%s152 + $0x8] sm:$0xf] %v157
                %v159 = vld [vmem:[%s151 + $0xc] sm:$0xf]
                %160 = vst [vmem:[%s152 + $0xc] sm:$0xf] %v159
                %v161 = vld [vmem:[%s151 + $0x10] sm:$0xf]
                %162 = vst [vmem:[%s152 + $0x10] sm:$0xf] %v161
                %v163 = vld [vmem:[%s151 + $0x14] sm:$0xf]
                %164 = vst [vmem:[%s152 + $0x14] sm:$0xf] %v163
                %v165 = vld [vmem:[%s151 + $0x18] sm:$0xf]
                %166 = vst [vmem:[%s152 + $0x18] sm:$0xf] %v165
                %v167 = vld [vmem:[%s151 + $0x1c] sm:$0xf]
                %168 = vst [vmem:[%s152 + $0x1c] sm:$0xf] %v167
                %v169 = vld [vmem:[%s151 + $0x20] sm:$0xf]
                %170 = vst [vmem:[%s152 + $0x20] sm:$0xf] %v169
                %v171 = vld [vmem:[%s151 + $0x24] sm:$0xf]
                %172 = vst [vmem:[%s152 + $0x24] sm:$0xf] %v171
                %v173 = vld [vmem:[%s151 + $0x28] sm:$0xf]
                %174 = vst [vmem:[%s152 + $0x28] sm:$0xf] %v173
                %v175 = vld [vmem:[%s151 + $0x2c] sm:$0xf]
                %176 = vst [vmem:[%s152 + $0x2c] sm:$0xf] %v175
                %v177 = vld [vmem:[%s151 + $0x30] sm:$0xf]
                %178 = vst [vmem:[%s152 + $0x30] sm:$0xf] %v177
                %v179 = vld [vmem:[%s151 + $0x34] sm:$0xf]
                %180 = vst [vmem:[%s152 + $0x34] sm:$0xf] %v179
                %v181 = vld [vmem:[%s151 + $0x38] sm:$0xf]
                %182 = vst [vmem:[%s152 + $0x38] sm:$0xf] %v181
                %v183 = vld [vmem:[%s151 + $0x3c] sm:$0xf]
                %184 = vst [vmem:[%s152 + $0x3c] sm:$0xf] %v183
                %v185 = vld [vmem:[%s151 + $0x40] sm:$0xf]
                %186 = vst [vmem:[%s152 + $0x40] sm:$0xf] %v185
                %v187 = vld [vmem:[%s151 + $0x44] sm:$0xf]
                %188 = vst [vmem:[%s152 + $0x44] sm:$0xf] %v187
                %v189 = vld [vmem:[%s151 + $0x48] sm:$0xf]
                %190 = vst [vmem:[%s152 + $0x48] sm:$0xf] %v189
                %v191 = vld [vmem:[%s151 + $0x4c] sm:$0xf]
                %192 = vst [vmem:[%s152 + $0x4c] sm:$0xf] %v191
                %v193 = vld [vmem:[%s151 + $0x50] sm:$0xf]
                %194 = vst [vmem:[%s152 + $0x50] sm:$0xf] %v193
                %v195 = vld [vmem:[%s151 + $0x54] sm:$0xf]
                %196 = vst [vmem:[%s152 + $0x54] sm:$0xf] %v195
                %v197 = vld [vmem:[%s151 + $0x58] sm:$0xf]
                %198 = vst [vmem:[%s152 + $0x58] sm:$0xf] %v197
                %v199 = vld [vmem:[%s151 + $0x5c] sm:$0xf]
                %200 = vst [vmem:[%s152 + $0x5c] sm:$0xf] %v199
                %v201 = vld [vmem:[%s151 + $0x60] sm:$0xf]
                %202 = vst [vmem:[%s152 + $0x60] sm:$0xf] %v201
                %v203 = vld [vmem:[%s151 + $0x64] sm:$0xf]
                %204 = vst [vmem:[%s152 + $0x64] sm:$0xf] %v203
                %v205 = vld [vmem:[%s151 + $0x68] sm:$0xf]
                %206 = vst [vmem:[%s152 + $0x68] sm:$0xf] %v205
                %v207 = vld [vmem:[%s151 + $0x6c] sm:$0xf]
                %208 = vst [vmem:[%s152 + $0x6c] sm:$0xf] %v207
                %v209 = vld [vmem:[%s151 + $0x70] sm:$0xf]
                %210 = vst [vmem:[%s152 + $0x70] sm:$0xf] %v209
                %v211 = vld [vmem:[%s151 + $0xe8] sm:$0xf]
                %212 = vst [vmem:[%s152 + $0x74] sm:$0xf] %v211
                %v213 = vld [vmem:[%s151 + $0xec] sm:$0xf]
                %214 = vst [vmem:[%s152 + $0x78] sm:$0xf] %v213
                %v215 = vld [vmem:[%s151 + $0xf0] sm:$0xf]
                %216 = vst [vmem:[%s152 + $0x7c] sm:$0xf] %v215
                %v217 = vld [vmem:[%s151 + $0xf4] sm:$0xf]
                %218 = vst [vmem:[%s152 + $0x80] sm:$0xf] %v217
                %v219 = vld [vmem:[%s151 + $0xf8] sm:$0xf]
                %220 = vst [vmem:[%s152 + $0x84] sm:$0xf] %v219
                %v221 = vld [vmem:[%s151 + $0xfc] sm:$0xf]
                %222 = vst [vmem:[%s152 + $0x88] sm:$0xf] %v221
                %v223 = vld [vmem:[%s151 + $0x100] sm:$0xf]
                %224 = vst [vmem:[%s152 + $0x8c] sm:$0xf] %v223
                %v225 = vld [vmem:[%s151 + $0x104] sm:$0xf]
                %226 = vst [vmem:[%s152 + $0x90] sm:$0xf] %v225
                %v227 = vld [vmem:[%s151 + $0x108] sm:$0xf]
                %228 = vst [vmem:[%s152 + $0x94] sm:$0xf] %v227
                %v229 = vld [vmem:[%s151 + $0x10c] sm:$0xf]
                %230 = vst [vmem:[%s152 + $0x98] sm:$0xf] %v229
                %v231 = vld [vmem:[%s151 + $0x110] sm:$0xf]
                %232 = vst [vmem:[%s152 + $0x9c] sm:$0xf] %v231
                %v233 = vld [vmem:[%s151 + $0x114] sm:$0xf]
                %234 = vst [vmem:[%s152 + $0xa0] sm:$0xf] %v233
                %v235 = vld [vmem:[%s151 + $0x118] sm:$0xf]
                %236 = vst [vmem:[%s152 + $0xa4] sm:$0xf] %v235
                %v237 = vld [vmem:[%s151 + $0x11c] sm:$0xf]
                %238 = vst [vmem:[%s152 + $0xa8] sm:$0xf] %v237
                %v239 = vld [vmem:[%s151 + $0x120] sm:$0xf]
                %240 = vst [vmem:[%s152 + $0xac] sm:$0xf] %v239
                %v241 = vld [vmem:[%s151 + $0x124] sm:$0xf]
                %242 = vst [vmem:[%s152 + $0xb0] sm:$0xf] %v241
                %v243 = vld [vmem:[%s151 + $0x128] sm:$0xf]
                %244 = vst [vmem:[%s152 + $0xb4] sm:$0xf] %v243
                %v245 = vld [vmem:[%s151 + $0x12c] sm:$0xf]
                %246 = vst [vmem:[%s152 + $0xb8] sm:$0xf] %v245
                %v247 = vld [vmem:[%s151 + $0x130] sm:$0xf]
                %248 = vst [vmem:[%s152 + $0xbc] sm:$0xf] %v247
                %v249 = vld [vmem:[%s151 + $0x134] sm:$0xf]
                %250 = vst [vmem:[%s152 + $0xc0] sm:$0xf] %v249
                %v251 = vld [vmem:[%s151 + $0x138] sm:$0xf]
                %252 = vst [vmem:[%s152 + $0xc4] sm:$0xf] %v251
                %v253 = vld [vmem:[%s151 + $0x13c] sm:$0xf]
                %254 = vst [vmem:[%s152 + $0xc8] sm:$0xf] %v253
                %v255 = vld [vmem:[%s151 + $0x140] sm:$0xf]
                %256 = vst [vmem:[%s152 + $0xcc] sm:$0xf] %v255
                %v257 = vld [vmem:[%s151 + $0x144] sm:$0xf]
                %258 = vst [vmem:[%s152 + $0xd0] sm:$0xf] %v257
                %v259 = vld [vmem:[%s151 + $0x148] sm:$0xf]
                %260 = vst [vmem:[%s152 + $0xd4] sm:$0xf] %v259
                %v261 = vld [vmem:[%s151 + $0x14c] sm:$0xf]
                %262 = vst [vmem:[%s152 + $0xd8] sm:$0xf] %v261
                %v263 = vld [vmem:[%s151 + $0x150] sm:$0xf]
                %264 = vst [vmem:[%s152 + $0xdc] sm:$0xf] %v263
                %v265 = vld [vmem:[%s151 + $0x154] sm:$0xf]
                %266 = vst [vmem:[%s152 + $0xe0] sm:$0xf] %v265
                %v267 = vld [vmem:[%s151 + $0x158] sm:$0xf]
                %268 = vst [vmem:[%s152 + $0xe4] sm:$0xf] %v267
                %v269 = vld [vmem:[%s151 + $0x1d0] sm:$0xf]
                %270 = vst [vmem:[%s152 + $0xe8] sm:$0xf] %v269
                %v271 = vld [vmem:[%s151 + $0x1d4] sm:$0xf]
                %272 = vst [vmem:[%s152 + $0xec] sm:$0xf] %v271
                %v273 = vld [vmem:[%s151 + $0x1d8] sm:$0xf]
                %274 = vst [vmem:[%s152 + $0xf0] sm:$0xf] %v273
                %v275 = vld [vmem:[%s151 + $0x1dc] sm:$0xf]
                %276 = vst [vmem:[%s152 + $0xf4] sm:$0xf] %v275
                %v277 = vld [vmem:[%s151 + $0x1e0] sm:$0xf]
                %278 = vst [vmem:[%s152 + $0xf8] sm:$0xf] %v277
                %v279 = vld [vmem:[%s151 + $0x1e4] sm:$0xf]
                %280 = vst [vmem:[%s152 + $0xfc] sm:$0xf] %v279
                %v281 = vld [vmem:[%s151 + $0x1e8] sm:$0xf]
                %282 = vst [vmem:[%s152 + $0x100] sm:$0xf] %v281
                %v283 = vld [vmem:[%s151 + $0x1ec] sm:$0xf]
                %284 = vst [vmem:[%s152 + $0x104] sm:$0xf] %v283
                %v285 = vld [vmem:[%s151 + $0x1f0] sm:$0xf]
                %286 = vst [vmem:[%s152 + $0x108] sm:$0xf] %v285
                %v287 = vld [vmem:[%s151 + $0x1f4] sm:$0xf]
                %288 = vst [vmem:[%s152 + $0x10c] sm:$0xf] %v287
                %v289 = vld [vmem:[%s151 + $0x1f8] sm:$0xf]
                %290 = vst [vmem:[%s152 + $0x110] sm:$0xf] %v289
                %v291 = vld [vmem:[%s151 + $0x1fc] sm:$0xf]
                %292 = vst [vmem:[%s152 + $0x114] sm:$0xf] %v291
                %v293 = vld [vmem:[%s151 + $0x200] sm:$0xf]
                %294 = vst [vmem:[%s152 + $0x118] sm:$0xf] %v293
                %v295 = vld [vmem:[%s151 + $0x204] sm:$0xf]
                %296 = vst [vmem:[%s152 + $0x11c] sm:$0xf] %v295
                %v297 = vld [vmem:[%s151 + $0x208] sm:$0xf]
                %298 = vst [vmem:[%s152 + $0x120] sm:$0xf] %v297
                %v299 = vld [vmem:[%s151 + $0x20c] sm:$0xf]
                %300 = vst [vmem:[%s152 + $0x124] sm:$0xf] %v299
                %v301 = vld [vmem:[%s151 + $0x210] sm:$0xf]
                %302 = vst [vmem:[%s152 + $0x128] sm:$0xf] %v301
                %v303 = vld [vmem:[%s151 + $0x214] sm:$0xf]
                %304 = vst [vmem:[%s152 + $0x12c] sm:$0xf] %v303
                %v305 = vld [vmem:[%s151 + $0x218] sm:$0xf]
                %306 = vst [vmem:[%s152 + $0x130] sm:$0xf] %v305
                %v307 = vld [vmem:[%s151 + $0x21c] sm:$0xf]
                %308 = vst [vmem:[%s152 + $0x134] sm:$0xf] %v307
                %v309 = vld [vmem:[%s151 + $0x220] sm:$0xf]
                %310 = vst [vmem:[%s152 + $0x138] sm:$0xf] %v309
                %v311 = vld [vmem:[%s151 + $0x224] sm:$0xf]
                %312 = vst [vmem:[%s152 + $0x13c] sm:$0xf] %v311
                %v313 = vld [vmem:[%s151 + $0x228] sm:$0xf]
                %314 = vst [vmem:[%s152 + $0x140] sm:$0xf] %v313
                %v315 = vld [vmem:[%s151 + $0x22c] sm:$0xf]
                %316 = vst [vmem:[%s152 + $0x144] sm:$0xf] %v315
                %v317 = vld [vmem:[%s151 + $0x230] sm:$0xf]
                %318 = vst [vmem:[%s152 + $0x148] sm:$0xf] %v317
                %v319 = vld [vmem:[%s151 + $0x234] sm:$0xf]
                %320 = vst [vmem:[%s152 + $0x14c] sm:$0xf] %v319
                %v321 = vld [vmem:[%s151 + $0x238] sm:$0xf]
                %322 = vst [vmem:[%s152 + $0x150] sm:$0xf] %v321
                %v323 = vld [vmem:[%s151 + $0x23c] sm:$0xf]
                %324 = vst [vmem:[%s152 + $0x154] sm:$0xf] %v323
                %v325 = vld [vmem:[%s151 + $0x240] sm:$0xf]
                %326 = vst [vmem:[%s152 + $0x158] sm:$0xf] %v325
                %v327 = vld [vmem:[%s151 + $0x2b8] sm:$0xf]
                %328 = vst [vmem:[%s152 + $0x15c] sm:$0xf] %v327
                %v329 = vld [vmem:[%s151 + $0x2bc] sm:$0xf]
                %330 = vst [vmem:[%s152 + $0x160] sm:$0xf] %v329
                %v331 = vld [vmem:[%s151 + $0x2c0] sm:$0xf]
                %332 = vst [vmem:[%s152 + $0x164] sm:$0xf] %v331
                %v333 = vld [vmem:[%s151 + $0x2c4] sm:$0xf]
                %334 = vst [vmem:[%s152 + $0x168] sm:$0xf] %v333
                %v335 = vld [vmem:[%s151 + $0x2c8] sm:$0xf]
                %336 = vst [vmem:[%s152 + $0x16c] sm:$0xf] %v335
                %v337 = vld [vmem:[%s151 + $0x2cc] sm:$0xf]
                %338 = vst [vmem:[%s152 + $0x170] sm:$0xf] %v337
                %v339 = vld [vmem:[%s151 + $0x2d0] sm:$0xf]
                %340 = vst [vmem:[%s152 + $0x174] sm:$0xf] %v339
                %v341 = vld [vmem:[%s151 + $0x2d4] sm:$0xf]
                %342 = vst [vmem:[%s152 + $0x178] sm:$0xf] %v341
                %v343 = vld [vmem:[%s151 + $0x2d8] sm:$0xf]
                %344 = vst [vmem:[%s152 + $0x17c] sm:$0xf] %v343
                %v345 = vld [vmem:[%s151 + $0x2dc] sm:$0xf]
                %346 = vst [vmem:[%s152 + $0x180] sm:$0xf] %v345
                %v347 = vld [vmem:[%s151 + $0x2e0] sm:$0xf]
                %348 = vst [vmem:[%s152 + $0x184] sm:$0xf] %v347
                %v349 = vld [vmem:[%s151 + $0x2e4] sm:$0xf]
                %350 = vst [vmem:[%s152 + $0x188] sm:$0xf] %v349
                %v351 = vld [vmem:[%s151 + $0x2e8] sm:$0xf]
                %352 = vst [vmem:[%s152 + $0x18c] sm:$0xf] %v351
                %v353 = vld [vmem:[%s151 + $0x2ec] sm:$0xf]
                %354 = vst [vmem:[%s152 + $0x190] sm:$0xf] %v353
                %v355 = vld [vmem:[%s151 + $0x2f0] sm:$0xf]
                %356 = vst [vmem:[%s152 + $0x194] sm:$0xf] %v355
                %v357 = vld [vmem:[%s151 + $0x2f4] sm:$0xf]
                %358 = vst [vmem:[%s152 + $0x198] sm:$0xf] %v357
                %v359 = vld [vmem:[%s151 + $0x2f8] sm:$0xf]
                %360 = vst [vmem:[%s152 + $0x19c] sm:$0xf] %v359
                %v361 = vld [vmem:[%s151 + $0x2fc] sm:$0xf]
                %362 = vst [vmem:[%s152 + $0x1a0] sm:$0xf] %v361
                %v363 = vld [vmem:[%s151 + $0x300] sm:$0xf]
                %364 = vst [vmem:[%s152 + $0x1a4] sm:$0xf] %v363
                %v365 = vld [vmem:[%s151 + $0x304] sm:$0xf]
                %366 = vst [vmem:[%s152 + $0x1a8] sm:$0xf] %v365
                %v367 = vld [vmem:[%s151 + $0x308] sm:$0xf]
                %368 = vst [vmem:[%s152 + $0x1ac] sm:$0xf] %v367
                %v369 = vld [vmem:[%s151 + $0x30c] sm:$0xf]
                %370 = vst [vmem:[%s152 + $0x1b0] sm:$0xf] %v369
                %v371 = vld [vmem:[%s151 + $0x310] sm:$0xf]
                %372 = vst [vmem:[%s152 + $0x1b4] sm:$0xf] %v371
                %v373 = vld [vmem:[%s151 + $0x314] sm:$0xf]
                %374 = vst [vmem:[%s152 + $0x1b8] sm:$0xf] %v373
                %v375 = vld [vmem:[%s151 + $0x318] sm:$0xf]
                %376 = vst [vmem:[%s152 + $0x1bc] sm:$0xf] %v375
                %v377 = vld [vmem:[%s151 + $0x31c] sm:$0xf]
                %378 = vst [vmem:[%s152 + $0x1c0] sm:$0xf] %v377
                %v379 = vld [vmem:[%s151 + $0x320] sm:$0xf]
                %380 = vst [vmem:[%s152 + $0x1c4] sm:$0xf] %v379
                %v381 = vld [vmem:[%s151 + $0x324] sm:$0xf]
                %382 = vst [vmem:[%s152 + $0x1c8] sm:$0xf] %v381
                %v383 = vld [vmem:[%s151 + $0x328] sm:$0xf]
                %384 = vst [vmem:[%s152 + $0x1cc] sm:$0xf] %v383
              $region45: #{net_forward.3} parent=39 // loop_footer
                %s150 = sadd.s32 1, %s146
              $region46: #{net_forward.3} parent=39 // loop_footer_branch
                %145 = sbr.rel target = $region42
              $region47: #{net_forward.3} parent=39 // loop_exit
                _
            $region40: #{net_forward.3} parent=31 // pred_fallthru
              _
          $region32: #{net_forward.3} parent=27 // pred_fallthru
            _
          %636 = vnop
        $region28: #{net_forward.3} parent=23 // pred_fallthru
          _
      $region24: #{net_forward.3} parent=5 // pred_fallthru
        _
      %p637 = scmp.le.s32.totalorder 1, %s9
      %p638 = scmp.lt.s32.totalorder %s9, 3
      %p639 = pnand %p637, %p638
      %p640 = pneg %p639
      // Predicated region
      $region66: #{net_forward.3} parent=5 // pred_check
        _
      $region67: #{net_forward.3} parent=5 // pred_check_branch
        %642 = sbr.rel (%p639) target = $region69
      $region68: #{net_forward.3} parent=5 // pred_region
        %s643 = ssub.s32 %s9, 1
        %s644 = sand.u32 %s22, 1
        %s645 = sand.u32 %s22, 1
        %s646 = smul.addr %s645, 464
        %s647 = scalar_lea.vmem [#allocation2], %s646
        // Predicated region
        $region70: #{net_forward.3} parent=68 // pred_check
          %p648 = pneg %p35
        $region71: #{net_forward.3} parent=68 // pred_check_branch
          %650 = sbr.rel (%p648) target = $region73
        $region72: #{net_forward.3} parent=68 // pred_region
          _
        $region73: #{net_forward.3} parent=68 // pred_fallthru
          _
        %s651 = sand.u32 %s22, 1
        %s652 = sand.u32 %s22, 1
        %s653 = smul.addr %s652, 464
        %s654 = scalar_lea.vmem [#allocation2], %s653
        %p655 = pneg %p35
        %p656 = pneg %p32
        %p657 = pneg %p56
        %p658 = pneg %p53
        %p659 = pneg %p77
        %p660 = pneg %p74
        %p661 = pneg %p103
        %p662 = pneg %p100
        %s663 = smul.u32 29, %s14
        %p664 = scmp.lt.s32.totalorder %s663, 57
        %s665 = scalar_select %p664, %s663, 57
        %s666 = smul.addr %s665, 4
        %s667 = scalar_lea.vmem %s3, %s666
        %s668 = smul.u32 29, %s14
        %s669 = smul.u32 29, %s14
        %p670 = scmp.lt.s32.totalorder %s669, 57
        %s671 = scalar_select %p670, %s669, 57
        %s672 = smul.addr %s671, 4
        %s673 = scalar_lea.vmem %s3, %s672
        %s674 = smul.u32 29, %s14
        %v676 = vld [vmem:[%s647] sm:$0xf]
        %v677 = vld [vmem:[%s647 + $0x4] sm:$0xf]
        %v678 = vld [vmem:[%s647 + $0x8] sm:$0xf]
        %v679 = vld [vmem:[%s647 + $0xc] sm:$0xf]
        %v680 = vld [vmem:[%s647 + $0x10] sm:$0xf]
        %v681 = vld [vmem:[%s647 + $0x14] sm:$0xf]
        %v682 = vld [vmem:[%s647 + $0x18] sm:$0xf]
        %v683 = vld [vmem:[%s647 + $0x1c] sm:$0xf]
        %v684 = vld [vmem:[%s647 + $0x20] sm:$0xf]
        %v685 = vld [vmem:[%s647 + $0x24] sm:$0xf]
        %v686 = vld [vmem:[%s647 + $0x28] sm:$0xf]
        %v687 = vld [vmem:[%s647 + $0x2c] sm:$0xf]
        %v688 = vld [vmem:[%s647 + $0x30] sm:$0xf]
        %v689 = vld [vmem:[%s647 + $0x34] sm:$0xf]
        %v690 = vld [vmem:[%s647 + $0x38] sm:$0xf]
        %v691 = vld [vmem:[%s647 + $0x3c] sm:$0xf]
        %v692 = vld [vmem:[%s647 + $0x40] sm:$0xf]
        %v693 = vld [vmem:[%s647 + $0x44] sm:$0xf]
        %v694 = vld [vmem:[%s647 + $0x48] sm:$0xf]
        %v695 = vld [vmem:[%s647 + $0x4c] sm:$0xf]
        %v696 = vld [vmem:[%s647 + $0x50] sm:$0xf]
        %v697 = vld [vmem:[%s647 + $0x54] sm:$0xf]
        %v698 = vld [vmem:[%s647 + $0x58] sm:$0xf]
        %v699 = vld [vmem:[%s647 + $0x5c] sm:$0xf]
        %v700 = vld [vmem:[%s647 + $0x60] sm:$0xf]
        %v701 = vld [vmem:[%s647 + $0x64] sm:$0xf]
        %v702 = vld [vmem:[%s647 + $0x68] sm:$0xf]
        %v703 = vld [vmem:[%s647 + $0x6c] sm:$0xf]
        %v704 = vld [vmem:[%s647 + $0x70] sm:$0xf]
        %v705 = vld [vmem:[%s647 + $0x74] sm:$0xf]
        %v706 = vld [vmem:[%s647 + $0x78] sm:$0xf]
        %v707 = vld [vmem:[%s647 + $0x7c] sm:$0xf]
        %v708 = vld [vmem:[%s647 + $0x80] sm:$0xf]
        %v709 = vld [vmem:[%s647 + $0x84] sm:$0xf]
        %v710 = vld [vmem:[%s647 + $0x88] sm:$0xf]
        %v711 = vld [vmem:[%s647 + $0x8c] sm:$0xf]
        %v712 = vld [vmem:[%s647 + $0x90] sm:$0xf]
        %v713 = vld [vmem:[%s647 + $0x94] sm:$0xf]
        %v714 = vld [vmem:[%s647 + $0x98] sm:$0xf]
        %v715 = vld [vmem:[%s647 + $0x9c] sm:$0xf]
        %v716 = vld [vmem:[%s647 + $0xa0] sm:$0xf]
        %v717 = vld [vmem:[%s647 + $0xa4] sm:$0xf]
        %v718 = vld [vmem:[%s647 + $0xa8] sm:$0xf]
        %v719 = vld [vmem:[%s647 + $0xac] sm:$0xf]
        %v720 = vld [vmem:[%s647 + $0xb0] sm:$0xf]
        %v721 = vld [vmem:[%s647 + $0xb4] sm:$0xf]
        %v722 = vld [vmem:[%s647 + $0xb8] sm:$0xf]
        %v723 = vld [vmem:[%s647 + $0xbc] sm:$0xf]
        %v724 = vld [vmem:[%s647 + $0xc0] sm:$0xf]
        %v725 = vld [vmem:[%s647 + $0xc4] sm:$0xf]
        %v726 = vld [vmem:[%s647 + $0xc8] sm:$0xf]
        %v727 = vld [vmem:[%s647 + $0xcc] sm:$0xf]
        %v728 = vld [vmem:[%s647 + $0xd0] sm:$0xf]
        %v729 = vld [vmem:[%s647 + $0xd4] sm:$0xf]
        %v730 = vld [vmem:[%s647 + $0xd8] sm:$0xf]
        %v731 = vld [vmem:[%s647 + $0xdc] sm:$0xf]
        %v732 = vld [vmem:[%s647 + $0xe0] sm:$0xf]
        %v733 = vld [vmem:[%s647 + $0xe4] sm:$0xf]
        %v734 = vld [vmem:[%s647 + $0xe8] sm:$0xf]
        %v735 = vld [vmem:[%s647 + $0xec] sm:$0xf]
        %v736 = vld [vmem:[%s647 + $0xf0] sm:$0xf]
        %v737 = vld [vmem:[%s647 + $0xf4] sm:$0xf]
        %v738 = vld [vmem:[%s647 + $0xf8] sm:$0xf]
        %v739 = vld [vmem:[%s647 + $0xfc] sm:$0xf]
        %v740 = vld [vmem:[%s647 + $0x100] sm:$0xf]
        %v741 = vld [vmem:[%s647 + $0x104] sm:$0xf]
        %v742 = vld [vmem:[%s647 + $0x108] sm:$0xf]
        %v743 = vld [vmem:[%s647 + $0x10c] sm:$0xf]
        %v744 = vld [vmem:[%s647 + $0x110] sm:$0xf]
        %v745 = vld [vmem:[%s647 + $0x114] sm:$0xf]
        %v746 = vld [vmem:[%s647 + $0x118] sm:$0xf]
        %v747 = vld [vmem:[%s647 + $0x11c] sm:$0xf]
        %v748 = vld [vmem:[%s647 + $0x120] sm:$0xf]
        %v749 = vld [vmem:[%s647 + $0x124] sm:$0xf]
        %v750 = vld [vmem:[%s647 + $0x128] sm:$0xf]
        %v751 = vld [vmem:[%s647 + $0x12c] sm:$0xf]
        %v752 = vld [vmem:[%s647 + $0x130] sm:$0xf]
        %v753 = vld [vmem:[%s647 + $0x134] sm:$0xf]
        %v754 = vld [vmem:[%s647 + $0x138] sm:$0xf]
        %v755 = vld [vmem:[%s647 + $0x13c] sm:$0xf]
        %v756 = vld [vmem:[%s647 + $0x140] sm:$0xf]
        %v757 = vld [vmem:[%s647 + $0x144] sm:$0xf]
        %v758 = vld [vmem:[%s647 + $0x148] sm:$0xf]
        %v759 = vld [vmem:[%s647 + $0x14c] sm:$0xf]
        %v760 = vld [vmem:[%s647 + $0x150] sm:$0xf]
        %v761 = vld [vmem:[%s647 + $0x154] sm:$0xf]
        %v762 = vld [vmem:[%s647 + $0x158] sm:$0xf]
        %v763 = vld [vmem:[%s647 + $0x15c] sm:$0xf]
        %v764 = vld [vmem:[%s647 + $0x160] sm:$0xf]
        %v765 = vld [vmem:[%s647 + $0x164] sm:$0xf]
        %v766 = vld [vmem:[%s647 + $0x168] sm:$0xf]
        %v767 = vld [vmem:[%s647 + $0x16c] sm:$0xf]
        %v768 = vld [vmem:[%s647 + $0x170] sm:$0xf]
        %v769 = vld [vmem:[%s647 + $0x174] sm:$0xf]
        %v770 = vld [vmem:[%s647 + $0x178] sm:$0xf]
        %v771 = vld [vmem:[%s647 + $0x17c] sm:$0xf]
        %v772 = vld [vmem:[%s647 + $0x180] sm:$0xf]
        %v773 = vld [vmem:[%s647 + $0x184] sm:$0xf]
        %v774 = vld [vmem:[%s647 + $0x188] sm:$0xf]
        %v775 = vld [vmem:[%s647 + $0x18c] sm:$0xf]
        %v776 = vld [vmem:[%s647 + $0x190] sm:$0xf]
        %v777 = vld [vmem:[%s647 + $0x194] sm:$0xf]
        %v778 = vld [vmem:[%s647 + $0x198] sm:$0xf]
        %v779 = vld [vmem:[%s647 + $0x19c] sm:$0xf]
        %v780 = vld [vmem:[%s647 + $0x1a0] sm:$0xf]
        %v781 = vld [vmem:[%s647 + $0x1a4] sm:$0xf]
        %v782 = vld [vmem:[%s647 + $0x1a8] sm:$0xf]
        %v783 = vld [vmem:[%s647 + $0x1ac] sm:$0xf]
        %v784 = vld [vmem:[%s647 + $0x1b0] sm:$0xf]
        %v785 = vld [vmem:[%s647 + $0x1b4] sm:$0xf]
        %v786 = vld [vmem:[%s647 + $0x1b8] sm:$0xf]
        %v787 = vld [vmem:[%s647 + $0x1bc] sm:$0xf]
        %v788 = vld [vmem:[%s647 + $0x1c0] sm:$0xf]
        %v789 = vld [vmem:[%s647 + $0x1c4] sm:$0xf]
        %v790 = vld [vmem:[%s647 + $0x1c8] sm:$0xf]
        %v791 = vld [vmem:[%s647 + $0x1cc] sm:$0xf]
        %v792 = vld [vmem:[%s1] sm:$0xf]
        %v793 = vld [vmem:[%s1 + $0x4] sm:$0xf]
        %v794 = vld [vmem:[%s1 + $0x8] sm:$0xf]
        %v795 = vld [vmem:[%s1 + $0xc] sm:$0xf]
        %v912 = vunpack.c.l.b16 %v676
        %v913 = vunpack.c.l.b16 %v677
        %v914 = vunpack.c.l.b16 %v678
        %v915 = vunpack.c.l.b16 %v679
        %v916 = vunpack.c.l.b16 %v680
        %v917 = vunpack.c.l.b16 %v681
        %v918 = vunpack.c.l.b16 %v682
        %v919 = vunpack.c.l.b16 %v683
        %v920 = vunpack.c.l.b16 %v684
        %v921 = vunpack.c.l.b16 %v685
        %v922 = vunpack.c.l.b16 %v686
        %v923 = vunpack.c.l.b16 %v687
        %v924 = vunpack.c.l.b16 %v688
        %v925 = vunpack.c.l.b16 %v689
        %v926 = vunpack.c.l.b16 %v690
        %v927 = vunpack.c.l.b16 %v691
        %v928 = vunpack.c.l.b16 %v692
        %v929 = vunpack.c.l.b16 %v693
        %v930 = vunpack.c.l.b16 %v694
        %v931 = vunpack.c.l.b16 %v695
        %v932 = vunpack.c.l.b16 %v696
        %v933 = vunpack.c.l.b16 %v697
        %v934 = vunpack.c.l.b16 %v698
        %v935 = vunpack.c.l.b16 %v699
        %v936 = vunpack.c.l.b16 %v700
        %v937 = vunpack.c.l.b16 %v701
        %v938 = vunpack.c.l.b16 %v702
        %v939 = vunpack.c.l.b16 %v703
        %v940 = vunpack.c.l.b16 %v704
        %v941 = vunpack.c.l.b16 %v705
        %v942 = vunpack.c.l.b16 %v706
        %v943 = vunpack.c.l.b16 %v707
        %v944 = vunpack.c.l.b16 %v708
        %v945 = vunpack.c.l.b16 %v709
        %v946 = vunpack.c.l.b16 %v710
        %v947 = vunpack.c.l.b16 %v711
        %v948 = vunpack.c.l.b16 %v712
        %v949 = vunpack.c.l.b16 %v713
        %v950 = vunpack.c.l.b16 %v714
        %v951 = vunpack.c.l.b16 %v715
        %v952 = vunpack.c.l.b16 %v716
        %v953 = vunpack.c.l.b16 %v717
        %v954 = vunpack.c.l.b16 %v718
        %v955 = vunpack.c.l.b16 %v719
        %v956 = vunpack.c.l.b16 %v720
        %v957 = vunpack.c.l.b16 %v721
        %v958 = vunpack.c.l.b16 %v722
        %v959 = vunpack.c.l.b16 %v723
        %v960 = vunpack.c.l.b16 %v724
        %v961 = vunpack.c.l.b16 %v725
        %v962 = vunpack.c.l.b16 %v726
        %v963 = vunpack.c.l.b16 %v727
        %v964 = vunpack.c.l.b16 %v728
        %v965 = vunpack.c.l.b16 %v729
        %v966 = vunpack.c.l.b16 %v730
        %v967 = vunpack.c.l.b16 %v731
        %v968 = vunpack.c.l.b16 %v732
        %v969 = vunpack.c.l.b16 %v733
        %v970 = vunpack.c.l.b16 %v734
        %v971 = vunpack.c.l.b16 %v735
        %v972 = vunpack.c.l.b16 %v736
        %v973 = vunpack.c.l.b16 %v737
        %v974 = vunpack.c.l.b16 %v738
        %v975 = vunpack.c.l.b16 %v739
        %v976 = vunpack.c.l.b16 %v740
        %v977 = vunpack.c.l.b16 %v741
        %v978 = vunpack.c.l.b16 %v742
        %v979 = vunpack.c.l.b16 %v743
        %v980 = vunpack.c.l.b16 %v744
        %v981 = vunpack.c.l.b16 %v745
        %v982 = vunpack.c.l.b16 %v746
        %v983 = vunpack.c.l.b16 %v747
        %v984 = vunpack.c.l.b16 %v748
        %v985 = vunpack.c.l.b16 %v749
        %v986 = vunpack.c.l.b16 %v750
        %v987 = vunpack.c.l.b16 %v751
        %v988 = vunpack.c.l.b16 %v752
        %v989 = vunpack.c.l.b16 %v753
        %v990 = vunpack.c.l.b16 %v754
        %v991 = vunpack.c.l.b16 %v755
        %v992 = vunpack.c.l.b16 %v756
        %v993 = vunpack.c.l.b16 %v757
        %v994 = vunpack.c.l.b16 %v758
        %v995 = vunpack.c.l.b16 %v759
        %v996 = vunpack.c.l.b16 %v760
        %v997 = vunpack.c.l.b16 %v761
        %v998 = vunpack.c.l.b16 %v762
        %v999 = vunpack.c.l.b16 %v763
        %v1000 = vunpack.c.l.b16 %v764
        %v1001 = vunpack.c.l.b16 %v765
        %v1002 = vunpack.c.l.b16 %v766
        %v1003 = vunpack.c.l.b16 %v767
        %v1004 = vunpack.c.l.b16 %v768
        %v1005 = vunpack.c.l.b16 %v769
        %v1006 = vunpack.c.l.b16 %v770
        %v1007 = vunpack.c.l.b16 %v771
        %v1008 = vunpack.c.l.b16 %v772
        %v1009 = vunpack.c.l.b16 %v773
        %v1010 = vunpack.c.l.b16 %v774
        %v1011 = vunpack.c.l.b16 %v775
        %v1012 = vunpack.c.l.b16 %v776
        %v1013 = vunpack.c.l.b16 %v777
        %v1014 = vunpack.c.l.b16 %v778
        %v1015 = vunpack.c.l.b16 %v779
        %v1016 = vunpack.c.l.b16 %v780
        %v1017 = vunpack.c.l.b16 %v781
        %v1018 = vunpack.c.l.b16 %v782
        %v1019 = vunpack.c.l.b16 %v783
        %v1020 = vunpack.c.l.b16 %v784
        %v1021 = vunpack.c.l.b16 %v785
        %v1022 = vunpack.c.l.b16 %v786
        %v1023 = vunpack.c.l.b16 %v787
        %v1024 = vunpack.c.l.b16 %v788
        %v1025 = vunpack.c.l.b16 %v789
        %v1026 = vunpack.c.l.b16 %v790
        %v1027 = vunpack.c.l.b16 %v791
        %v1028 = vpack.c.b16 %v913, %v912
        %v1029 = vpack.c.b16 %v915, %v914
        %v1030 = vpack.c.b16 %v917, %v916
        %v1031 = vpack.c.b16 %v919, %v918
        %v1032 = vpack.c.b16 %v921, %v920
        %v1033 = vpack.c.b16 %v923, %v922
        %v1034 = vpack.c.b16 %v925, %v924
        %v1035 = vpack.c.b16 %v927, %v926
        %v1036 = vpack.c.b16 %v929, %v928
        %v1037 = vpack.c.b16 %v931, %v930
        %v1038 = vpack.c.b16 %v933, %v932
        %v1039 = vpack.c.b16 %v935, %v934
        %v1040 = vpack.c.b16 %v937, %v936
        %v1041 = vpack.c.b16 %v939, %v938
        %v1042 = vpack.c.b16 %v941, %v940
        %v1043 = vpack.c.b16 %v943, %v942
        %v1044 = vpack.c.b16 %v945, %v944
        %v1045 = vpack.c.b16 %v947, %v946
        %v1046 = vpack.c.b16 %v949, %v948
        %v1047 = vpack.c.b16 %v951, %v950
        %v1048 = vpack.c.b16 %v953, %v952
        %v1049 = vpack.c.b16 %v955, %v954
        %v1050 = vpack.c.b16 %v957, %v956
        %v1051 = vpack.c.b16 %v959, %v958
        %v1052 = vpack.c.b16 %v961, %v960
        %v1053 = vpack.c.b16 %v963, %v962
        %v1054 = vpack.c.b16 %v965, %v964
        %v1055 = vpack.c.b16 %v967, %v966
        %v1056 = vpack.c.b16 %v969, %v968
        %v1057 = vpack.c.b16 %v971, %v970
        %v1058 = vpack.c.b16 %v973, %v972
        %v1059 = vpack.c.b16 %v975, %v974
        %v1060 = vpack.c.b16 %v977, %v976
        %v1061 = vpack.c.b16 %v979, %v978
        %v1062 = vpack.c.b16 %v981, %v980
        %v1063 = vpack.c.b16 %v983, %v982
        %v1064 = vpack.c.b16 %v985, %v984
        %v1065 = vpack.c.b16 %v987, %v986
        %v1066 = vpack.c.b16 %v989, %v988
        %v1067 = vpack.c.b16 %v991, %v990
        %v1068 = vpack.c.b16 %v993, %v992
        %v1069 = vpack.c.b16 %v995, %v994
        %v1070 = vpack.c.b16 %v997, %v996
        %v1071 = vpack.c.b16 %v999, %v998
        %v1072 = vpack.c.b16 %v1001, %v1000
        %v1073 = vpack.c.b16 %v1003, %v1002
        %v1074 = vpack.c.b16 %v1005, %v1004
        %v1075 = vpack.c.b16 %v1007, %v1006
        %v1076 = vpack.c.b16 %v1009, %v1008
        %v1077 = vpack.c.b16 %v1011, %v1010
        %v1078 = vpack.c.b16 %v1013, %v1012
        %v1079 = vpack.c.b16 %v1015, %v1014
        %v1080 = vpack.c.b16 %v1017, %v1016
        %v1081 = vpack.c.b16 %v1019, %v1018
        %v1082 = vpack.c.b16 %v1021, %v1020
        %v1083 = vpack.c.b16 %v1023, %v1022
        %v1084 = vpack.c.b16 %v1025, %v1024
        %v1085 = vpack.c.b16 %v1027, %v1026
        %v1090 = vunpack.c.l.b16 %v792
        %v1091 = vunpack.c.l.b16 %v793
        %v1092 = vunpack.c.l.b16 %v794
        %v1093 = vunpack.c.l.b16 %v795
        %v1094 = vpack.c.b16 %v1091, %v1090
        %v1095 = vpack.c.b16 %v1093, %v1092
        %vm1098 = vcmask 261120
        %v1100 = vsel %vm1098, %v1028, 0
        %v1103 = vsel %vm1098, %v1029, 0
        %v1106 = vsel %vm1098, %v1030, 0
        %v1109 = vsel %vm1098, %v1031, 0
        %v1112 = vsel %vm1098, %v1032, 0
        %v1115 = vsel %vm1098, %v1033, 0
        %v1118 = vsel %vm1098, %v1034, 0
        %v1121 = vsel %vm1098, %v1035, 0
        %v1124 = vsel %vm1098, %v1036, 0
        %v1127 = vsel %vm1098, %v1037, 0
        %v1130 = vsel %vm1098, %v1038, 0
        %v1133 = vsel %vm1098, %v1039, 0
        %v1136 = vsel %vm1098, %v1040, 0
        %v1139 = vsel %vm1098, %v1041, 0
        %v1142 = vsel %vm1098, %v1042, 0
        %v1145 = vsel %vm1098, %v1043, 0
        %v1148 = vsel %vm1098, %v1044, 0
        %v1151 = vsel %vm1098, %v1045, 0
        %v1154 = vsel %vm1098, %v1046, 0
        %v1157 = vsel %vm1098, %v1047, 0
        %v1160 = vsel %vm1098, %v1048, 0
        %v1163 = vsel %vm1098, %v1049, 0
        %v1166 = vsel %vm1098, %v1050, 0
        %v1169 = vsel %vm1098, %v1051, 0
        %v1172 = vsel %vm1098, %v1052, 0
        %v1175 = vsel %vm1098, %v1053, 0
        %v1178 = vsel %vm1098, %v1054, 0
        %v1181 = vsel %vm1098, %v1055, 0
        %v1184 = vsel %vm1098, %v1056, 0
        %v1187 = vsel %vm1098, %v1057, 0
        %v1190 = vsel %vm1098, %v1058, 0
        %v1193 = vsel %vm1098, %v1059, 0
        %v1196 = vsel %vm1098, %v1060, 0
        %v1199 = vsel %vm1098, %v1061, 0
        %v1202 = vsel %vm1098, %v1062, 0
        %v1205 = vsel %vm1098, %v1063, 0
        %v1208 = vsel %vm1098, %v1064, 0
        %v1211 = vsel %vm1098, %v1065, 0
        %v1214 = vsel %vm1098, %v1066, 0
        %v1217 = vsel %vm1098, %v1067, 0
        %v1220 = vsel %vm1098, %v1068, 0
        %v1223 = vsel %vm1098, %v1069, 0
        %v1226 = vsel %vm1098, %v1070, 0
        %v1229 = vsel %vm1098, %v1071, 0
        %v1232 = vsel %vm1098, %v1072, 0
        %v1235 = vsel %vm1098, %v1073, 0
        %v1238 = vsel %vm1098, %v1074, 0
        %v1241 = vsel %vm1098, %v1075, 0
        %v1244 = vsel %vm1098, %v1076, 0
        %v1247 = vsel %vm1098, %v1077, 0
        %v1250 = vsel %vm1098, %v1078, 0
        %v1253 = vsel %vm1098, %v1079, 0
        %v1256 = vsel %vm1098, %v1080, 0
        %v1259 = vsel %vm1098, %v1081, 0
        %v1262 = vsel %vm1098, %v1082, 0
        %v1265 = vsel %vm1098, %v1083, 0
        %v1268 = vsel %vm1098, %v1084, 0
        %v1271 = vsel %vm1098, %v1085, 0
        %1273 = vmatprep.subr.bf16.mxu0 0
        %1274 = vmatpush1.bf16.msra.mxu0 %v1094
        %1275 = vmatprep.subr.bf16.mxu0 0
        %1276 = vmatpush1.bf16.msra.mxu0 %v1095
        %1277 = vmatprep.subr.bf16.mxu0 0
        %1278 = vmatpush1.bf16.msra.mxu0 0
        %1279 = vmatprep.subr.bf16.mxu0 0
        %1280 = vmatpush1.bf16.msra.mxu0 0
        %1281 = vmatprep.subr.bf16.mxu0 0
        %1282 = vmatpush1.bf16.msra.mxu0 0
        %1283 = vmatprep.subr.bf16.mxu0 0
        %1284 = vmatpush1.bf16.msra.mxu0 0
        %1285 = vmatprep.subr.bf16.mxu0 0
        %1286 = vmatpush1.bf16.msra.mxu0 0
        %1287 = vmatprep.subr.bf16.mxu0 0
        %1288 = vmatpush1.bf16.msra.mxu0 0
        %1289 = vmatprep.subr.bf16.mxu0 0
        %1290 = vmatpush1.bf16.msra.mxu0 0
        %1291 = vmatprep.subr.bf16.mxu0 0
        %1292 = vmatpush1.bf16.msra.mxu0 0
        %1293 = vmatprep.subr.bf16.mxu0 0
        %1294 = vmatpush1.bf16.msra.mxu0 0
        %1295 = vmatprep.subr.bf16.mxu0 0
        %1296 = vmatpush1.bf16.msra.mxu0 0
        %1297 = vmatprep.subr.bf16.mxu0 0
        %1298 = vmatpush1.bf16.msra.mxu0 0
        %1299 = vmatprep.subr.bf16.mxu0 0
        %1300 = vmatpush1.bf16.msra.mxu0 0
        %1301 = vmatprep.subr.bf16.mxu0 0
        %1302 = vmatpush1.bf16.msra.mxu0 0
        %1303 = vmatprep.subr.bf16.mxu0 0
        %1304 = vmatpush1.bf16.msra.mxu0 0
        %1305 = vmatprep.mubr.bf16.mxu0 0
        %1306 = vmatmul.mubr.bf16.gmra.mrb[0].mxu0 %v1100
        %v1307 = vpop.f32.mrb[0].mxu0
        %v1308 = vadd.f32 0.0, %v1307
        %v1309 = vpop.f32.mrb[0].mxu0
        %v1310 = vpop.f32.mrb[0].mxu0
        %v1311 = vadd.f32 0.0, %v1310
        %v1312 = vpop.f32.mrb[0].mxu0
        %1313 = vmatprep.mubr.bf16.mxu0 0
        %1314 = vmatmul.mubr.bf16.gmra.mrb[0].mxu0 %v1103
        %v1315 = vpop.f32.mrb[0].mxu0
        %v1316 = vadd.f32 0.0, %v1315
        %v1317 = vpop.f32.mrb[0].mxu0
        %v1318 = vpop.f32.mrb[0].mxu0
        %v1319 = vadd.f32 0.0, %v1318
        %v1320 = vpop.f32.mrb[0].mxu0
        %1321 = vmatprep.mubr.bf16.mxu0 0
        %1322 = vmatmul.mubr.bf16.gmra.mrb[0].mxu0 %v1106
        %v1323 = vpop.f32.mrb[0].mxu0
        %v1324 = vadd.f32 0.0, %v1323
        %v1325 = vpop.f32.mrb[0].mxu0
        %v1326 = vpop.f32.mrb[0].mxu0
        %v1327 = vadd.f32 0.0, %v1326
        %v1328 = vpop.f32.mrb[0].mxu0
        %1329 = vmatprep.mubr.bf16.mxu0 0
        %1330 = vmatmul.mubr.bf16.gmra.mrb[0].mxu0 %v1109
        %v1331 = vpop.f32.mrb[0].mxu0
        %v1332 = vadd.f32 0.0, %v1331
        %v1333 = vpop.f32.mrb[0].mxu0
        %v1334 = vpop.f32.mrb[0].mxu0
        %v1335 = vadd.f32 0.0, %v1334
        %v1336 = vpop.f32.mrb[0].mxu0
        %1337 = vmatprep.mubr.bf16.mxu0 0
        %1338 = vmatmul.mubr.bf16.gmra.mrb[0].mxu0 %v1112
        %v1339 = vpop.f32.mrb[0].mxu0
        %v1340 = vadd.f32 0.0, %v1339
        %v1341 = vpop.f32.mrb[0].mxu0
        %v1342 = vpop.f32.mrb[0].mxu0
        %v1343 = vadd.f32 0.0, %v1342
        %v1344 = vpop.f32.mrb[0].mxu0
        %1345 = vmatprep.mubr.bf16.mxu0 0
        %1346 = vmatmul.mubr.bf16.gmra.mrb[0].mxu0 %v1115
        %v1347 = vpop.f32.mrb[0].mxu0
        %v1348 = vadd.f32 0.0, %v1347
        %v1349 = vpop.f32.mrb[0].mxu0
        %v1350 = vpop.f32.mrb[0].mxu0
        %v1351 = vadd.f32 0.0, %v1350
        %v1352 = vpop.f32.mrb[0].mxu0
        %1353 = vmatprep.mubr.bf16.mxu0 0
        %1354 = vmatmul.mubr.bf16.gmra.mrb[0].mxu0 %v1118
        %v1355 = vpop.f32.mrb[0].mxu0
        %v1356 = vadd.f32 0.0, %v1355
        %v1357 = vpop.f32.mrb[0].mxu0
        %v1358 = vpop.f32.mrb[0].mxu0
        %v1359 = vadd.f32 0.0, %v1358
        %v1360 = vpop.f32.mrb[0].mxu0
        %1361 = vmatprep.mubr.bf16.mxu0 0
        %1362 = vmatmul.mubr.bf16.gmra.mrb[0].mxu0 %v1121
        %v1363 = vpop.f32.mrb[0].mxu0
        %v1364 = vadd.f32 0.0, %v1363
        %v1365 = vpop.f32.mrb[0].mxu0
        %v1366 = vpop.f32.mrb[0].mxu0
        %v1367 = vadd.f32 0.0, %v1366
        %v1368 = vpop.f32.mrb[0].mxu0
        %1369 = vmatprep.mubr.bf16.mxu0 0
        %1370 = vmatmul.mubr.bf16.gmra.mrb[0].mxu0 %v1124
        %v1371 = vpop.f32.mrb[0].mxu0
        %v1372 = vadd.f32 0.0, %v1371
        %v1373 = vpop.f32.mrb[0].mxu0
        %v1374 = vpop.f32.mrb[0].mxu0
        %v1375 = vadd.f32 0.0, %v1374
        %v1376 = vpop.f32.mrb[0].mxu0
        %1377 = vmatprep.mubr.bf16.mxu0 0
        %1378 = vmatmul.mubr.bf16.gmra.mrb[0].mxu0 %v1127
        %v1379 = vpop.f32.mrb[0].mxu0
        %v1380 = vadd.f32 0.0, %v1379
        %v1381 = vpop.f32.mrb[0].mxu0
        %v1382 = vpop.f32.mrb[0].mxu0
        %v1383 = vadd.f32 0.0, %v1382
        %v1384 = vpop.f32.mrb[0].mxu0
        %1385 = vmatprep.mubr.bf16.mxu0 0
        %1386 = vmatmul.mubr.bf16.gmra.mrb[0].mxu0 %v1130
        %v1387 = vpop.f32.mrb[0].mxu0
        %v1388 = vadd.f32 0.0, %v1387
        %v1389 = vpop.f32.mrb[0].mxu0
        %v1390 = vpop.f32.mrb[0].mxu0
        %v1391 = vadd.f32 0.0, %v1390
        %v1392 = vpop.f32.mrb[0].mxu0
        %1393 = vmatprep.mubr.bf16.mxu0 0
        %1394 = vmatmul.mubr.bf16.gmra.mrb[0].mxu0 %v1133
        %v1395 = vpop.f32.mrb[0].mxu0
        %v1396 = vadd.f32 0.0, %v1395
        %v1397 = vpop.f32.mrb[0].mxu0
        %v1398 = vpop.f32.mrb[0].mxu0
        %v1399 = vadd.f32 0.0, %v1398
        %v1400 = vpop.f32.mrb[0].mxu0
        %1401 = vmatprep.mubr.bf16.mxu0 0
        %1402 = vmatmul.mubr.bf16.gmra.mrb[0].mxu0 %v1136
        %v1403 = vpop.f32.mrb[0].mxu0
        %v1404 = vadd.f32 0.0, %v1403
        %v1405 = vpop.f32.mrb[0].mxu0
        %v1406 = vpop.f32.mrb[0].mxu0
        %v1407 = vadd.f32 0.0, %v1406
        %v1408 = vpop.f32.mrb[0].mxu0
        %1409 = vmatprep.mubr.bf16.mxu0 0
        %1410 = vmatmul.mubr.bf16.gmra.mrb[0].mxu0 %v1139
        %v1411 = vpop.f32.mrb[0].mxu0
        %v1412 = vadd.f32 0.0, %v1411
        %v1413 = vpop.f32.mrb[0].mxu0
        %v1414 = vpop.f32.mrb[0].mxu0
        %v1415 = vadd.f32 0.0, %v1414
        %v1416 = vpop.f32.mrb[0].mxu0
        %1417 = vmatprep.mubr.bf16.mxu0 0
        %1418 = vmatmul.mubr.bf16.gmra.mrb[0].mxu0 %v1142
        %v1419 = vpop.f32.mrb[0].mxu0
        %v1420 = vadd.f32 0.0, %v1419
        %v1421 = vpop.f32.mrb[0].mxu0
        %v1422 = vpop.f32.mrb[0].mxu0
        %v1423 = vadd.f32 0.0, %v1422
        %v1424 = vpop.f32.mrb[0].mxu0
        %1425 = vmatprep.mubr.bf16.mxu0 0
        %1426 = vmatmul.mubr.bf16.gmra.mrb[0].mxu0 %v1145
        %v1427 = vpop.f32.mrb[0].mxu0
        %v1428 = vadd.f32 0.0, %v1427
        %v1429 = vpop.f32.mrb[0].mxu0
        %v1430 = vpop.f32.mrb[0].mxu0
        %v1431 = vadd.f32 0.0, %v1430
        %v1432 = vpop.f32.mrb[0].mxu0
        %1433 = vmatprep.mubr.bf16.mxu0 0
        %1434 = vmatmul.mubr.bf16.gmra.mrb[0].mxu0 %v1148
        %v1435 = vpop.f32.mrb[0].mxu0
        %v1436 = vadd.f32 0.0, %v1435
        %v1437 = vpop.f32.mrb[0].mxu0
        %v1438 = vpop.f32.mrb[0].mxu0
        %v1439 = vadd.f32 0.0, %v1438
        %v1440 = vpop.f32.mrb[0].mxu0
        %1441 = vmatprep.mubr.bf16.mxu0 0
        %1442 = vmatmul.mubr.bf16.gmra.mrb[0].mxu0 %v1151
        %v1443 = vpop.f32.mrb[0].mxu0
        %v1444 = vadd.f32 0.0, %v1443
        %v1445 = vpop.f32.mrb[0].mxu0
        %v1446 = vpop.f32.mrb[0].mxu0
        %v1447 = vadd.f32 0.0, %v1446
        %v1448 = vpop.f32.mrb[0].mxu0
        %1449 = vmatprep.mubr.bf16.mxu0 0
        %1450 = vmatmul.mubr.bf16.gmra.mrb[0].mxu0 %v1154
        %v1451 = vpop.f32.mrb[0].mxu0
        %v1452 = vadd.f32 0.0, %v1451
        %v1453 = vpop.f32.mrb[0].mxu0
        %v1454 = vpop.f32.mrb[0].mxu0
        %v1455 = vadd.f32 0.0, %v1454
        %v1456 = vpop.f32.mrb[0].mxu0
        %1457 = vmatprep.mubr.bf16.mxu0 0
        %1458 = vmatmul.mubr.bf16.gmra.mrb[0].mxu0 %v1157
        %v1459 = vpop.f32.mrb[0].mxu0
        %v1460 = vadd.f32 0.0, %v1459
        %v1461 = vpop.f32.mrb[0].mxu0
        %v1462 = vpop.f32.mrb[0].mxu0
        %v1463 = vadd.f32 0.0, %v1462
        %v1464 = vpop.f32.mrb[0].mxu0
        %1465 = vmatprep.mubr.bf16.mxu0 0
        %1466 = vmatmul.mubr.bf16.gmra.mrb[0].mxu0 %v1160
        %v1467 = vpop.f32.mrb[0].mxu0
        %v1468 = vadd.f32 0.0, %v1467
        %v1469 = vpop.f32.mrb[0].mxu0
        %v1470 = vpop.f32.mrb[0].mxu0
        %v1471 = vadd.f32 0.0, %v1470
        %v1472 = vpop.f32.mrb[0].mxu0
        %1473 = vmatprep.mubr.bf16.mxu0 0
        %1474 = vmatmul.mubr.bf16.gmra.mrb[0].mxu0 %v1163
        %v1475 = vpop.f32.mrb[0].mxu0
        %v1476 = vadd.f32 0.0, %v1475
        %v1477 = vpop.f32.mrb[0].mxu0
        %v1478 = vpop.f32.mrb[0].mxu0
        %v1479 = vadd.f32 0.0, %v1478
        %v1480 = vpop.f32.mrb[0].mxu0
        %1481 = vmatprep.mubr.bf16.mxu0 0
        %1482 = vmatmul.mubr.bf16.gmra.mrb[0].mxu0 %v1166
        %v1483 = vpop.f32.mrb[0].mxu0
        %v1484 = vadd.f32 0.0, %v1483
        %v1485 = vpop.f32.mrb[0].mxu0
        %v1486 = vpop.f32.mrb[0].mxu0
        %v1487 = vadd.f32 0.0, %v1486
        %v1488 = vpop.f32.mrb[0].mxu0
        %1489 = vmatprep.mubr.bf16.mxu0 0
        %1490 = vmatmul.mubr.bf16.gmra.mrb[0].mxu0 %v1169
        %v1491 = vpop.f32.mrb[0].mxu0
        %v1492 = vadd.f32 0.0, %v1491
        %v1493 = vpop.f32.mrb[0].mxu0
        %v1494 = vpop.f32.mrb[0].mxu0
        %v1495 = vadd.f32 0.0, %v1494
        %v1496 = vpop.f32.mrb[0].mxu0
        %1497 = vmatprep.mubr.bf16.mxu0 0
        %1498 = vmatmul.mubr.bf16.gmra.mrb[0].mxu0 %v1172
        %v1499 = vpop.f32.mrb[0].mxu0
        %v1500 = vadd.f32 0.0, %v1499
        %v1501 = vpop.f32.mrb[0].mxu0
        %v1502 = vpop.f32.mrb[0].mxu0
        %v1503 = vadd.f32 0.0, %v1502
        %v1504 = vpop.f32.mrb[0].mxu0
        %1505 = vmatprep.mubr.bf16.mxu0 0
        %1506 = vmatmul.mubr.bf16.gmra.mrb[0].mxu0 %v1175
        %v1507 = vpop.f32.mrb[0].mxu0
        %v1508 = vadd.f32 0.0, %v1507
        %v1509 = vpop.f32.mrb[0].mxu0
        %v1510 = vpop.f32.mrb[0].mxu0
        %v1511 = vadd.f32 0.0, %v1510
        %v1512 = vpop.f32.mrb[0].mxu0
        %1513 = vmatprep.mubr.bf16.mxu0 0
        %1514 = vmatmul.mubr.bf16.gmra.mrb[0].mxu0 %v1178
        %v1515 = vpop.f32.mrb[0].mxu0
        %v1516 = vadd.f32 0.0, %v1515
        %v1517 = vpop.f32.mrb[0].mxu0
        %v1518 = vpop.f32.mrb[0].mxu0
        %v1519 = vadd.f32 0.0, %v1518
        %v1520 = vpop.f32.mrb[0].mxu0
        %1521 = vmatprep.mubr.bf16.mxu0 0
        %1522 = vmatmul.mubr.bf16.gmra.mrb[0].mxu0 %v1181
        %v1523 = vpop.f32.mrb[0].mxu0
        %v1524 = vadd.f32 0.0, %v1523
        %v1525 = vpop.f32.mrb[0].mxu0
        %v1526 = vpop.f32.mrb[0].mxu0
        %v1527 = vadd.f32 0.0, %v1526
        %v1528 = vpop.f32.mrb[0].mxu0
        %1529 = vmatprep.mubr.bf16.mxu0 0
        %1530 = vmatmul.mubr.bf16.gmra.mrb[0].mxu0 %v1184
        %v1531 = vpop.f32.mrb[0].mxu0
        %v1532 = vadd.f32 0.0, %v1531
        %v1533 = vpop.f32.mrb[0].mxu0
        %v1534 = vpop.f32.mrb[0].mxu0
        %v1535 = vadd.f32 0.0, %v1534
        %v1536 = vpop.f32.mrb[0].mxu0
        %1537 = vmatprep.mubr.bf16.mxu0 0
        %1538 = vmatmul.mubr.bf16.gmra.mrb[0].mxu0 %v1187
        %v1539 = vpop.f32.mrb[0].mxu0
        %v1540 = vadd.f32 0.0, %v1539
        %v1541 = vpop.f32.mrb[0].mxu0
        %v1542 = vpop.f32.mrb[0].mxu0
        %v1543 = vadd.f32 0.0, %v1542
        %v1544 = vpop.f32.mrb[0].mxu0
        %1545 = vmatprep.mubr.bf16.mxu0 0
        %1546 = vmatmul.mubr.bf16.gmra.mrb[0].mxu0 %v1190
        %v1547 = vpop.f32.mrb[0].mxu0
        %v1548 = vadd.f32 0.0, %v1547
        %v1549 = vpop.f32.mrb[0].mxu0
        %v1550 = vpop.f32.mrb[0].mxu0
        %v1551 = vadd.f32 0.0, %v1550
        %v1552 = vpop.f32.mrb[0].mxu0
        %1553 = vmatprep.mubr.bf16.mxu0 0
        %1554 = vmatmul.mubr.bf16.gmra.mrb[0].mxu0 %v1193
        %v1555 = vpop.f32.mrb[0].mxu0
        %v1556 = vadd.f32 0.0, %v1555
        %v1557 = vpop.f32.mrb[0].mxu0
        %v1558 = vpop.f32.mrb[0].mxu0
        %v1559 = vadd.f32 0.0, %v1558
        %v1560 = vpop.f32.mrb[0].mxu0
        %1561 = vmatprep.mubr.bf16.mxu0 0
        %1562 = vmatmul.mubr.bf16.gmra.mrb[0].mxu0 %v1196
        %v1563 = vpop.f32.mrb[0].mxu0
        %v1564 = vadd.f32 0.0, %v1563
        %v1565 = vpop.f32.mrb[0].mxu0
        %v1566 = vpop.f32.mrb[0].mxu0
        %v1567 = vadd.f32 0.0, %v1566
        %v1568 = vpop.f32.mrb[0].mxu0
        %1569 = vmatprep.mubr.bf16.mxu0 0
        %1570 = vmatmul.mubr.bf16.gmra.mrb[0].mxu0 %v1199
        %v1571 = vpop.f32.mrb[0].mxu0
        %v1572 = vadd.f32 0.0, %v1571
        %v1573 = vpop.f32.mrb[0].mxu0
        %v1574 = vpop.f32.mrb[0].mxu0
        %v1575 = vadd.f32 0.0, %v1574
        %v1576 = vpop.f32.mrb[0].mxu0
        %1577 = vmatprep.mubr.bf16.mxu0 0
        %1578 = vmatmul.mubr.bf16.gmra.mrb[0].mxu0 %v1202
        %v1579 = vpop.f32.mrb[0].mxu0
        %v1580 = vadd.f32 0.0, %v1579
        %v1581 = vpop.f32.mrb[0].mxu0
        %v1582 = vpop.f32.mrb[0].mxu0
        %v1583 = vadd.f32 0.0, %v1582
        %v1584 = vpop.f32.mrb[0].mxu0
        %1585 = vmatprep.mubr.bf16.mxu0 0
        %1586 = vmatmul.mubr.bf16.gmra.mrb[0].mxu0 %v1205
        %v1587 = vpop.f32.mrb[0].mxu0
        %v1588 = vadd.f32 0.0, %v1587
        %v1589 = vpop.f32.mrb[0].mxu0
        %v1590 = vpop.f32.mrb[0].mxu0
        %v1591 = vadd.f32 0.0, %v1590
        %v1592 = vpop.f32.mrb[0].mxu0
        %1593 = vmatprep.mubr.bf16.mxu0 0
        %1594 = vmatmul.mubr.bf16.gmra.mrb[0].mxu0 %v1208
        %v1595 = vpop.f32.mrb[0].mxu0
        %v1596 = vadd.f32 0.0, %v1595
        %v1597 = vpop.f32.mrb[0].mxu0
        %v1598 = vpop.f32.mrb[0].mxu0
        %v1599 = vadd.f32 0.0, %v1598
        %v1600 = vpop.f32.mrb[0].mxu0
        %1601 = vmatprep.mubr.bf16.mxu0 0
        %1602 = vmatmul.mubr.bf16.gmra.mrb[0].mxu0 %v1211
        %v1603 = vpop.f32.mrb[0].mxu0
        %v1604 = vadd.f32 0.0, %v1603
        %v1605 = vpop.f32.mrb[0].mxu0
        %v1606 = vpop.f32.mrb[0].mxu0
        %v1607 = vadd.f32 0.0, %v1606
        %v1608 = vpop.f32.mrb[0].mxu0
        %1609 = vmatprep.mubr.bf16.mxu0 0
        %1610 = vmatmul.mubr.bf16.gmra.mrb[0].mxu0 %v1214
        %v1611 = vpop.f32.mrb[0].mxu0
        %v1612 = vadd.f32 0.0, %v1611
        %v1613 = vpop.f32.mrb[0].mxu0
        %v1614 = vpop.f32.mrb[0].mxu0
        %v1615 = vadd.f32 0.0, %v1614
        %v1616 = vpop.f32.mrb[0].mxu0
        %1617 = vmatprep.mubr.bf16.mxu0 0
        %1618 = vmatmul.mubr.bf16.gmra.mrb[0].mxu0 %v1217
        %v1619 = vpop.f32.mrb[0].mxu0
        %v1620 = vadd.f32 0.0, %v1619
        %v1621 = vpop.f32.mrb[0].mxu0
        %v1622 = vpop.f32.mrb[0].mxu0
        %v1623 = vadd.f32 0.0, %v1622
        %v1624 = vpop.f32.mrb[0].mxu0
        %1625 = vmatprep.mubr.bf16.mxu0 0
        %1626 = vmatmul.mubr.bf16.gmra.mrb[0].mxu0 %v1220
        %v1627 = vpop.f32.mrb[0].mxu0
        %v1628 = vadd.f32 0.0, %v1627
        %v1629 = vpop.f32.mrb[0].mxu0
        %v1630 = vpop.f32.mrb[0].mxu0
        %v1631 = vadd.f32 0.0, %v1630
        %v1632 = vpop.f32.mrb[0].mxu0
        %1633 = vmatprep.mubr.bf16.mxu0 0
        %1634 = vmatmul.mubr.bf16.gmra.mrb[0].mxu0 %v1223
        %v1635 = vpop.f32.mrb[0].mxu0
        %v1636 = vadd.f32 0.0, %v1635
        %v1637 = vpop.f32.mrb[0].mxu0
        %v1638 = vpop.f32.mrb[0].mxu0
        %v1639 = vadd.f32 0.0, %v1638
        %v1640 = vpop.f32.mrb[0].mxu0
        %1641 = vmatprep.mubr.bf16.mxu0 0
        %1642 = vmatmul.mubr.bf16.gmra.mrb[0].mxu0 %v1226
        %v1643 = vpop.f32.mrb[0].mxu0
        %v1644 = vadd.f32 0.0, %v1643
        %v1645 = vpop.f32.mrb[0].mxu0
        %v1646 = vpop.f32.mrb[0].mxu0
        %v1647 = vadd.f32 0.0, %v1646
        %v1648 = vpop.f32.mrb[0].mxu0
        %1649 = vmatprep.mubr.bf16.mxu0 0
        %1650 = vmatmul.mubr.bf16.gmra.mrb[0].mxu0 %v1229
        %v1651 = vpop.f32.mrb[0].mxu0
        %v1652 = vadd.f32 0.0, %v1651
        %v1653 = vpop.f32.mrb[0].mxu0
        %v1654 = vpop.f32.mrb[0].mxu0
        %v1655 = vadd.f32 0.0, %v1654
        %v1656 = vpop.f32.mrb[0].mxu0
        %1657 = vmatprep.mubr.bf16.mxu0 0
        %1658 = vmatmul.mubr.bf16.gmra.mrb[0].mxu0 %v1232
        %v1659 = vpop.f32.mrb[0].mxu0
        %v1660 = vadd.f32 0.0, %v1659
        %v1661 = vpop.f32.mrb[0].mxu0
        %v1662 = vpop.f32.mrb[0].mxu0
        %v1663 = vadd.f32 0.0, %v1662
        %v1664 = vpop.f32.mrb[0].mxu0
        %1665 = vmatprep.mubr.bf16.mxu0 0
        %1666 = vmatmul.mubr.bf16.gmra.mrb[0].mxu0 %v1235
        %v1667 = vpop.f32.mrb[0].mxu0
        %v1668 = vadd.f32 0.0, %v1667
        %v1669 = vpop.f32.mrb[0].mxu0
        %v1670 = vpop.f32.mrb[0].mxu0
        %v1671 = vadd.f32 0.0, %v1670
        %v1672 = vpop.f32.mrb[0].mxu0
        %1673 = vmatprep.mubr.bf16.mxu0 0
        %1674 = vmatmul.mubr.bf16.gmra.mrb[0].mxu0 %v1238
        %v1675 = vpop.f32.mrb[0].mxu0
        %v1676 = vadd.f32 0.0, %v1675
        %v1677 = vpop.f32.mrb[0].mxu0
        %v1678 = vpop.f32.mrb[0].mxu0
        %v1679 = vadd.f32 0.0, %v1678
        %v1680 = vpop.f32.mrb[0].mxu0
        %1681 = vmatprep.mubr.bf16.mxu0 0
        %1682 = vmatmul.mubr.bf16.gmra.mrb[0].mxu0 %v1241
        %v1683 = vpop.f32.mrb[0].mxu0
        %v1684 = vadd.f32 0.0, %v1683
        %v1685 = vpop.f32.mrb[0].mxu0
        %v1686 = vpop.f32.mrb[0].mxu0
        %v1687 = vadd.f32 0.0, %v1686
        %v1688 = vpop.f32.mrb[0].mxu0
        %1689 = vmatprep.mubr.bf16.mxu0 0
        %1690 = vmatmul.mubr.bf16.gmra.mrb[0].mxu0 %v1244
        %v1691 = vpop.f32.mrb[0].mxu0
        %v1692 = vadd.f32 0.0, %v1691
        %v1693 = vpop.f32.mrb[0].mxu0
        %v1694 = vpop.f32.mrb[0].mxu0
        %v1695 = vadd.f32 0.0, %v1694
        %v1696 = vpop.f32.mrb[0].mxu0
        %1697 = vmatprep.mubr.bf16.mxu0 0
        %1698 = vmatmul.mubr.bf16.gmra.mrb[0].mxu0 %v1247
        %v1699 = vpop.f32.mrb[0].mxu0
        %v1700 = vadd.f32 0.0, %v1699
        %v1701 = vpop.f32.mrb[0].mxu0
        %v1702 = vpop.f32.mrb[0].mxu0
        %v1703 = vadd.f32 0.0, %v1702
        %v1704 = vpop.f32.mrb[0].mxu0
        %1705 = vmatprep.mubr.bf16.mxu0 0
        %1706 = vmatmul.mubr.bf16.gmra.mrb[0].mxu0 %v1250
        %v1707 = vpop.f32.mrb[0].mxu0
        %v1708 = vadd.f32 0.0, %v1707
        %v1709 = vpop.f32.mrb[0].mxu0
        %v1710 = vpop.f32.mrb[0].mxu0
        %v1711 = vadd.f32 0.0, %v1710
        %v1712 = vpop.f32.mrb[0].mxu0
        %1713 = vmatprep.mubr.bf16.mxu0 0
        %1714 = vmatmul.mubr.bf16.gmra.mrb[0].mxu0 %v1253
        %v1715 = vpop.f32.mrb[0].mxu0
        %v1716 = vadd.f32 0.0, %v1715
        %v1717 = vpop.f32.mrb[0].mxu0
        %v1718 = vpop.f32.mrb[0].mxu0
        %v1719 = vadd.f32 0.0, %v1718
        %v1720 = vpop.f32.mrb[0].mxu0
        %1721 = vmatprep.mubr.bf16.mxu0 0
        %1722 = vmatmul.mubr.bf16.gmra.mrb[0].mxu0 %v1256
        %v1723 = vpop.f32.mrb[0].mxu0
        %v1724 = vadd.f32 0.0, %v1723
        %v1725 = vpop.f32.mrb[0].mxu0
        %v1726 = vpop.f32.mrb[0].mxu0
        %v1727 = vadd.f32 0.0, %v1726
        %v1728 = vpop.f32.mrb[0].mxu0
        %1729 = vmatprep.mubr.bf16.mxu0 0
        %1730 = vmatmul.mubr.bf16.gmra.mrb[0].mxu0 %v1259
        %v1731 = vpop.f32.mrb[0].mxu0
        %v1732 = vadd.f32 0.0, %v1731
        %v1733 = vpop.f32.mrb[0].mxu0
        %v1734 = vpop.f32.mrb[0].mxu0
        %v1735 = vadd.f32 0.0, %v1734
        %v1736 = vpop.f32.mrb[0].mxu0
        %1737 = vmatprep.mubr.bf16.mxu0 0
        %1738 = vmatmul.mubr.bf16.gmra.mrb[0].mxu0 %v1262
        %v1739 = vpop.f32.mrb[0].mxu0
        %v1740 = vadd.f32 0.0, %v1739
        %v1741 = vpop.f32.mrb[0].mxu0
        %v1742 = vpop.f32.mrb[0].mxu0
        %v1743 = vadd.f32 0.0, %v1742
        %v1744 = vpop.f32.mrb[0].mxu0
        %1745 = vmatprep.mubr.bf16.mxu0 0
        %1746 = vmatmul.mubr.bf16.gmra.mrb[0].mxu0 %v1265
        %v1747 = vpop.f32.mrb[0].mxu0
        %v1748 = vadd.f32 0.0, %v1747
        %v1749 = vpop.f32.mrb[0].mxu0
        %v1750 = vpop.f32.mrb[0].mxu0
        %v1751 = vadd.f32 0.0, %v1750
        %v1752 = vpop.f32.mrb[0].mxu0
        %1753 = vmatprep.mubr.bf16.mxu0 0
        %1754 = vmatmul.mubr.bf16.gmra.mrb[0].mxu0 %v1268
        %v1755 = vpop.f32.mrb[0].mxu0
        %v1756 = vadd.f32 0.0, %v1755
        %v1757 = vpop.f32.mrb[0].mxu0
        %v1758 = vpop.f32.mrb[0].mxu0
        %v1759 = vadd.f32 0.0, %v1758
        %v1760 = vpop.f32.mrb[0].mxu0
        %1761 = vmatprep.mubr.bf16.mxu0 0
        %1762 = vmatmul.mubr.bf16.gmra.mrb[0].mxu0 %v1271
        %v1763 = vpop.f32.mrb[0].mxu0
        %v1764 = vadd.f32 0.0, %v1763
        %v1765 = vpop.f32.mrb[0].mxu0
        %v1766 = vpop.f32.mrb[0].mxu0
        %v1767 = vadd.f32 0.0, %v1766
        %v1768 = vpop.f32.mrb[0].mxu0
        %1769 = vdwg.mxu0
        %v1770 = vmax.f32 %v1308, %v1423
        %v1771 = vmax.f32 %v1311, %v1428
        %v1772 = vmax.f32 %v1316, %v1431
        %v1773 = vmax.f32 %v1319, %v1436
        %v1774 = vmax.f32 %v1324, %v1439
        %v1775 = vmax.f32 %v1327, %v1444
        %v1776 = vmax.f32 %v1332, %v1447
        %v1777 = vmax.f32 %v1335, %v1452
        %v1778 = vmax.f32 %v1340, %v1455
        %v1779 = vmax.f32 %v1343, %v1460
        %v1780 = vmax.f32 %v1348, %v1463
        %v1781 = vmax.f32 %v1351, %v1468
        %v1782 = vmax.f32 %v1356, %v1471
        %v1783 = vmax.f32 %v1359, %v1476
        %v1784 = vmax.f32 %v1364, %v1479
        %v1785 = vmax.f32 %v1367, %v1484
        %v1786 = vmax.f32 %v1372, %v1487
        %v1787 = vmax.f32 %v1375, %v1492
        %v1788 = vmax.f32 %v1380, %v1495
        %v1789 = vmax.f32 %v1383, %v1500
        %v1790 = vmax.f32 %v1388, %v1503
        %v1791 = vmax.f32 %v1391, %v1508
        %v1792 = vmax.f32 %v1396, %v1511
        %v1793 = vmax.f32 %v1399, %v1516
        %v1794 = vmax.f32 %v1404, %v1519
        %v1795 = vmax.f32 %v1407, %v1524
        %v1796 = vmax.f32 %v1412, %v1527
        %v1797 = vmax.f32 %v1415, %v1532
        %v1798 = vmax.f32 %v1420, %v1535
        %v1799 = vmax.f32 %v1540, %v1655
        %v1800 = vmax.f32 %v1543, %v1660
        %v1801 = vmax.f32 %v1548, %v1663
        %v1802 = vmax.f32 %v1551, %v1668
        %v1803 = vmax.f32 %v1556, %v1671
        %v1804 = vmax.f32 %v1559, %v1676
        %v1805 = vmax.f32 %v1564, %v1679
        %v1806 = vmax.f32 %v1567, %v1684
        %v1807 = vmax.f32 %v1572, %v1687
        %v1808 = vmax.f32 %v1575, %v1692
        %v1809 = vmax.f32 %v1580, %v1695
        %v1810 = vmax.f32 %v1583, %v1700
        %v1811 = vmax.f32 %v1588, %v1703
        %v1812 = vmax.f32 %v1591, %v1708
        %v1813 = vmax.f32 %v1596, %v1711
        %v1814 = vmax.f32 %v1599, %v1716
        %v1815 = vmax.f32 %v1604, %v1719
        %v1816 = vmax.f32 %v1607, %v1724
        %v1817 = vmax.f32 %v1612, %v1727
        %v1818 = vmax.f32 %v1615, %v1732
        %v1819 = vmax.f32 %v1620, %v1735
        %v1820 = vmax.f32 %v1623, %v1740
        %v1821 = vmax.f32 %v1628, %v1743
        %v1822 = vmax.f32 %v1631, %v1748
        %v1823 = vmax.f32 %v1636, %v1751
        %v1824 = vmax.f32 %v1639, %v1756
        %v1825 = vmax.f32 %v1644, %v1759
        %v1826 = vmax.f32 %v1647, %v1764
        %v1827 = vmax.f32 %v1652, %v1767
        %v1828 = vmax.f32 %v1770, %v1799
        %v1829 = vmax.f32 %v1771, %v1800
        %v1830 = vmax.f32 %v1772, %v1801
        %v1831 = vmax.f32 %v1773, %v1802
        %v1832 = vmax.f32 %v1774, %v1803
        %v1833 = vmax.f32 %v1775, %v1804
        %v1834 = vmax.f32 %v1776, %v1805
        %v1835 = vmax.f32 %v1777, %v1806
        %v1836 = vmax.f32 %v1778, %v1807
        %v1837 = vmax.f32 %v1779, %v1808
        %v1838 = vmax.f32 %v1780, %v1809
        %v1839 = vmax.f32 %v1781, %v1810
        %v1840 = vmax.f32 %v1782, %v1811
        %v1841 = vmax.f32 %v1783, %v1812
        %v1842 = vmax.f32 %v1784, %v1813
        %v1843 = vmax.f32 %v1785, %v1814
        %v1844 = vmax.f32 %v1786, %v1815
        %v1845 = vmax.f32 %v1787, %v1816
        %v1846 = vmax.f32 %v1788, %v1817
        %v1847 = vmax.f32 %v1789, %v1818
        %v1848 = vmax.f32 %v1790, %v1819
        %v1849 = vmax.f32 %v1791, %v1820
        %v1850 = vmax.f32 %v1792, %v1821
        %v1851 = vmax.f32 %v1793, %v1822
        %v1852 = vmax.f32 %v1794, %v1823
        %v1853 = vmax.f32 %v1795, %v1824
        %v1854 = vmax.f32 %v1796, %v1825
        %v1855 = vmax.f32 %v1797, %v1826
        %v1856 = vmax.f32 %v1798, %v1827
        %v1857 = vld [vmem:[%s2] sm:$0x1]
        %v1859 = vlaneseq
        %v1860 = vshrl.u32 %v1859, 7
        %v1861 = vsub.s32 0, %v1860
        %v1862 = vrot.slane %v1857, %v1861
        %v1864 = vadd.f32 %v1828, %v1862
        %v1865 = vadd.f32 %v1829, %v1862
        %v1866 = vadd.f32 %v1830, %v1862
        %v1867 = vadd.f32 %v1831, %v1862
        %v1868 = vadd.f32 %v1832, %v1862
        %v1869 = vadd.f32 %v1833, %v1862
        %v1870 = vadd.f32 %v1834, %v1862
        %v1871 = vadd.f32 %v1835, %v1862
        %v1872 = vadd.f32 %v1836, %v1862
        %v1873 = vadd.f32 %v1837, %v1862
        %v1874 = vadd.f32 %v1838, %v1862
        %v1875 = vadd.f32 %v1839, %v1862
        %v1876 = vadd.f32 %v1840, %v1862
        %v1877 = vadd.f32 %v1841, %v1862
        %v1878 = vadd.f32 %v1842, %v1862
        %v1879 = vadd.f32 %v1843, %v1862
        %v1880 = vadd.f32 %v1844, %v1862
        %v1881 = vadd.f32 %v1845, %v1862
        %v1882 = vadd.f32 %v1846, %v1862
        %v1883 = vadd.f32 %v1847, %v1862
        %v1884 = vadd.f32 %v1848, %v1862
        %v1885 = vadd.f32 %v1849, %v1862
        %v1886 = vadd.f32 %v1850, %v1862
        %v1887 = vadd.f32 %v1851, %v1862
        %v1888 = vadd.f32 %v1852, %v1862
        %v1889 = vadd.f32 %v1853, %v1862
        %v1890 = vadd.f32 %v1854, %v1862
        %v1891 = vadd.f32 %v1855, %v1862
        %v1892 = vadd.f32 %v1856, %v1862
        %v1893 = vmax.f32 %v1864, 0.0
        %v1894 = vmax.f32 %v1865, 0.0
        %v1895 = vmax.f32 %v1866, 0.0
        %v1896 = vmax.f32 %v1867, 0.0
        %v1897 = vmax.f32 %v1868, 0.0
        %v1898 = vmax.f32 %v1869, 0.0
        %v1899 = vmax.f32 %v1870, 0.0
        %v1900 = vmax.f32 %v1871, 0.0
        %v1901 = vmax.f32 %v1872, 0.0
        %v1902 = vmax.f32 %v1873, 0.0
        %v1903 = vmax.f32 %v1874, 0.0
        %v1904 = vmax.f32 %v1875, 0.0
        %v1905 = vmax.f32 %v1876, 0.0
        %v1906 = vmax.f32 %v1877, 0.0
        %v1907 = vmax.f32 %v1878, 0.0
        %v1908 = vmax.f32 %v1879, 0.0
        %v1909 = vmax.f32 %v1880, 0.0
        %v1910 = vmax.f32 %v1881, 0.0
        %v1911 = vmax.f32 %v1882, 0.0
        %v1912 = vmax.f32 %v1883, 0.0
        %v1913 = vmax.f32 %v1884, 0.0
        %v1914 = vmax.f32 %v1885, 0.0
        %v1915 = vmax.f32 %v1886, 0.0
        %v1916 = vmax.f32 %v1887, 0.0
        %v1917 = vmax.f32 %v1888, 0.0
        %v1918 = vmax.f32 %v1889, 0.0
        %v1919 = vmax.f32 %v1890, 0.0
        %v1920 = vmax.f32 %v1891, 0.0
        %v1921 = vmax.f32 %v1892, 0.0
        %v1922 = vpack.c.bf16 %v1894, %v1893
        %v1923 = vpack.c.bf16 %v1896, %v1895
        %v1924 = vpack.c.bf16 %v1898, %v1897
        %v1925 = vpack.c.bf16 %v1900, %v1899
        %v1926 = vpack.c.bf16 %v1902, %v1901
        %v1927 = vpack.c.bf16 %v1904, %v1903
        %v1928 = vpack.c.bf16 %v1906, %v1905
        %v1929 = vpack.c.bf16 %v1908, %v1907
        %v1930 = vpack.c.bf16 %v1910, %v1909
        %v1931 = vpack.c.bf16 %v1912, %v1911
        %v1932 = vpack.c.bf16 %v1914, %v1913
        %v1933 = vpack.c.bf16 %v1916, %v1915
        %v1934 = vpack.c.bf16 %v1918, %v1917
        %v1935 = vpack.c.bf16 %v1920, %v1919
        %v1936 = vpack.c.bf16 %v1921, %v1921
        %v1952 = vunpack.c.l.b16 %v1922
        %v1953 = vunpack.c.h.b16 %v1922
        %v1954 = vunpack.c.l.b16 %v1923
        %v1955 = vunpack.c.h.b16 %v1923
        %v1956 = vunpack.c.l.b16 %v1924
        %v1957 = vunpack.c.h.b16 %v1924
        %v1958 = vunpack.c.l.b16 %v1925
        %v1959 = vunpack.c.h.b16 %v1925
        %v1960 = vunpack.c.l.b16 %v1926
        %v1961 = vunpack.c.h.b16 %v1926
        %v1962 = vunpack.c.l.b16 %v1927
        %v1963 = vunpack.c.h.b16 %v1927
        %v1964 = vunpack.c.l.b16 %v1928
        %v1965 = vunpack.c.h.b16 %v1928
        %v1966 = vunpack.c.l.b16 %v1929
        %v1967 = vunpack.c.h.b16 %v1929
        %v1968 = vunpack.c.l.b16 %v1930
        %v1969 = vunpack.c.h.b16 %v1930
        %v1970 = vunpack.c.l.b16 %v1931
        %v1971 = vunpack.c.h.b16 %v1931
        %v1972 = vunpack.c.l.b16 %v1932
        %v1973 = vunpack.c.h.b16 %v1932
        %v1974 = vunpack.c.l.b16 %v1933
        %v1975 = vunpack.c.h.b16 %v1933
        %v1976 = vunpack.c.l.b16 %v1934
        %v1977 = vunpack.c.h.b16 %v1934
        %v1978 = vunpack.c.l.b16 %v1935
        %v1979 = vunpack.c.h.b16 %v1935
        %v1980 = vunpack.c.l.b16 %v1936
        %v1981 = vpack.c.b16 %v1952, %v1952
        %v1982 = vpack.c.b16 %v1953, %v1953
        %v1983 = vpack.c.b16 %v1954, %v1954
        %v1984 = vpack.c.b16 %v1955, %v1955
        %v1985 = vpack.c.b16 %v1956, %v1956
        %v1986 = vpack.c.b16 %v1957, %v1957
        %v1987 = vpack.c.b16 %v1958, %v1958
        %v1988 = vpack.c.b16 %v1959, %v1959
        %v1989 = vpack.c.b16 %v1960, %v1960
        %v1990 = vpack.c.b16 %v1961, %v1961
        %v1991 = vpack.c.b16 %v1962, %v1962
        %v1992 = vpack.c.b16 %v1963, %v1963
        %v1993 = vpack.c.b16 %v1964, %v1964
        %v1994 = vpack.c.b16 %v1965, %v1965
        %v1995 = vpack.c.b16 %v1966, %v1966
        %v1996 = vpack.c.b16 %v1967, %v1967
        %v1997 = vpack.c.b16 %v1968, %v1968
        %v1998 = vpack.c.b16 %v1969, %v1969
        %v1999 = vpack.c.b16 %v1970, %v1970
        %v2000 = vpack.c.b16 %v1971, %v1971
        %v2001 = vpack.c.b16 %v1972, %v1972
        %v2002 = vpack.c.b16 %v1973, %v1973
        %v2003 = vpack.c.b16 %v1974, %v1974
        %v2004 = vpack.c.b16 %v1975, %v1975
        %v2005 = vpack.c.b16 %v1976, %v1976
        %v2006 = vpack.c.b16 %v1977, %v1977
        %v2007 = vpack.c.b16 %v1978, %v1978
        %v2008 = vpack.c.b16 %v1979, %v1979
        %v2009 = vpack.c.b16 %v1980, %v1980
        %vm2039 = vcmask 519168
        %2040 = vst.msk [vmem:[%s673] sm:$0xf] %vm2039, %v1981
        %2041 = vst.msk [vmem:[%s673 + $0x4] sm:$0xf] %vm2039, %v1982
        %2042 = vst.msk [vmem:[%s673 + $0x8] sm:$0xf] %vm2039, %v1983
        %2043 = vst.msk [vmem:[%s673 + $0xc] sm:$0xf] %vm2039, %v1984
        %2044 = vst.msk [vmem:[%s673 + $0x10] sm:$0xf] %vm2039, %v1985
        %2045 = vst.msk [vmem:[%s673 + $0x14] sm:$0xf] %vm2039, %v1986
        %2046 = vst.msk [vmem:[%s673 + $0x18] sm:$0xf] %vm2039, %v1987
        %2047 = vst.msk [vmem:[%s673 + $0x1c] sm:$0xf] %vm2039, %v1988
        %2048 = vst.msk [vmem:[%s673 + $0x20] sm:$0xf] %vm2039, %v1989
        %2049 = vst.msk [vmem:[%s673 + $0x24] sm:$0xf] %vm2039, %v1990
        %2050 = vst.msk [vmem:[%s673 + $0x28] sm:$0xf] %vm2039, %v1991
        %2051 = vst.msk [vmem:[%s673 + $0x2c] sm:$0xf] %vm2039, %v1992
        %2052 = vst.msk [vmem:[%s673 + $0x30] sm:$0xf] %vm2039, %v1993
        %2053 = vst.msk [vmem:[%s673 + $0x34] sm:$0xf] %vm2039, %v1994
        %2054 = vst.msk [vmem:[%s673 + $0x38] sm:$0xf] %vm2039, %v1995
        %2055 = vst.msk [vmem:[%s673 + $0x3c] sm:$0xf] %vm2039, %v1996
        %2056 = vst.msk [vmem:[%s673 + $0x40] sm:$0xf] %vm2039, %v1997
        %2057 = vst.msk [vmem:[%s673 + $0x44] sm:$0xf] %vm2039, %v1998
        %2058 = vst.msk [vmem:[%s673 + $0x48] sm:$0xf] %vm2039, %v1999
        %2059 = vst.msk [vmem:[%s673 + $0x4c] sm:$0xf] %vm2039, %v2000
        %2060 = vst.msk [vmem:[%s673 + $0x50] sm:$0xf] %vm2039, %v2001
        %2061 = vst.msk [vmem:[%s673 + $0x54] sm:$0xf] %vm2039, %v2002
        %2062 = vst.msk [vmem:[%s673 + $0x58] sm:$0xf] %vm2039, %v2003
        %2063 = vst.msk [vmem:[%s673 + $0x5c] sm:$0xf] %vm2039, %v2004
        %2064 = vst.msk [vmem:[%s673 + $0x60] sm:$0xf] %vm2039, %v2005
        %2065 = vst.msk [vmem:[%s673 + $0x64] sm:$0xf] %vm2039, %v2006
        %2066 = vst.msk [vmem:[%s673 + $0x68] sm:$0xf] %vm2039, %v2007
        %2067 = vst.msk [vmem:[%s673 + $0x6c] sm:$0xf] %vm2039, %v2008
        %2068 = vst.msk [vmem:[%s673 + $0x70] sm:$0xf] %vm2039, %v2009
        %s2069 = smul.u32 29, %s14
        %p2070 = scmp.lt.s32.totalorder %s2069, 57
        %s2071 = scalar_select %p2070, %s2069, 57
        %s2072 = smul.addr %s2071, 4
        %s2073 = scalar_lea.vmem %s3, %s2072
        // Predicated region
        $region74: #{net_forward.3} parent=68 // pred_check
          %p2074 = pneg %p100
        $region75: #{net_forward.3} parent=68 // pred_check_branch
          %2076 = sbr.rel (%p2074) target = $region77
        $region76: #{net_forward.3} parent=68 // pred_region
          %s2077 = smul.u32 29, %s14
        $region77: #{net_forward.3} parent=68 // pred_fallthru
          _
      $region69: #{net_forward.3} parent=5 // pred_fallthru
        _
      %p2078 = scmp.le.s32.totalorder 2, %s9
      // Predicated region
      $region78: #{net_forward.3} parent=5 // pred_check
        %p2079 = pneg %p2078
      $region79: #{net_forward.3} parent=5 // pred_check_branch
        %2081 = sbr.rel (%p2079) target = $region81
      $region80: #{net_forward.3} parent=5 // pred_region
        %s2082 = ssub.s32 %s9, 2
        // Predicated region
        $region82: #{net_forward.3} parent=80 // pred_check
          %p2083 = pneg %p106
        $region83: #{net_forward.3} parent=80 // pred_check_branch
          %2085 = sbr.rel (%p2083) target = $region85
        $region84: #{net_forward.3} parent=80 // pred_region
          %s2086 = smul.u32 29, %s15
          %p2087 = scmp.lt.s32.totalorder %s2086, 57
          %s2088 = scalar_select %p2087, %s2086, 57
          %s2089 = smul.addr %s2088, 4
          %s2090 = scalar_lea.vmem %s3, %s2089
        $region85: #{net_forward.3} parent=80 // pred_fallthru
          _
      $region81: #{net_forward.3} parent=5 // pred_fallthru
        _
    $region6: #{net_forward.3} parent=1 // loop_footer
      %s13 = sadd.s32 1, %s9
    $region7: #{net_forward.3} parent=1 // loop_footer_branch
      %8 = sbr.rel target = $region3
    $region8: #{net_forward.3} parent=1 // loop_exit
      _

// kernel: net_forward.4
$region0: #{net_forward.4}
  #allocation0 [shape = 'u32[]', space=smem, size = 0x4, offset = 0x4, fixed_abs, tag = 'smem constant byte address 0x4 - core index']
  #allocation1 [shape = 'u32[144,128]{1,0:T(1,128)}', space=vmem, size = 0x12000, scoped, tag = 'internal scratch']
  %s0 = inlined_call_operand.vmem [shape: bf16[4,80,576], index: 0, kind: input, shape index: {}]
  %s1 = inlined_call_operand.vmem [shape: bf16[576,48], index: 1, kind: input, shape index: {}]
  %s2 = inlined_call_operand.vmem [shape: f32[1,48], index: 2, kind: input, shape index: {}]
  %s3 = inlined_call_operand.vmem [shape: bf16[80,48], index: 3, kind: output, shape index: {}]
  %s4 = sld [smem:[#allocation0]]
  $region71: #{net_forward.4} parent=0
    _
  %s6 = ssub.s32 1, %s4
  %s7 = scalar_select 0, %s6, %s4
  $region1: #{net_forward.4} parent=0
    #allocation2 [shape = 'u8[409600]{0}', space=vmem, size = 0x64000, scoped, tag = 'input window, operand 0']
    loop: start=0, step=1, limit=4
    $region2: #{net_forward.4} parent=1 // loop_pre_header
      _
    $region3: #{net_forward.4} parent=1 // loop_header
      %s9 = sphi 0, %s13
      %p10 = scmp.ge.s32.totalorder %s9, 4
      %s19 = sphi 0, %s21
      %s22 = sphi 0, %s19
      %s23 = sphi 0, %s22
      %s39 = sphi 0, %s23
      %s43 = sphi 0, %s43
      %s45 = sphi 0, %s43
      %s46 = sphi 0, %s45
      %s60 = sphi 0, %s46
      %s64 = sphi 0, %s64
      %s66 = sphi 0, %s64
      %s67 = sphi 0, %s66
      %s81 = sphi 0, %s67
      %s87 = sphi 0, %s89
      %s90 = sphi 0, %s87
      %s91 = sphi 0, %s90
      %s107 = sphi 0, %s91
    $region4: #{net_forward.4} parent=1 // loop_header_branch
      %12 = sbr.rel (%p10) target = $region8
    $region5: #{net_forward.4} parent=1 // loop_body
      %s14 = ssub.s32 %s9, 1
      %s15 = ssub.s32 %s9, 2
      %s16 = sadd.s32 %s9, 1
      %s17 = ssub.s32 %s9, %s16
      %p18 = scmp.eq.s32.totalorder %s17, 0
      %s20 = sadd.s32 %s19, 1
      %s21 = scalar_select %p18, %s19, %s20
      %p24 = pneg %p18
      %p25 = scmp.eq.s32.totalorder %s9, 1
      %p26 = por %p24, %p25
      %p27 = scmp.ne.s32.totalorder %s19, %s22
      %p28 = scmp.eq.s32.totalorder %s9, 0
      %p29 = por %p27, %p28
      %p30 = scmp.ne.s32.totalorder %s19, %s22
      %p31 = scmp.eq.s32.totalorder %s14, 1
      %p32 = por %p30, %p31
      %p33 = scmp.ne.s32.totalorder %s22, %s23
      %p34 = scmp.eq.s32.totalorder %s14, 0
      %p35 = por %p33, %p34
      %p36 = scmp.ne.s32.totalorder %s22, %s23
      %p37 = scmp.eq.s32.totalorder %s15, 1
      %p38 = por %p36, %p37
      %p40 = scmp.ne.s32.totalorder %s23, %s39
      %p41 = scmp.eq.s32.totalorder %s15, 0
      %p42 = por %p40, %p41
      %s44 = sadd.s32 %s43, 1
      %p47 = scmp.eq.s32.totalorder %s9, 1
      %p48 = scmp.ne.s32.totalorder %s43, %s45
      %p49 = scmp.eq.s32.totalorder %s9, 0
      %p50 = por %p48, %p49
      %p51 = scmp.ne.s32.totalorder %s43, %s45
      %p52 = scmp.eq.s32.totalorder %s14, 1
      %p53 = por %p51, %p52
      %p54 = scmp.ne.s32.totalorder %s45, %s46
      %p55 = scmp.eq.s32.totalorder %s14, 0
      %p56 = por %p54, %p55
      %p57 = scmp.ne.s32.totalorder %s45, %s46
      %p58 = scmp.eq.s32.totalorder %s15, 1
      %p59 = por %p57, %p58
      %p61 = scmp.ne.s32.totalorder %s46, %s60
      %p62 = scmp.eq.s32.totalorder %s15, 0
      %p63 = por %p61, %p62
      %s65 = sadd.s32 %s64, 1
      %p68 = scmp.eq.s32.totalorder %s9, 1
      %p69 = scmp.ne.s32.totalorder %s64, %s66
      %p70 = scmp.eq.s32.totalorder %s9, 0
      %p71 = por %p69, %p70
      %p72 = scmp.ne.s32.totalorder %s64, %s66
      %p73 = scmp.eq.s32.totalorder %s14, 1
      %p74 = por %p72, %p73
      %p75 = scmp.ne.s32.totalorder %s66, %s67
      %p76 = scmp.eq.s32.totalorder %s14, 0
      %p77 = por %p75, %p76
      %p78 = scmp.ne.s32.totalorder %s66, %s67
      %p79 = scmp.eq.s32.totalorder %s15, 1
      %p80 = por %p78, %p79
      %p82 = scmp.ne.s32.totalorder %s67, %s81
      %p83 = scmp.eq.s32.totalorder %s15, 0
      %p84 = por %p82, %p83
      %s85 = ssub.s32 %s9, %s16
      %p86 = scmp.eq.s32.totalorder %s85, 0
      %s88 = sadd.s32 %s87, 1
      %s89 = scalar_select %p86, %s87, %s88
      %p92 = pneg %p86
      %p93 = scmp.eq.s32.totalorder %s9, 1
      %p94 = por %p92, %p93
      %p95 = scmp.ne.s32.totalorder %s87, %s90
      %p96 = scmp.eq.s32.totalorder %s9, 0
      %p97 = por %p95, %p96
      %p98 = scmp.ne.s32.totalorder %s87, %s90
      %p99 = scmp.eq.s32.totalorder %s14, 1
      %p100 = por %p98, %p99
      %p101 = scmp.ne.s32.totalorder %s90, %s91
      %p102 = scmp.eq.s32.totalorder %s14, 0
      %p103 = por %p101, %p102
      %p104 = scmp.ne.s32.totalorder %s90, %s91
      %p105 = scmp.eq.s32.totalorder %s15, 1
      %p106 = por %p104, %p105
      %p108 = scmp.ne.s32.totalorder %s91, %s107
      %p109 = scmp.eq.s32.totalorder %s15, 0
      %p110 = por %p108, %p109
      %p111 = scmp.le.s32.totalorder 1, %s9
      %p112 = scmp.lt.s32.totalorder %s9, 3
      %p113 = pnand %p111, %p112
      %p114 = pneg %p113
      // Predicated region
      $region9: #{net_forward.4} parent=5 // pred_check
        _
      $region10: #{net_forward.4} parent=5 // pred_check_branch
        %116 = sbr.rel (%p113) target = $region12
      $region11: #{net_forward.4} parent=5 // pred_region
        %s117 = ssub.s32 %s9, 1
        // Predicated region
        $region13: #{net_forward.4} parent=11 // pred_check
          %p118 = pneg %p56
        $region14: #{net_forward.4} parent=11 // pred_check_branch
          %120 = sbr.rel (%p118) target = $region16
        $region15: #{net_forward.4} parent=11 // pred_region
          _
        $region16: #{net_forward.4} parent=11 // pred_fallthru
          _
        // Predicated region
        $region17: #{net_forward.4} parent=11 // pred_check
          %p121 = pneg %p77
        $region18: #{net_forward.4} parent=11 // pred_check_branch
          %123 = sbr.rel (%p121) target = $region20
        $region19: #{net_forward.4} parent=11 // pred_region
          _
        $region20: #{net_forward.4} parent=11 // pred_fallthru
          _
      $region12: #{net_forward.4} parent=5 // pred_fallthru
        _
      %p124 = scmp.lt.s32.totalorder %s9, 2
      // Predicated region
      $region21: #{net_forward.4} parent=5 // pred_check
        %p125 = pneg %p124
      $region22: #{net_forward.4} parent=5 // pred_check_branch
        %127 = sbr.rel (%p125) target = $region24
      $region23: #{net_forward.4} parent=5 // pred_region
        // Predicated region
        $region25: #{net_forward.4} parent=23 // pred_check
          %p128 = pneg %p29
        $region26: #{net_forward.4} parent=23 // pred_check_branch
          %130 = sbr.rel (%p128) target = $region28
        $region27: #{net_forward.4} parent=23 // pred_region
          %s131 = sand.u32 %s19, 1
          %s132 = sand.u32 %s19, 1
          %s133 = smul.addr %s132, 400
          %s134 = scalar_lea.vmem [#allocation2], %s133
          %s135 = smul.u32 5, %s9
          %s136 = smul.addr %s135, 5
          %s137 = smul.addr %s136, 4
          %s138 = scalar_lea.vmem %s0, %s137
          // Predicated region
          $region29: #{net_forward.4} parent=27 // pred_check
            _
          $region30: #{net_forward.4} parent=27 // pred_check_branch
            %140 = sbr.rel (0) target = $region32
          $region31: #{net_forward.4} parent=27 // pred_region
            // Predicated region
            $region33: #{net_forward.4} parent=31 // pred_check
              _
            $region34: #{net_forward.4} parent=31 // pred_check_branch
              %142 = sbr.rel (0) target = $region36
            $region35: #{net_forward.4} parent=31 // pred_region
              %s143 = scalar_lea.vmem %s138, 16
              %s144 = scalar_lea.vmem %s134, 16 [#allocation2]
              loop: start=0, step=1, limit=1
              $region37: #{net_forward.4} parent=35 // loop_pre_header
                _
              $region38: #{net_forward.4} parent=35 // loop_header
                %s146 = sphi 0, %s150
                %p147 = scmp.ge.s32.totalorder %s146, 1
                %s151 = sphi %s138, %s138
                %s152 = sphi %s134, %s134
              $region39: #{net_forward.4} parent=35 // loop_header_branch
                %149 = sbr.rel (%p147) target = $region43
              $region40: #{net_forward.4} parent=35 // loop_body
                %v153 = vld [vmem:[%s151] sm:$0xff]
                %154 = vst [vmem:[%s152] sm:$0xff] %v153
                %v155 = vld [vmem:[%s151 + $0x8] sm:$0xff]
                %156 = vst [vmem:[%s152 + $0x8] sm:$0xff] %v155
                %v157 = vld [vmem:[%s151 + $0x14] sm:$0xff]
                %158 = vst [vmem:[%s152 + $0x14] sm:$0xff] %v157
                %v159 = vld [vmem:[%s151 + $0x1c] sm:$0xff]
                %160 = vst [vmem:[%s152 + $0x1c] sm:$0xff] %v159
                %v161 = vld [vmem:[%s151 + $0x28] sm:$0xff]
                %162 = vst [vmem:[%s152 + $0x28] sm:$0xff] %v161
                %v163 = vld [vmem:[%s151 + $0x30] sm:$0xff]
                %164 = vst [vmem:[%s152 + $0x30] sm:$0xff] %v163
                %v165 = vld [vmem:[%s151 + $0x3c] sm:$0xff]
                %166 = vst [vmem:[%s152 + $0x3c] sm:$0xff] %v165
                %v167 = vld [vmem:[%s151 + $0x44] sm:$0xff]
                %168 = vst [vmem:[%s152 + $0x44] sm:$0xff] %v167
                %v169 = vld [vmem:[%s151 + $0x50] sm:$0xff]
                %170 = vst [vmem:[%s152 + $0x50] sm:$0xff] %v169
                %v171 = vld [vmem:[%s151 + $0x58] sm:$0xff]
                %172 = vst [vmem:[%s152 + $0x58] sm:$0xff] %v171
                %v173 = vld [vmem:[%s151 + $0xc8] sm:$0xff]
                %174 = vst [vmem:[%s152 + $0x64] sm:$0xff] %v173
                %v175 = vld [vmem:[%s151 + $0xd0] sm:$0xff]
                %176 = vst [vmem:[%s152 + $0x6c] sm:$0xff] %v175
                %v177 = vld [vmem:[%s151 + $0xdc] sm:$0xff]
                %178 = vst [vmem:[%s152 + $0x78] sm:$0xff] %v177
                %v179 = vld [vmem:[%s151 + $0xe4] sm:$0xff]
                %180 = vst [vmem:[%s152 + $0x80] sm:$0xff] %v179
                %v181 = vld [vmem:[%s151 + $0xf0] sm:$0xff]
                %182 = vst [vmem:[%s152 + $0x8c] sm:$0xff] %v181
                %v183 = vld [vmem:[%s151 + $0xf8] sm:$0xff]
                %184 = vst [vmem:[%s152 + $0x94] sm:$0xff] %v183
                %v185 = vld [vmem:[%s151 + $0x104] sm:$0xff]
                %186 = vst [vmem:[%s152 + $0xa0] sm:$0xff] %v185
                %v187 = vld [vmem:[%s151 + $0x10c] sm:$0xff]
                %188 = vst [vmem:[%s152 + $0xa8] sm:$0xff] %v187
                %v189 = vld [vmem:[%s151 + $0x118] sm:$0xff]
                %190 = vst [vmem:[%s152 + $0xb4] sm:$0xff] %v189
                %v191 = vld [vmem:[%s151 + $0x120] sm:$0xff]
                %192 = vst [vmem:[%s152 + $0xbc] sm:$0xff] %v191
                %v193 = vld [vmem:[%s151 + $0x190] sm:$0xff]
                %194 = vst [vmem:[%s152 + $0xc8] sm:$0xff] %v193
                %v195 = vld [vmem:[%s151 + $0x198] sm:$0xff]
                %196 = vst [vmem:[%s152 + $0xd0] sm:$0xff] %v195
                %v197 = vld [vmem:[%s151 + $0x1a4] sm:$0xff]
                %198 = vst [vmem:[%s152 + $0xdc] sm:$0xff] %v197
                %v199 = vld [vmem:[%s151 + $0x1ac] sm:$0xff]
                %200 = vst [vmem:[%s152 + $0xe4] sm:$0xff] %v199
                %v201 = vld [vmem:[%s151 + $0x1b8] sm:$0xff]
                %202 = vst [vmem:[%s152 + $0xf0] sm:$0xff] %v201
                %v203 = vld [vmem:[%s151 + $0x1c0] sm:$0xff]
                %204 = vst [vmem:[%s152 + $0xf8] sm:$0xff] %v203
                %v205 = vld [vmem:[%s151 + $0x1cc] sm:$0xff]
                %206 = vst [vmem:[%s152 + $0x104] sm:$0xff] %v205
                %v207 = vld [vmem:[%s151 + $0x1d4] sm:$0xff]
                %208 = vst [vmem:[%s152 + $0x10c] sm:$0xff] %v207
                %v209 = vld [vmem:[%s151 + $0x1e0] sm:$0xff]
                %210 = vst [vmem:[%s152 + $0x118] sm:$0xff] %v209
                %v211 = vld [vmem:[%s151 + $0x1e8] sm:$0xff]
                %212 = vst [vmem:[%s152 + $0x120] sm:$0xff] %v211
                %v213 = vld [vmem:[%s151 + $0x258] sm:$0xff]
                %214 = vst [vmem:[%s152 + $0x12c] sm:$0xff] %v213
                %v215 = vld [vmem:[%s151 + $0x260] sm:$0xff]
                %216 = vst [vmem:[%s152 + $0x134] sm:$0xff] %v215
                %v217 = vld [vmem:[%s151 + $0x26c] sm:$0xff]
                %218 = vst [vmem:[%s152 + $0x140] sm:$0xff] %v217
                %v219 = vld [vmem:[%s151 + $0x274] sm:$0xff]
                %220 = vst [vmem:[%s152 + $0x148] sm:$0xff] %v219
                %v221 = vld [vmem:[%s151 + $0x280] sm:$0xff]
                %222 = vst [vmem:[%s152 + $0x154] sm:$0xff] %v221
                %v223 = vld [vmem:[%s151 + $0x288] sm:$0xff]
                %224 = vst [vmem:[%s152 + $0x15c] sm:$0xff] %v223
                %v225 = vld [vmem:[%s151 + $0x294] sm:$0xff]
                %226 = vst [vmem:[%s152 + $0x168] sm:$0xff] %v225
                %v227 = vld [vmem:[%s151 + $0x29c] sm:$0xff]
                %228 = vst [vmem:[%s152 + $0x170] sm:$0xff] %v227
                %v229 = vld [vmem:[%s151 + $0x2a8] sm:$0xff]
                %230 = vst [vmem:[%s152 + $0x17c] sm:$0xff] %v229
                %v231 = vld [vmem:[%s151 + $0x2b0] sm:$0xff]
                %232 = vst [vmem:[%s152 + $0x184] sm:$0xff] %v231
              $region41: #{net_forward.4} parent=35 // loop_footer
                %s150 = sadd.s32 1, %s146
              $region42: #{net_forward.4} parent=35 // loop_footer_branch
                %145 = sbr.rel target = $region38
              $region43: #{net_forward.4} parent=35 // loop_exit
                _
              loop: start=0, step=1, limit=1
              $region44: #{net_forward.4} parent=35 // loop_pre_header
                _
              $region45: #{net_forward.4} parent=35 // loop_header
                %s235 = sphi 0, %s239
                %p236 = scmp.ge.s32.totalorder %s235, 1
                %s240 = sphi %s143, %s143
                %s241 = sphi %s144, %s144
              $region46: #{net_forward.4} parent=35 // loop_header_branch
                %238 = sbr.rel (%p236) target = $region50
              $region47: #{net_forward.4} parent=35 // loop_body
                %v242 = vld [vmem:[%s240] sm:$0xf]
                %243 = vst [vmem:[%s241] sm:$0xf] %v242
                %v244 = vld [vmem:[%s240 + $0x14] sm:$0xf]
                %245 = vst [vmem:[%s241 + $0x14] sm:$0xf] %v244
                %v246 = vld [vmem:[%s240 + $0x28] sm:$0xf]
                %247 = vst [vmem:[%s241 + $0x28] sm:$0xf] %v246
                %v248 = vld [vmem:[%s240 + $0x3c] sm:$0xf]
                %249 = vst [vmem:[%s241 + $0x3c] sm:$0xf] %v248
                %v250 = vld [vmem:[%s240 + $0x50] sm:$0xf]
                %251 = vst [vmem:[%s241 + $0x50] sm:$0xf] %v250
                %v252 = vld [vmem:[%s240 + $0xc8] sm:$0xf]
                %253 = vst [vmem:[%s241 + $0x64] sm:$0xf] %v252
                %v254 = vld [vmem:[%s240 + $0xdc] sm:$0xf]
                %255 = vst [vmem:[%s241 + $0x78] sm:$0xf] %v254
                %v256 = vld [vmem:[%s240 + $0xf0] sm:$0xf]
                %257 = vst [vmem:[%s241 + $0x8c] sm:$0xf] %v256
                %v258 = vld [vmem:[%s240 + $0x104] sm:$0xf]
                %259 = vst [vmem:[%s241 + $0xa0] sm:$0xf] %v258
                %v260 = vld [vmem:[%s240 + $0x118] sm:$0xf]
                %261 = vst [vmem:[%s241 + $0xb4] sm:$0xf] %v260
                %v262 = vld [vmem:[%s240 + $0x190] sm:$0xf]
                %263 = vst [vmem:[%s241 + $0xc8] sm:$0xf] %v262
                %v264 = vld [vmem:[%s240 + $0x1a4] sm:$0xf]
                %265 = vst [vmem:[%s241 + $0xdc] sm:$0xf] %v264
                %v266 = vld [vmem:[%s240 + $0x1b8] sm:$0xf]
                %267 = vst [vmem:[%s241 + $0xf0] sm:$0xf] %v266
                %v268 = vld [vmem:[%s240 + $0x1cc] sm:$0xf]
                %269 = vst [vmem:[%s241 + $0x104] sm:$0xf] %v268
                %v270 = vld [vmem:[%s240 + $0x1e0] sm:$0xf]
                %271 = vst [vmem:[%s241 + $0x118] sm:$0xf] %v270
                %v272 = vld [vmem:[%s240 + $0x258] sm:$0xf]
                %273 = vst [vmem:[%s241 + $0x12c] sm:$0xf] %v272
                %v274 = vld [vmem:[%s240 + $0x26c] sm:$0xf]
                %275 = vst [vmem:[%s241 + $0x140] sm:$0xf] %v274
                %v276 = vld [vmem:[%s240 + $0x280] sm:$0xf]
                %277 = vst [vmem:[%s241 + $0x154] sm:$0xf] %v276
                %v278 = vld [vmem:[%s240 + $0x294] sm:$0xf]
                %279 = vst [vmem:[%s241 + $0x168] sm:$0xf] %v278
                %v280 = vld [vmem:[%s240 + $0x2a8] sm:$0xf]
                %281 = vst [vmem:[%s241 + $0x17c] sm:$0xf] %v280
              $region48: #{net_forward.4} parent=35 // loop_footer
                %s239 = sadd.s32 1, %s235
              $region49: #{net_forward.4} parent=35 // loop_footer_branch
                %234 = sbr.rel target = $region45
              $region50: #{net_forward.4} parent=35 // loop_exit
                _
            $region36: #{net_forward.4} parent=31 // pred_fallthru
              _
          $region32: #{net_forward.4} parent=27 // pred_fallthru
            _
          %282 = vnop
        $region28: #{net_forward.4} parent=23 // pred_fallthru
          _
      $region24: #{net_forward.4} parent=5 // pred_fallthru
        _
      %p283 = scmp.le.s32.totalorder 1, %s9
      %p284 = scmp.lt.s32.totalorder %s9, 3
      %p285 = pnand %p283, %p284
      %p286 = pneg %p285
      // Predicated region
      $region51: #{net_forward.4} parent=5 // pred_check
        _
      $region52: #{net_forward.4} parent=5 // pred_check_branch
        %288 = sbr.rel (%p285) target = $region54
      $region53: #{net_forward.4} parent=5 // pred_region
        %s289 = ssub.s32 %s9, 1
        %s290 = sand.u32 %s22, 1
        %s291 = sand.u32 %s22, 1
        %s292 = smul.addr %s291, 400
        %s293 = scalar_lea.vmem [#allocation2], %s292
        // Predicated region
        $region55: #{net_forward.4} parent=53 // pred_check
          %p294 = pneg %p35
        $region56: #{net_forward.4} parent=53 // pred_check_branch
          %296 = sbr.rel (%p294) target = $region58
        $region57: #{net_forward.4} parent=53 // pred_region
          _
        $region58: #{net_forward.4} parent=53 // pred_fallthru
          _
        %s297 = sand.u32 %s22, 1
        %s298 = sand.u32 %s22, 1
        %s299 = smul.addr %s298, 400
        %s300 = scalar_lea.vmem [#allocation2], %s299
        %p301 = pneg %p35
        %p302 = pneg %p32
        %p303 = pneg %p56
        %p304 = pneg %p53
        %p305 = pneg %p77
        %p306 = pneg %p74
        %p307 = pneg %p103
        %p308 = pneg %p100
        %s309 = smul.u32 5, %s14
        %p310 = scmp.lt.s32.totalorder %s309, 9
        %s311 = scalar_select %p310, %s309, 9
        %s312 = smul.addr %s311, 4
        %s313 = scalar_lea.vmem %s3, %s312
        %s314 = smul.u32 5, %s14
        %s315 = smul.u32 5, %s14
        %p316 = scmp.lt.s32.totalorder %s315, 9
        %s317 = scalar_select %p316, %s315, 9
        %s318 = smul.addr %s317, 4
        %s319 = scalar_lea.vmem %s3, %s318
        %s320 = smul.u32 5, %s14
        %v322 = vld [vmem:[%s293] sm:$0xff]
        %v323 = vld [vmem:[%s293 + $0x8] sm:$0xff]
        %v324 = vld [vmem:[%s293 + $0x10] sm:$0xf]
        %v325 = vld [vmem:[%s293 + $0x14] sm:$0xff]
        %v326 = vld [vmem:[%s293 + $0x1c] sm:$0xff]
        %v327 = vld [vmem:[%s293 + $0x24] sm:$0xf]
        %v328 = vld [vmem:[%s293 + $0x28] sm:$0xff]
        %v329 = vld [vmem:[%s293 + $0x30] sm:$0xff]
        %v330 = vld [vmem:[%s293 + $0x38] sm:$0xf]
        %v331 = vld [vmem:[%s293 + $0x3c] sm:$0xff]
        %v332 = vld [vmem:[%s293 + $0x44] sm:$0xff]
        %v333 = vld [vmem:[%s293 + $0x4c] sm:$0xf]
        %v334 = vld [vmem:[%s293 + $0x50] sm:$0xff]
        %v335 = vld [vmem:[%s293 + $0x58] sm:$0xff]
        %v336 = vld [vmem:[%s293 + $0x60] sm:$0xf]
        %v337 = vld [vmem:[%s293 + $0x64] sm:$0xff]
        %v338 = vld [vmem:[%s293 + $0x6c] sm:$0xff]
        %v339 = vld [vmem:[%s293 + $0x74] sm:$0xf]
        %v340 = vld [vmem:[%s293 + $0x78] sm:$0xff]
        %v341 = vld [vmem:[%s293 + $0x80] sm:$0xff]
        %v342 = vld [vmem:[%s293 + $0x88] sm:$0xf]
        %v343 = vld [vmem:[%s293 + $0x8c] sm:$0xff]
        %v344 = vld [vmem:[%s293 + $0x94] sm:$0xff]
        %v345 = vld [vmem:[%s293 + $0x9c] sm:$0xf]
        %v346 = vld [vmem:[%s293 + $0xa0] sm:$0xff]
        %v347 = vld [vmem:[%s293 + $0xa8] sm:$0xff]
        %v348 = vld [vmem:[%s293 + $0xb0] sm:$0xf]
        %v349 = vld [vmem:[%s293 + $0xb4] sm:$0xff]
        %v350 = vld [vmem:[%s293 + $0xbc] sm:$0xff]
        %v351 = vld [vmem:[%s293 + $0xc4] sm:$0xf]
        %v352 = vld [vmem:[%s293 + $0xc8] sm:$0xff]
        %v353 = vld [vmem:[%s293 + $0xd0] sm:$0xff]
        %v354 = vld [vmem:[%s293 + $0xd8] sm:$0xf]
        %v355 = vld [vmem:[%s293 + $0xdc] sm:$0xff]
        %v356 = vld [vmem:[%s293 + $0xe4] sm:$0xff]
        %v357 = vld [vmem:[%s293 + $0xec] sm:$0xf]
        %v358 = vld [vmem:[%s293 + $0xf0] sm:$0xff]
        %v359 = vld [vmem:[%s293 + $0xf8] sm:$0xff]
        %v360 = vld [vmem:[%s293 + $0x100] sm:$0xf]
        %v361 = vld [vmem:[%s293 + $0x104] sm:$0xff]
        %v362 = vld [vmem:[%s293 + $0x10c] sm:$0xff]
        %v363 = vld [vmem:[%s293 + $0x114] sm:$0xf]
        %v364 = vld [vmem:[%s293 + $0x118] sm:$0xff]
        %v365 = vld [vmem:[%s293 + $0x120] sm:$0xff]
        %v366 = vld [vmem:[%s293 + $0x128] sm:$0xf]
        %v367 = vld [vmem:[%s293 + $0x12c] sm:$0xff]
        %v368 = vld [vmem:[%s293 + $0x134] sm:$0xff]
        %v369 = vld [vmem:[%s293 + $0x13c] sm:$0xf]
        %v370 = vld [vmem:[%s293 + $0x140] sm:$0xff]
        %v371 = vld [vmem:[%s293 + $0x148] sm:$0xff]
        %v372 = vld [vmem:[%s293 + $0x150] sm:$0xf]
        %v373 = vld [vmem:[%s293 + $0x154] sm:$0xff]
        %v374 = vld [vmem:[%s293 + $0x15c] sm:$0xff]
        %v375 = vld [vmem:[%s293 + $0x164] sm:$0xf]
        %v376 = vld [vmem:[%s293 + $0x168] sm:$0xff]
        %v377 = vld [vmem:[%s293 + $0x170] sm:$0xff]
        %v378 = vld [vmem:[%s293 + $0x178] sm:$0xf]
        %v379 = vld [vmem:[%s293 + $0x17c] sm:$0xff]
        %v380 = vld [vmem:[%s293 + $0x184] sm:$0xff]
        %v381 = vld [vmem:[%s293 + $0x18c] sm:$0xf]
        %v382 = vld [vmem:[%s1] sm:$0xf]
        %v383 = vld [vmem:[%s1 + $0x4] sm:$0xf]
        %v384 = vld [vmem:[%s1 + $0x8] sm:$0xf]
        %v385 = vld [vmem:[%s1 + $0xc] sm:$0xf]
        %v386 = vld [vmem:[%s1 + $0x10] sm:$0xf]
        %v387 = vld [vmem:[%s1 + $0x14] sm:$0xf]
        %v388 = vld [vmem:[%s1 + $0x18] sm:$0xf]
        %v389 = vld [vmem:[%s1 + $0x1c] sm:$0xf]
        %v390 = vld [vmem:[%s1 + $0x20] sm:$0xf]
        %v391 = vld [vmem:[%s1 + $0x24] sm:$0xf]
        %v392 = vld [vmem:[%s1 + $0x28] sm:$0xf]
        %v393 = vld [vmem:[%s1 + $0x2c] sm:$0xf]
        %v394 = vld [vmem:[%s1 + $0x30] sm:$0xf]
        %v395 = vld [vmem:[%s1 + $0x34] sm:$0xf]
        %v396 = vld [vmem:[%s1 + $0x38] sm:$0xf]
        %v397 = vld [vmem:[%s1 + $0x3c] sm:$0xf]
        %v398 = vld [vmem:[%s1 + $0x40] sm:$0xf]
        %v399 = vld [vmem:[%s1 + $0x44] sm:$0xf]
        %v400 = vld [vmem:[%s1 + $0x48] sm:$0xf]
        %v401 = vld [vmem:[%s1 + $0x4c] sm:$0xf]
        %v402 = vld [vmem:[%s1 + $0x50] sm:$0xf]
        %v403 = vld [vmem:[%s1 + $0x54] sm:$0xf]
        %v404 = vld [vmem:[%s1 + $0x58] sm:$0xf]
        %v405 = vld [vmem:[%s1 + $0x5c] sm:$0xf]
        %v406 = vld [vmem:[%s1 + $0x60] sm:$0xf]
        %v407 = vld [vmem:[%s1 + $0x64] sm:$0xf]
        %v408 = vld [vmem:[%s1 + $0x68] sm:$0xf]
        %v409 = vld [vmem:[%s1 + $0x6c] sm:$0xf]
        %v410 = vld [vmem:[%s1 + $0x70] sm:$0xf]
        %v411 = vld [vmem:[%s1 + $0x74] sm:$0xf]
        %v412 = vld [vmem:[%s1 + $0x78] sm:$0xf]
        %v413 = vld [vmem:[%s1 + $0x7c] sm:$0xf]
        %v414 = vld [vmem:[%s1 + $0x80] sm:$0xf]
        %v415 = vld [vmem:[%s1 + $0x84] sm:$0xf]
        %v416 = vld [vmem:[%s1 + $0x88] sm:$0xf]
        %v417 = vld [vmem:[%s1 + $0x8c] sm:$0xf]
        %v418 = vld [vmem:[%s1 + $0x90] sm:$0xf]
        %v419 = vld [vmem:[%s1 + $0x94] sm:$0xf]
        %v420 = vld [vmem:[%s1 + $0x98] sm:$0xf]
        %v421 = vld [vmem:[%s1 + $0x9c] sm:$0xf]
        %v422 = vld [vmem:[%s1 + $0xa0] sm:$0xf]
        %v423 = vld [vmem:[%s1 + $0xa4] sm:$0xf]
        %v424 = vld [vmem:[%s1 + $0xa8] sm:$0xf]
        %v425 = vld [vmem:[%s1 + $0xac] sm:$0xf]
        %v426 = vld [vmem:[%s1 + $0xb0] sm:$0xf]
        %v427 = vld [vmem:[%s1 + $0xb4] sm:$0xf]
        %v428 = vld [vmem:[%s1 + $0xb8] sm:$0xf]
        %v429 = vld [vmem:[%s1 + $0xbc] sm:$0xf]
        %v430 = vld [vmem:[%s1 + $0xc0] sm:$0xf]
        %v431 = vld [vmem:[%s1 + $0xc4] sm:$0xf]
        %v432 = vld [vmem:[%s1 + $0xc8] sm:$0xf]
        %v433 = vld [vmem:[%s1 + $0xcc] sm:$0xf]
        %v434 = vld [vmem:[%s1 + $0xd0] sm:$0xf]
        %v435 = vld [vmem:[%s1 + $0xd4] sm:$0xf]
        %v436 = vld [vmem:[%s1 + $0xd8] sm:$0xf]
        %v437 = vld [vmem:[%s1 + $0xdc] sm:$0xf]
        %v438 = vld [vmem:[%s1 + $0xe0] sm:$0xf]
        %v439 = vld [vmem:[%s1 + $0xe4] sm:$0xf]
        %v440 = vld [vmem:[%s1 + $0xe8] sm:$0xf]
        %v441 = vld [vmem:[%s1 + $0xec] sm:$0xf]
        %v442 = vld [vmem:[%s1 + $0xf0] sm:$0xf]
        %v443 = vld [vmem:[%s1 + $0xf4] sm:$0xf]
        %v444 = vld [vmem:[%s1 + $0xf8] sm:$0xf]
        %v445 = vld [vmem:[%s1 + $0xfc] sm:$0xf]
        %v446 = vld [vmem:[%s1 + $0x100] sm:$0xf]
        %v447 = vld [vmem:[%s1 + $0x104] sm:$0xf]
        %v448 = vld [vmem:[%s1 + $0x108] sm:$0xf]
        %v449 = vld [vmem:[%s1 + $0x10c] sm:$0xf]
        %v450 = vld [vmem:[%s1 + $0x110] sm:$0xf]
        %v451 = vld [vmem:[%s1 + $0x114] sm:$0xf]
        %v452 = vld [vmem:[%s1 + $0x118] sm:$0xf]
        %v453 = vld [vmem:[%s1 + $0x11c] sm:$0xf]
        %v514 = vunpack.c.l.b16 %v322
        %v515 = vunpack.c.h.b16 %v322
        %v516 = vunpack.c.l.b16 %v323
        %v517 = vunpack.c.h.b16 %v323
        %v518 = vunpack.c.l.b16 %v324
        %v519 = vunpack.c.l.b16 %v325
        %v520 = vunpack.c.h.b16 %v325
        %v521 = vunpack.c.l.b16 %v326
        %v522 = vunpack.c.h.b16 %v326
        %v523 = vunpack.c.l.b16 %v327
        %v524 = vunpack.c.l.b16 %v328
        %v525 = vunpack.c.h.b16 %v328
        %v526 = vunpack.c.l.b16 %v329
        %v527 = vunpack.c.h.b16 %v329
        %v528 = vunpack.c.l.b16 %v330
        %v529 = vunpack.c.l.b16 %v331
        %v530 = vunpack.c.h.b16 %v331
        %v531 = vunpack.c.l.b16 %v332
        %v532 = vunpack.c.h.b16 %v332
        %v533 = vunpack.c.l.b16 %v333
        %v534 = vunpack.c.l.b16 %v334
        %v535 = vunpack.c.h.b16 %v334
        %v536 = vunpack.c.l.b16 %v335
        %v537 = vunpack.c.h.b16 %v335
        %v538 = vunpack.c.l.b16 %v336
        %v539 = vunpack.c.l.b16 %v337
        %v540 = vunpack.c.h.b16 %v337
        %v541 = vunpack.c.l.b16 %v338
        %v542 = vunpack.c.h.b16 %v338
        %v543 = vunpack.c.l.b16 %v339
        %v544 = vunpack.c.l.b16 %v340
        %v545 = vunpack.c.h.b16 %v340
        %v546 = vunpack.c.l.b16 %v341
        %v547 = vunpack.c.h.b16 %v341
        %v548 = vunpack.c.l.b16 %v342
        %v549 = vunpack.c.l.b16 %v343
        %v550 = vunpack.c.h.b16 %v343
        %v551 = vunpack.c.l.b16 %v344
        %v552 = vunpack.c.h.b16 %v344
        %v553 = vunpack.c.l.b16 %v345
        %v554 = vunpack.c.l.b16 %v346
        %v555 = vunpack.c.h.b16 %v346
        %v556 = vunpack.c.l.b16 %v347
        %v557 = vunpack.c.h.b16 %v347
        %v558 = vunpack.c.l.b16 %v348
        %v559 = vunpack.c.l.b16 %v349
        %v560 = vunpack.c.h.b16 %v349
        %v561 = vunpack.c.l.b16 %v350
        %v562 = vunpack.c.h.b16 %v350
        %v563 = vunpack.c.l.b16 %v351
        %v564 = vunpack.c.l.b16 %v352
        %v565 = vunpack.c.h.b16 %v352
        %v566 = vunpack.c.l.b16 %v353
        %v567 = vunpack.c.h.b16 %v353
        %v568 = vunpack.c.l.b16 %v354
        %v569 = vunpack.c.l.b16 %v355
        %v570 = vunpack.c.h.b16 %v355
        %v571 = vunpack.c.l.b16 %v356
        %v572 = vunpack.c.h.b16 %v356
        %v573 = vunpack.c.l.b16 %v357
        %v574 = vunpack.c.l.b16 %v358
        %v575 = vunpack.c.h.b16 %v358
        %v576 = vunpack.c.l.b16 %v359
        %v577 = vunpack.c.h.b16 %v359
        %v578 = vunpack.c.l.b16 %v360
        %v579 = vunpack.c.l.b16 %v361
        %v580 = vunpack.c.h.b16 %v361
        %v581 = vunpack.c.l.b16 %v362
        %v582 = vunpack.c.h.b16 %v362
        %v583 = vunpack.c.l.b16 %v363
        %v584 = vunpack.c.l.b16 %v364
        %v585 = vunpack.c.h.b16 %v364
        %v586 = vunpack.c.l.b16 %v365
        %v587 = vunpack.c.h.b16 %v365
        %v588 = vunpack.c.l.b16 %v366
        %v589 = vunpack.c.l.b16 %v367
        %v590 = vunpack.c.h.b16 %v367
        %v591 = vunpack.c.l.b16 %v368
        %v592 = vunpack.c.h.b16 %v368
        %v593 = vunpack.c.l.b16 %v369
        %v594 = vunpack.c.l.b16 %v370
        %v595 = vunpack.c.h.b16 %v370
        %v596 = vunpack.c.l.b16 %v371
        %v597 = vunpack.c.h.b16 %v371
        %v598 = vunpack.c.l.b16 %v372
        %v599 = vunpack.c.l.b16 %v373
        %v600 = vunpack.c.h.b16 %v373
        %v601 = vunpack.c.l.b16 %v374
        %v602 = vunpack.c.h.b16 %v374
        %v603 = vunpack.c.l.b16 %v375
        %v604 = vunpack.c.l.b16 %v376
        %v605 = vunpack.c.h.b16 %v376
        %v606 = vunpack.c.l.b16 %v377
        %v607 = vunpack.c.h.b16 %v377
        %v608 = vunpack.c.l.b16 %v378
        %v609 = vunpack.c.l.b16 %v379
        %v610 = vunpack.c.h.b16 %v379
        %v611 = vunpack.c.l.b16 %v380
        %v612 = vunpack.c.h.b16 %v380
        %v613 = vunpack.c.l.b16 %v381
        %v614 = vpack.c.b16 %v519, %v514
        %v615 = vpack.c.b16 %v520, %v515
        %v616 = vpack.c.b16 %v521, %v516
        %v617 = vpack.c.b16 %v522, %v517
        %v618 = vpack.c.b16 %v523, %v518
        %v619 = vpack.c.b16 %v529, %v524
        %v620 = vpack.c.b16 %v530, %v525
        %v621 = vpack.c.b16 %v531, %v526
        %v622 = vpack.c.b16 %v532, %v527
        %v623 = vpack.c.b16 %v533, %v528
        %v624 = vpack.c.b16 %v539, %v534
        %v625 = vpack.c.b16 %v540, %v535
        %v626 = vpack.c.b16 %v541, %v536
        %v627 = vpack.c.b16 %v542, %v537
        %v628 = vpack.c.b16 %v543, %v538
        %v629 = vpack.c.b16 %v549, %v544
        %v630 = vpack.c.b16 %v550, %v545
        %v631 = vpack.c.b16 %v551, %v546
        %v632 = vpack.c.b16 %v552, %v547
        %v633 = vpack.c.b16 %v553, %v548
        %v634 = vpack.c.b16 %v559, %v554
        %v635 = vpack.c.b16 %v560, %v555
        %v636 = vpack.c.b16 %v561, %v556
        %v637 = vpack.c.b16 %v562, %v557
        %v638 = vpack.c.b16 %v563, %v558
        %v639 = vpack.c.b16 %v569, %v564
        %v640 = vpack.c.b16 %v570, %v565
        %v641 = vpack.c.b16 %v571, %v566
        %v642 = vpack.c.b16 %v572, %v567
        %v643 = vpack.c.b16 %v573, %v568
        %v644 = vpack.c.b16 %v579, %v574
        %v645 = vpack.c.b16 %v580, %v575
        %v646 = vpack.c.b16 %v581, %v576
        %v647 = vpack.c.b16 %v582, %v577
        %v648 = vpack.c.b16 %v583, %v578
        %v649 = vpack.c.b16 %v589, %v584
        %v650 = vpack.c.b16 %v590, %v585
        %v651 = vpack.c.b16 %v591, %v586
        %v652 = vpack.c.b16 %v592, %v587
        %v653 = vpack.c.b16 %v593, %v588
        %v654 = vpack.c.b16 %v599, %v594
        %v655 = vpack.c.b16 %v600, %v595
        %v656 = vpack.c.b16 %v601, %v596
        %v657 = vpack.c.b16 %v602, %v597
        %v658 = vpack.c.b16 %v603, %v598
        %v659 = vpack.c.b16 %v609, %v604
        %v660 = vpack.c.b16 %v610, %v605
        %v661 = vpack.c.b16 %v611, %v606
        %v662 = vpack.c.b16 %v612, %v607
        %v663 = vpack.c.b16 %v613, %v608
        %v776 = vunpack.c.l.b16 %v382
        %v777 = vunpack.c.l.b16 %v383
        %v778 = vunpack.c.l.b16 %v384
        %v779 = vunpack.c.l.b16 %v385
        %v780 = vunpack.c.l.b16 %v386
        %v781 = vunpack.c.l.b16 %v387
        %v782 = vunpack.c.l.b16 %v388
        %v783 = vunpack.c.l.b16 %v389
        %v784 = vunpack.c.l.b16 %v390
        %v785 = vunpack.c.l.b16 %v391
        %v786 = vunpack.c.l.b16 %v392
        %v787 = vunpack.c.l.b16 %v393
        %v788 = vunpack.c.l.b16 %v394
        %v789 = vunpack.c.l.b16 %v395
        %v790 = vunpack.c.l.b16 %v396
        %v791 = vunpack.c.l.b16 %v397
        %v792 = vunpack.c.l.b16 %v398
        %v793 = vunpack.c.l.b16 %v399
        %v794 = vunpack.c.l.b16 %v400
        %v795 = vunpack.c.l.b16 %v401
        %v796 = vunpack.c.l.b16 %v402
        %v797 = vunpack.c.l.b16 %v403
        %v798 = vunpack.c.l.b16 %v404
        %v799 = vunpack.c.l.b16 %v405
        %v800 = vunpack.c.l.b16 %v406
        %v801 = vunpack.c.l.b16 %v407
        %v802 = vunpack.c.l.b16 %v408
        %v803 = vunpack.c.l.b16 %v409
        %v804 = vunpack.c.l.b16 %v410
        %v805 = vunpack.c.l.b16 %v411
        %v806 = vunpack.c.l.b16 %v412
        %v807 = vunpack.c.l.b16 %v413
        %v808 = vunpack.c.l.b16 %v414
        %v809 = vunpack.c.l.b16 %v415
        %v810 = vunpack.c.l.b16 %v416
        %v811 = vunpack.c.l.b16 %v417
        %v812 = vunpack.c.l.b16 %v418
        %v813 = vunpack.c.l.b16 %v419
        %v814 = vunpack.c.l.b16 %v420
        %v815 = vunpack.c.l.b16 %v421
        %v816 = vunpack.c.l.b16 %v422
        %v817 = vunpack.c.l.b16 %v423
        %v818 = vunpack.c.l.b16 %v424
        %v819 = vunpack.c.l.b16 %v425
        %v820 = vunpack.c.l.b16 %v426
        %v821 = vunpack.c.l.b16 %v427
        %v822 = vunpack.c.l.b16 %v428
        %v823 = vunpack.c.l.b16 %v429
        %v824 = vunpack.c.l.b16 %v430
        %v825 = vunpack.c.l.b16 %v431
        %v826 = vunpack.c.l.b16 %v432
        %v827 = vunpack.c.l.b16 %v433
        %v828 = vunpack.c.l.b16 %v434
        %v829 = vunpack.c.l.b16 %v435
        %v830 = vunpack.c.l.b16 %v436
        %v831 = vunpack.c.l.b16 %v437
        %v832 = vunpack.c.l.b16 %v438
        %v833 = vunpack.c.l.b16 %v439
        %v834 = vunpack.c.l.b16 %v440
        %v835 = vunpack.c.l.b16 %v441
        %v836 = vunpack.c.l.b16 %v442
        %v837 = vunpack.c.l.b16 %v443
        %v838 = vunpack.c.l.b16 %v444
        %v839 = vunpack.c.l.b16 %v445
        %v840 = vunpack.c.l.b16 %v446
        %v841 = vunpack.c.l.b16 %v447
        %v842 = vunpack.c.l.b16 %v448
        %v843 = vunpack.c.l.b16 %v449
        %v844 = vunpack.c.l.b16 %v450
        %v845 = vunpack.c.l.b16 %v451
        %v846 = vunpack.c.l.b16 %v452
        %v847 = vunpack.c.l.b16 %v453
        %v848 = vpack.c.b16 %v777, %v776
        %v849 = vpack.c.b16 %v779, %v778
        %v850 = vpack.c.b16 %v781, %v780
        %v851 = vpack.c.b16 %v783, %v782
        %v852 = vpack.c.b16 %v785, %v784
        %v853 = vpack.c.b16 %v787, %v786
        %v854 = vpack.c.b16 %v789, %v788
        %v855 = vpack.c.b16 %v791, %v790
        %v856 = vpack.c.b16 %v793, %v792
        %v857 = vpack.c.b16 %v795, %v794
        %v858 = vpack.c.b16 %v797, %v796
        %v859 = vpack.c.b16 %v799, %v798
        %v860 = vpack.c.b16 %v801, %v800
        %v861 = vpack.c.b16 %v803, %v802
        %v862 = vpack.c.b16 %v805, %v804
        %v863 = vpack.c.b16 %v807, %v806
        %v864 = vpack.c.b16 %v809, %v808
        %v865 = vpack.c.b16 %v811, %v810
        %v866 = vpack.c.b16 %v813, %v812
        %v867 = vpack.c.b16 %v815, %v814
        %v868 = vpack.c.b16 %v817, %v816
        %v869 = vpack.c.b16 %v819, %v818
        %v870 = vpack.c.b16 %v821, %v820
        %v871 = vpack.c.b16 %v823, %v822
        %v872 = vpack.c.b16 %v825, %v824
        %v873 = vpack.c.b16 %v827, %v826
        %v874 = vpack.c.b16 %v829, %v828
        %v875 = vpack.c.b16 %v831, %v830
        %v876 = vpack.c.b16 %v833, %v832
        %v877 = vpack.c.b16 %v835, %v834
        %v878 = vpack.c.b16 %v837, %v836
        %v879 = vpack.c.b16 %v839, %v838
        %v880 = vpack.c.b16 %v841, %v840
        %v881 = vpack.c.b16 %v843, %v842
        %v882 = vpack.c.b16 %v845, %v844
        %v883 = vpack.c.b16 %v847, %v846
        %vm920 = vcmask 523264
        %v922 = vsel %vm920, %v618, 0
        %v925 = vsel %vm920, %v623, 0
        %v928 = vsel %vm920, %v628, 0
        %v931 = vsel %vm920, %v633, 0
        %v934 = vsel %vm920, %v638, 0
        %v937 = vsel %vm920, %v643, 0
        %v940 = vsel %vm920, %v648, 0
        %v943 = vsel %vm920, %v653, 0
        %v946 = vsel %vm920, %v658, 0
        %v949 = vsel %vm920, %v663, 0
        %951 = vmatprep.subr.bf16.mxu0 0
        %952 = vmatpush1.bf16.msra.mxu0 %v848
        %953 = vmatprep.subr.bf16.mxu0 0
        %954 = vmatpush1.bf16.msra.mxu0 %v849
        %955 = vmatprep.subr.bf16.mxu0 0
        %956 = vmatpush1.bf16.msra.mxu0 %v850
        %957 = vmatprep.subr.bf16.mxu0 0
        %958 = vmatpush1.bf16.msra.mxu0 %v851
        %959 = vmatprep.subr.bf16.mxu0 0
        %960 = vmatpush1.bf16.msra.mxu0 %v852
        %961 = vmatprep.subr.bf16.mxu0 0
        %962 = vmatpush1.bf16.msra.mxu0 %v853
        %963 = vmatprep.subr.bf16.mxu0 0
        %964 = vmatpush1.bf16.msra.mxu0 %v854
        %965 = vmatprep.subr.bf16.mxu0 0
        %966 = vmatpush1.bf16.msra.mxu0 %v855
        %967 = vmatprep.subr.bf16.mxu0 0
        %968 = vmatpush1.bf16.msra.mxu0 %v856
        %969 = vmatprep.subr.bf16.mxu0 0
        %970 = vmatpush1.bf16.msra.mxu0 %v857
        %971 = vmatprep.subr.bf16.mxu0 0
        %972 = vmatpush1.bf16.msra.mxu0 %v858
        %973 = vmatprep.subr.bf16.mxu0 0
        %974 = vmatpush1.bf16.msra.mxu0 %v859
        %975 = vmatprep.subr.bf16.mxu0 0
        %976 = vmatpush1.bf16.msra.mxu0 %v860
        %977 = vmatprep.subr.bf16.mxu0 0
        %978 = vmatpush1.bf16.msra.mxu0 %v861
        %979 = vmatprep.subr.bf16.mxu0 0
        %980 = vmatpush1.bf16.msra.mxu0 %v862
        %981 = vmatprep.subr.bf16.mxu0 0
        %982 = vmatpush1.bf16.msra.mxu0 %v863
        %983 = vmatprep.mubr.bf16.mxu0 %v615
        %984 = vmatmul.mubr.bf16.gmra.mrb[0].mxu0 %v614
        %v985 = vpop.f32.mrb[0].mxu0
        %v986 = vadd.f32 0.0, %v985
        %v987 = vpop.f32.mrb[0].mxu0
        %v988 = vpop.f32.mrb[0].mxu0
        %v989 = vadd.f32 0.0, %v988
        %v990 = vpop.f32.mrb[0].mxu0
        %991 = vmatprep.mubr.bf16.mxu0 %v620
        %992 = vmatmul.mubr.bf16.gmra.mrb[0].mxu0 %v619
        %v993 = vpop.f32.mrb[0].mxu0
        %v994 = vadd.f32 0.0, %v993
        %v995 = vpop.f32.mrb[0].mxu0
        %v996 = vpop.f32.mrb[0].mxu0
        %v997 = vadd.f32 0.0, %v996
        %v998 = vpop.f32.mrb[0].mxu0
        %999 = vmatprep.mubr.bf16.mxu0 %v625
        %1000 = vmatmul.mubr.bf16.gmra.mrb[0].mxu0 %v624
        %v1001 = vpop.f32.mrb[0].mxu0
        %v1002 = vadd.f32 0.0, %v1001
        %v1003 = vpop.f32.mrb[0].mxu0
        %v1004 = vpop.f32.mrb[0].mxu0
        %v1005 = vadd.f32 0.0, %v1004
        %v1006 = vpop.f32.mrb[0].mxu0
        %1007 = vmatprep.mubr.bf16.mxu0 %v630
        %1008 = vmatmul.mubr.bf16.gmra.mrb[0].mxu0 %v629
        %v1009 = vpop.f32.mrb[0].mxu0
        %v1010 = vadd.f32 0.0, %v1009
        %v1011 = vpop.f32.mrb[0].mxu0
        %v1012 = vpop.f32.mrb[0].mxu0
        %v1013 = vadd.f32 0.0, %v1012
        %v1014 = vpop.f32.mrb[0].mxu0
        %1015 = vmatprep.mubr.bf16.mxu0 %v635
        %1016 = vmatmul.mubr.bf16.gmra.mrb[0].mxu0 %v634
        %v1017 = vpop.f32.mrb[0].mxu0
        %v1018 = vadd.f32 0.0, %v1017
        %v1019 = vpop.f32.mrb[0].mxu0
        %v1020 = vpop.f32.mrb[0].mxu0
        %v1021 = vadd.f32 0.0, %v1020
        %v1022 = vpop.f32.mrb[0].mxu0
        %1023 = vmatprep.mubr.bf16.mxu0 %v640
        %1024 = vmatmul.mubr.bf16.gmra.mrb[0].mxu0 %v639
        %v1025 = vpop.f32.mrb[0].mxu0
        %v1026 = vadd.f32 0.0, %v1025
        %v1027 = vpop.f32.mrb[0].mxu0
        %v1028 = vpop.f32.mrb[0].mxu0
        %v1029 = vadd.f32 0.0, %v1028
        %v1030 = vpop.f32.mrb[0].mxu0
        %1031 = vmatprep.mubr.bf16.mxu0 %v645
        %1032 = vmatmul.mubr.bf16.gmra.mrb[0].mxu0 %v644
        %v1033 = vpop.f32.mrb[0].mxu0
        %v1034 = vadd.f32 0.0, %v1033
        %v1035 = vpop.f32.mrb[0].mxu0
        %v1036 = vpop.f32.mrb[0].mxu0
        %v1037 = vadd.f32 0.0, %v1036
        %v1038 = vpop.f32.mrb[0].mxu0
        %1039 = vmatprep.mubr.bf16.mxu0 %v650
        %1040 = vmatmul.mubr.bf16.gmra.mrb[0].mxu0 %v649
        %v1041 = vpop.f32.mrb[0].mxu0
        %v1042 = vadd.f32 0.0, %v1041
        %v1043 = vpop.f32.mrb[0].mxu0
        %v1044 = vpop.f32.mrb[0].mxu0
        %v1045 = vadd.f32 0.0, %v1044
        %v1046 = vpop.f32.mrb[0].mxu0
        %1047 = vmatprep.mubr.bf16.mxu0 %v655
        %1048 = vmatmul.mubr.bf16.gmra.mrb[0].mxu0 %v654
        %v1049 = vpop.f32.mrb[0].mxu0
        %v1050 = vadd.f32 0.0, %v1049
        %v1051 = vpop.f32.mrb[0].mxu0
        %v1052 = vpop.f32.mrb[0].mxu0
        %v1053 = vadd.f32 0.0, %v1052
        %v1054 = vpop.f32.mrb[0].mxu0
        %1055 = vmatprep.mubr.bf16.mxu0 %v660
        %1056 = vmatmul.mubr.bf16.gmra.mrb[0].mxu0 %v659
        %v1057 = vpop.f32.mrb[0].mxu0
        %v1058 = vadd.f32 0.0, %v1057
        %v1059 = vpop.f32.mrb[0].mxu0
        %v1060 = vpop.f32.mrb[0].mxu0
        %v1061 = vadd.f32 0.0, %v1060
        %v1062 = vpop.f32.mrb[0].mxu0
        %1063 = vdwg.mxu0
        %1064 = vmatprep.subr.bf16.mxu0 0
        %1065 = vmatpush1.bf16.msra.mxu0 %v864
        %1066 = vmatprep.subr.bf16.mxu0 0
        %1067 = vmatpush1.bf16.msra.mxu0 %v865
        %1068 = vmatprep.subr.bf16.mxu0 0
        %1069 = vmatpush1.bf16.msra.mxu0 %v866
        %1070 = vmatprep.subr.bf16.mxu0 0
        %1071 = vmatpush1.bf16.msra.mxu0 %v867
        %1072 = vmatprep.subr.bf16.mxu0 0
        %1073 = vmatpush1.bf16.msra.mxu0 %v868
        %1074 = vmatprep.subr.bf16.mxu0 0
        %1075 = vmatpush1.bf16.msra.mxu0 %v869
        %1076 = vmatprep.subr.bf16.mxu0 0
        %1077 = vmatpush1.bf16.msra.mxu0 %v870
        %1078 = vmatprep.subr.bf16.mxu0 0
        %1079 = vmatpush1.bf16.msra.mxu0 %v871
        %1080 = vmatprep.subr.bf16.mxu0 0
        %1081 = vmatpush1.bf16.msra.mxu0 %v872
        %1082 = vmatprep.subr.bf16.mxu0 0
        %1083 = vmatpush1.bf16.msra.mxu0 %v873
        %1084 = vmatprep.subr.bf16.mxu0 0
        %1085 = vmatpush1.bf16.msra.mxu0 %v874
        %1086 = vmatprep.subr.bf16.mxu0 0
        %1087 = vmatpush1.bf16.msra.mxu0 %v875
        %1088 = vmatprep.subr.bf16.mxu0 0
        %1089 = vmatpush1.bf16.msra.mxu0 %v876
        %1090 = vmatprep.subr.bf16.mxu0 0
        %1091 = vmatpush1.bf16.msra.mxu0 %v877
        %1092 = vmatprep.subr.bf16.mxu0 0
        %1093 = vmatpush1.bf16.msra.mxu0 %v878
        %1094 = vmatprep.subr.bf16.mxu0 0
        %1095 = vmatpush1.bf16.msra.mxu0 %v879
        %1096 = vmatprep.mubr.bf16.mxu0 %v617
        %1097 = vmatmul.mubr.bf16.gmra.mrb[0].mxu0 %v616
        %v1098 = vpop.f32.mrb[0].mxu0
        %v1099 = vadd.f32 %v986, %v1098
        %v1100 = vpop.f32.mrb[0].mxu0
        %v1101 = vpop.f32.mrb[0].mxu0
        %v1102 = vadd.f32 %v989, %v1101
        %v1103 = vpop.f32.mrb[0].mxu0
        %1104 = vmatprep.mubr.bf16.mxu0 %v622
        %1105 = vmatmul.mubr.bf16.gmra.mrb[0].mxu0 %v621
        %v1106 = vpop.f32.mrb[0].mxu0
        %v1107 = vadd.f32 %v994, %v1106
        %v1108 = vpop.f32.mrb[0].mxu0
        %v1109 = vpop.f32.mrb[0].mxu0
        %v1110 = vadd.f32 %v997, %v1109
        %v1111 = vpop.f32.mrb[0].mxu0
        %1112 = vmatprep.mubr.bf16.mxu0 %v627
        %1113 = vmatmul.mubr.bf16.gmra.mrb[0].mxu0 %v626
        %v1114 = vpop.f32.mrb[0].mxu0
        %v1115 = vadd.f32 %v1002, %v1114
        %v1116 = vpop.f32.mrb[0].mxu0
        %v1117 = vpop.f32.mrb[0].mxu0
        %v1118 = vadd.f32 %v1005, %v1117
        %v1119 = vpop.f32.mrb[0].mxu0
        %1120 = vmatprep.mubr.bf16.mxu0 %v632
        %1121 = vmatmul.mubr.bf16.gmra.mrb[0].mxu0 %v631
        %v1122 = vpop.f32.mrb[0].mxu0
        %v1123 = vadd.f32 %v1010, %v1122
        %v1124 = vpop.f32.mrb[0].mxu0
        %v1125 = vpop.f32.mrb[0].mxu0
        %v1126 = vadd.f32 %v1013, %v1125
        %v1127 = vpop.f32.mrb[0].mxu0
        %1128 = vmatprep.mubr.bf16.mxu0 %v637
        %1129 = vmatmul.mubr.bf16.gmra.mrb[0].mxu0 %v636
        %v1130 = vpop.f32.mrb[0].mxu0
        %v1131 = vadd.f32 %v1018, %v1130
        %v1132 = vpop.f32.mrb[0].mxu0
        %v1133 = vpop.f32.mrb[0].mxu0
        %v1134 = vadd.f32 %v1021, %v1133
        %v1135 = vpop.f32.mrb[0].mxu0
        %1136 = vmatprep.mubr.bf16.mxu0 %v642
        %1137 = vmatmul.mubr.bf16.gmra.mrb[0].mxu0 %v641
        %v1138 = vpop.f32.mrb[0].mxu0
        %v1139 = vadd.f32 %v1026, %v1138
        %v1140 = vpop.f32.mrb[0].mxu0
        %v1141 = vpop.f32.mrb[0].mxu0
        %v1142 = vadd.f32 %v1029, %v1141
        %v1143 = vpop.f32.mrb[0].mxu0
        %1144 = vmatprep.mubr.bf16.mxu0 %v647
        %1145 = vmatmul.mubr.bf16.gmra.mrb[0].mxu0 %v646
        %v1146 = vpop.f32.mrb[0].mxu0
        %v1147 = vadd.f32 %v1034, %v1146
        %v1148 = vpop.f32.mrb[0].mxu0
        %v1149 = vpop.f32.mrb[0].mxu0
        %v1150 = vadd.f32 %v1037, %v1149
        %v1151 = vpop.f32.mrb[0].mxu0
        %1152 = vmatprep.mubr.bf16.mxu0 %v652
        %1153 = vmatmul.mubr.bf16.gmra.mrb[0].mxu0 %v651
        %v1154 = vpop.f32.mrb[0].mxu0
        %v1155 = vadd.f32 %v1042, %v1154
        %v1156 = vpop.f32.mrb[0].mxu0
        %v1157 = vpop.f32.mrb[0].mxu0
        %v1158 = vadd.f32 %v1045, %v1157
        %v1159 = vpop.f32.mrb[0].mxu0
        %1160 = vmatprep.mubr.bf16.mxu0 %v657
        %1161 = vmatmul.mubr.bf16.gmra.mrb[0].mxu0 %v656
        %v1162 = vpop.f32.mrb[0].mxu0
        %v1163 = vadd.f32 %v1050, %v1162
        %v1164 = vpop.f32.mrb[0].mxu0
        %v1165 = vpop.f32.mrb[0].mxu0
        %v1166 = vadd.f32 %v1053, %v1165
        %v1167 = vpop.f32.mrb[0].mxu0
        %1168 = vmatprep.mubr.bf16.mxu0 %v662
        %1169 = vmatmul.mubr.bf16.gmra.mrb[0].mxu0 %v661
        %v1170 = vpop.f32.mrb[0].mxu0
        %v1171 = vadd.f32 %v1058, %v1170
        %v1172 = vpop.f32.mrb[0].mxu0
        %v1173 = vpop.f32.mrb[0].mxu0
        %v1174 = vadd.f32 %v1061, %v1173
        %v1175 = vpop.f32.mrb[0].mxu0
        %1176 = vdwg.mxu0
        %1177 = vmatprep.subr.bf16.mxu0 0
        %1178 = vmatpush1.bf16.msra.mxu0 %v880
        %1179 = vmatprep.subr.bf16.mxu0 0
        %1180 = vmatpush1.bf16.msra.mxu0 %v881
        %1181 = vmatprep.subr.bf16.mxu0 0
        %1182 = vmatpush1.bf16.msra.mxu0 %v882
        %1183 = vmatprep.subr.bf16.mxu0 0
        %1184 = vmatpush1.bf16.msra.mxu0 %v883
        %1185 = vmatprep.subr.bf16.mxu0 0
        %1186 = vmatpush1.bf16.msra.mxu0 0
        %1187 = vmatprep.subr.bf16.mxu0 0
        %1188 = vmatpush1.bf16.msra.mxu0 0
        %1189 = vmatprep.subr.bf16.mxu0 0
        %1190 = vmatpush1.bf16.msra.mxu0 0
        %1191 = vmatprep.subr.bf16.mxu0 0
        %1192 = vmatpush1.bf16.msra.mxu0 0
        %1193 = vmatprep.subr.bf16.mxu0 0
        %1194 = vmatpush1.bf16.msra.mxu0 0
        %1195 = vmatprep.subr.bf16.mxu0 0
        %1196 = vmatpush1.bf16.msra.mxu0 0
        %1197 = vmatprep.subr.bf16.mxu0 0
        %1198 = vmatpush1.bf16.msra.mxu0 0
        %1199 = vmatprep.subr.bf16.mxu0 0
        %1200 = vmatpush1.bf16.msra.mxu0 0
        %1201 = vmatprep.subr.bf16.mxu0 0
        %1202 = vmatpush1.bf16.msra.mxu0 0
        %1203 = vmatprep.subr.bf16.mxu0 0
        %1204 = vmatpush1.bf16.msra.mxu0 0
        %1205 = vmatprep.subr.bf16.mxu0 0
        %1206 = vmatpush1.bf16.msra.mxu0 0
        %1207 = vmatprep.subr.bf16.mxu0 0
        %1208 = vmatpush1.bf16.msra.mxu0 0
        %1209 = vmatprep.mubr.bf16.mxu0 0
        %1210 = vmatmul.mubr.bf16.gmra.mrb[0].mxu0 %v922
        %v1211 = vpop.f32.mrb[0].mxu0
        %v1212 = vadd.f32 %v1099, %v1211
        %v1213 = vpop.f32.mrb[0].mxu0
        %v1214 = vpop.f32.mrb[0].mxu0
        %v1215 = vadd.f32 %v1102, %v1214
        %v1216 = vpop.f32.mrb[0].mxu0
        %1217 = vmatprep.mubr.bf16.mxu0 0
        %1218 = vmatmul.mubr.bf16.gmra.mrb[0].mxu0 %v925
        %v1219 = vpop.f32.mrb[0].mxu0
        %v1220 = vadd.f32 %v1107, %v1219
        %v1221 = vpop.f32.mrb[0].mxu0
        %v1222 = vpop.f32.mrb[0].mxu0
        %v1223 = vadd.f32 %v1110, %v1222
        %v1224 = vpop.f32.mrb[0].mxu0
        %1225 = vmatprep.mubr.bf16.mxu0 0
        %1226 = vmatmul.mubr.bf16.gmra.mrb[0].mxu0 %v928
        %v1227 = vpop.f32.mrb[0].mxu0
        %v1228 = vadd.f32 %v1115, %v1227
        %v1229 = vpop.f32.mrb[0].mxu0
        %v1230 = vpop.f32.mrb[0].mxu0
        %v1231 = vadd.f32 %v1118, %v1230
        %v1232 = vpop.f32.mrb[0].mxu0
        %1233 = vmatprep.mubr.bf16.mxu0 0
        %1234 = vmatmul.mubr.bf16.gmra.mrb[0].mxu0 %v931
        %v1235 = vpop.f32.mrb[0].mxu0
        %v1236 = vadd.f32 %v1123, %v1235
        %v1237 = vpop.f32.mrb[0].mxu0
        %v1238 = vpop.f32.mrb[0].mxu0
        %v1239 = vadd.f32 %v1126, %v1238
        %v1240 = vpop.f32.mrb[0].mxu0
        %1241 = vmatprep.mubr.bf16.mxu0 0
        %1242 = vmatmul.mubr.bf16.gmra.mrb[0].mxu0 %v934
        %v1243 = vpop.f32.mrb[0].mxu0
        %v1244 = vadd.f32 %v1131, %v1243
        %v1245 = vpop.f32.mrb[0].mxu0
        %v1246 = vpop.f32.mrb[0].mxu0
        %v1247 = vadd.f32 %v1134, %v1246
        %v1248 = vpop.f32.mrb[0].mxu0
        %1249 = vmatprep.mubr.bf16.mxu0 0
        %1250 = vmatmul.mubr.bf16.gmra.mrb[0].mxu0 %v937
        %v1251 = vpop.f32.mrb[0].mxu0
        %v1252 = vadd.f32 %v1139, %v1251
        %v1253 = vpop.f32.mrb[0].mxu0
        %v1254 = vpop.f32.mrb[0].mxu0
        %v1255 = vadd.f32 %v1142, %v1254
        %v1256 = vpop.f32.mrb[0].mxu0
        %1257 = vmatprep.mubr.bf16.mxu0 0
        %1258 = vmatmul.mubr.bf16.gmra.mrb[0].mxu0 %v940
        %v1259 = vpop.f32.mrb[0].mxu0
        %v1260 = vadd.f32 %v1147, %v1259
        %v1261 = vpop.f32.mrb[0].mxu0
        %v1262 = vpop.f32.mrb[0].mxu0
        %v1263 = vadd.f32 %v1150, %v1262
        %v1264 = vpop.f32.mrb[0].mxu0
        %1265 = vmatprep.mubr.bf16.mxu0 0
        %1266 = vmatmul.mubr.bf16.gmra.mrb[0].mxu0 %v943
        %v1267 = vpop.f32.mrb[0].mxu0
        %v1268 = vadd.f32 %v1155, %v1267
        %v1269 = vpop.f32.mrb[0].mxu0
        %v1270 = vpop.f32.mrb[0].mxu0
        %v1271 = vadd.f32 %v1158, %v1270
        %v1272 = vpop.f32.mrb[0].mxu0
        %1273 = vmatprep.mubr.bf16.mxu0 0
        %1274 = vmatmul.mubr.bf16.gmra.mrb[0].mxu0 %v946
        %v1275 = vpop.f32.mrb[0].mxu0
        %v1276 = vadd.f32 %v1163, %v1275
        %v1277 = vpop.f32.mrb[0].mxu0
        %v1278 = vpop.f32.mrb[0].mxu0
        %v1279 = vadd.f32 %v1166, %v1278
        %v1280 = vpop.f32.mrb[0].mxu0
        %1281 = vmatprep.mubr.bf16.mxu0 0
        %1282 = vmatmul.mubr.bf16.gmra.mrb[0].mxu0 %v949
        %v1283 = vpop.f32.mrb[0].mxu0
        %v1284 = vadd.f32 %v1171, %v1283
        %v1285 = vpop.f32.mrb[0].mxu0
        %v1286 = vpop.f32.mrb[0].mxu0
        %v1287 = vadd.f32 %v1174, %v1286
        %v1288 = vpop.f32.mrb[0].mxu0
        %1289 = vdwg.mxu0
        %v1290 = vmax.f32 %v1212, %v1231
        %v1291 = vmax.f32 %v1215, %v1236
        %v1292 = vmax.f32 %v1220, %v1239
        %v1293 = vmax.f32 %v1223, %v1244
        %v1294 = vmax.f32 %v1228, %v1247
        %v1295 = vmax.f32 %v1252, %v1271
        %v1296 = vmax.f32 %v1255, %v1276
        %v1297 = vmax.f32 %v1260, %v1279
        %v1298 = vmax.f32 %v1263, %v1284
        %v1299 = vmax.f32 %v1268, %v1287
        %v1300 = vmax.f32 %v1290, %v1295
        %v1301 = vmax.f32 %v1291, %v1296
        %v1302 = vmax.f32 %v1292, %v1297
        %v1303 = vmax.f32 %v1293, %v1298
        %v1304 = vmax.f32 %v1294, %v1299
        %v1305 = vld [vmem:[%s2] sm:$0x1]
        %v1307 = vlaneseq
        %v1308 = vshrl.u32 %v1307, 7
        %v1309 = vsub.s32 0, %v1308
        %v1310 = vrot.slane %v1305, %v1309
        %v1312 = vadd.f32 %v1300, %v1310
        %v1313 = vadd.f32 %v1301, %v1310
        %v1314 = vadd.f32 %v1302, %v1310
        %v1315 = vadd.f32 %v1303, %v1310
        %v1316 = vadd.f32 %v1304, %v1310
        %v1317 = vmax.f32 %v1312, 0.0
        %v1318 = vmax.f32 %v1313, 0.0
        %v1319 = vmax.f32 %v1314, 0.0
        %v1320 = vmax.f32 %v1315, 0.0
        %v1321 = vmax.f32 %v1316, 0.0
        %v1322 = vpack.c.bf16 %v1318, %v1317
        %v1323 = vpack.c.bf16 %v1320, %v1319
        %v1324 = vpack.c.bf16 %v1321, %v1321
        %v1328 = vunpack.c.l.b16 %v1322
        %v1329 = vunpack.c.h.b16 %v1322
        %v1330 = vunpack.c.l.b16 %v1323
        %v1331 = vunpack.c.h.b16 %v1323
        %v1332 = vunpack.c.l.b16 %v1324
        %v1333 = vpack.c.b16 %v1328, %v1328
        %v1334 = vpack.c.b16 %v1329, %v1329
        %v1335 = vpack.c.b16 %v1330, %v1330
        %v1336 = vpack.c.b16 %v1331, %v1331
        %v1337 = vpack.c.b16 %v1332, %v1332
        %vm1343 = vcmask 388096
        %1344 = vst.msk [vmem:[%s319] sm:$0xf] %vm1343, %v1333
        %1345 = vst.msk [vmem:[%s319 + $0x4] sm:$0xf] %vm1343, %v1334
        %1346 = vst.msk [vmem:[%s319 + $0x8] sm:$0xf] %vm1343, %v1335
        %1347 = vst.msk [vmem:[%s319 + $0xc] sm:$0xf] %vm1343, %v1336
        %1348 = vst.msk [vmem:[%s319 + $0x10] sm:$0xf] %vm1343, %v1337
        %s1349 = smul.u32 5, %s14
        %p1350 = scmp.lt.s32.totalorder %s1349, 9
        %s1351 = scalar_select %p1350, %s1349, 9
        %s1352 = smul.addr %s1351, 4
        %s1353 = scalar_lea.vmem %s3, %s1352
        // Predicated region
        $region59: #{net_forward.4} parent=53 // pred_check
          %p1354 = pneg %p100
        $region60: #{net_forward.4} parent=53 // pred_check_branch
          %1356 = sbr.rel (%p1354) target = $region62
        $region61: #{net_forward.4} parent=53 // pred_region
          %s1357 = smul.u32 5, %s14
        $region62: #{net_forward.4} parent=53 // pred_fallthru
          _
      $region54: #{net_forward.4} parent=5 // pred_fallthru
        _
      %p1358 = scmp.le.s32.totalorder 2, %s9
      // Predicated region
      $region63: #{net_forward.4} parent=5 // pred_check
        %p1359 = pneg %p1358
      $region64: #{net_forward.4} parent=5 // pred_check_branch
        %1361 = sbr.rel (%p1359) target = $region66
      $region65: #{net_forward.4} parent=5 // pred_region
        %s1362 = ssub.s32 %s9, 2
        // Predicated region
        $region67: #{net_forward.4} parent=65 // pred_check
          %p1363 = pneg %p106
        $region68: #{net_forward.4} parent=65 // pred_check_branch
          %1365 = sbr.rel (%p1363) target = $region70
        $region69: #{net_forward.4} parent=65 // pred_region
          %s1366 = smul.u32 5, %s15
          %p1367 = scmp.lt.s32.totalorder %s1366, 9
          %s1368 = scalar_select %p1367, %s1366, 9
          %s1369 = smul.addr %s1368, 4
          %s1370 = scalar_lea.vmem %s3, %s1369
        $region70: #{net_forward.4} parent=65 // pred_fallthru
          _
      $region66: #{net_forward.4} parent=5 // pred_fallthru
        _
    $region6: #{net_forward.4} parent=1 // loop_footer
      %s13 = sadd.s32 1, %s9
    $region7: #{net_forward.4} parent=1 // loop_footer_branch
      %8 = sbr.rel target = $region3
    $region8: #{net_forward.4} parent=1 // loop_exit
      _

// kernel: net_forward.5
$region0: #{net_forward.5}
  #allocation0 [shape = 'u32[]', space=smem, size = 0x4, offset = 0x4, fixed_abs, tag = 'smem constant byte address 0x4 - core index']
  #allocation1 [shape = 'u32[144,128]{1,0:T(1,128)}', space=vmem, size = 0x12000, scoped, tag = 'internal scratch']
  #allocation2 [shape = 'f32[128,32]{1,0:T(8,128)}', space=vmem, size = 0x10000, scoped, tag = 'scratch operand']
  %s0 = inlined_call_operand.vmem [shape: bf16[128,432], index: 0, kind: input, shape index: {}]
  %s1 = inlined_call_operand.vmem [shape: bf16[432,32], index: 1, kind: input, shape index: {}]
  %s2 = inlined_call_operand.vmem [shape: f32[1,32], index: 2, kind: input, shape index: {}]
  %s3 = inlined_call_operand.vmem [shape: bf16[672,200], index: 3, kind: input, shape index: {}]
  %s4 = inlined_call_operand.vmem [shape: f32[1,200], index: 4, kind: input, shape index: {}]
  %s5 = inlined_call_operand.vmem [shape: bf16[200,5], index: 5, kind: input, shape index: {}]
  %s6 = inlined_call_operand.vmem [shape: f32[1,5], index: 6, kind: input, shape index: {}]
  %s7 = inlined_call_operand.vmem [shape: f32[8,5], index: 7, kind: output, shape index: {}]
  %s8 = sld [smem:[#allocation0]]
  $region38: #{net_forward.5} parent=0
    _
  %s10 = ssub.s32 1, %s8
  %s11 = scalar_select 0, %s10, %s8
  // Predicated region
  $region2: #{net_forward.5} parent=0 // pred_check
    _
  $region3: #{net_forward.5} parent=0 // pred_check_branch
    %13 = sbr.rel (0) target = $region5
  $region4: #{net_forward.5} parent=0 // pred_region
    _
  $region5: #{net_forward.5} parent=0 // pred_fallthru
    _
  // Predicated region
  $region6: #{net_forward.5} parent=0 // pred_check
    _
  $region7: #{net_forward.5} parent=0 // pred_check_branch
    %15 = sbr.rel (0) target = $region9
  $region8: #{net_forward.5} parent=0 // pred_region
    _
  $region9: #{net_forward.5} parent=0 // pred_fallthru
    _
  // Predicated region
  $region10: #{net_forward.5} parent=0 // pred_check
    _
  $region11: #{net_forward.5} parent=0 // pred_check_branch
    %17 = sbr.rel (0) target = $region13
  $region12: #{net_forward.5} parent=0 // pred_region
    _
  $region13: #{net_forward.5} parent=0 // pred_fallthru
    _
  // Predicated region
  $region14: #{net_forward.5} parent=0 // pred_check
    _
  $region15: #{net_forward.5} parent=0 // pred_check_branch
    %19 = sbr.rel (0) target = $region17
  $region16: #{net_forward.5} parent=0 // pred_region
    _
  $region17: #{net_forward.5} parent=0 // pred_fallthru
    _
  // Predicated region
  $region18: #{net_forward.5} parent=0 // pred_check
    _
  $region19: #{net_forward.5} parent=0 // pred_check_branch
    %21 = sbr.rel (0) target = $region21
  $region20: #{net_forward.5} parent=0 // pred_region
    _
  $region21: #{net_forward.5} parent=0 // pred_fallthru
    _
  // Predicated region
  $region22: #{net_forward.5} parent=0 // pred_check
    _
  $region23: #{net_forward.5} parent=0 // pred_check_branch
    %23 = sbr.rel (0) target = $region25
  $region24: #{net_forward.5} parent=0 // pred_region
    _
  $region25: #{net_forward.5} parent=0 // pred_fallthru
    _
  // Predicated region
  $region26: #{net_forward.5} parent=0 // pred_check
    _
  $region27: #{net_forward.5} parent=0 // pred_check_branch
    %25 = sbr.rel (0) target = $region29
  $region28: #{net_forward.5} parent=0 // pred_region
    _
  $region29: #{net_forward.5} parent=0 // pred_fallthru
    _
  %v27 = vld [vmem:[%s0] sm:$0xff]
  %v28 = vld [vmem:[%s0 + $0x8] sm:$0xff]
  %v29 = vld [vmem:[%s0 + $0x10] sm:$0xff]
  %v30 = vld [vmem:[%s0 + $0x18] sm:$0xff]
  %v31 = vld [vmem:[%s0 + $0x20] sm:$0xff]
  %v32 = vld [vmem:[%s0 + $0x28] sm:$0xff]
  %v33 = vld [vmem:[%s0 + $0x30] sm:$0xff]
  %v34 = vld [vmem:[%s0 + $0x38] sm:$0xff]
  %v35 = vld [vmem:[%s0 + $0x40] sm:$0xff]
  %v36 = vld [vmem:[%s0 + $0x48] sm:$0xff]
  %v37 = vld [vmem:[%s0 + $0x50] sm:$0xff]
  %v38 = vld [vmem:[%s0 + $0x58] sm:$0xff]
  %v39 = vld [vmem:[%s0 + $0x60] sm:$0xff]
  %v40 = vld [vmem:[%s0 + $0x68] sm:$0xff]
  %v41 = vld [vmem:[%s0 + $0x70] sm:$0xff]
  %v42 = vld [vmem:[%s0 + $0x78] sm:$0xff]
  %v43 = vld [vmem:[%s0 + $0x80] sm:$0xff]
  %v44 = vld [vmem:[%s0 + $0x88] sm:$0xff]
  %v45 = vld [vmem:[%s0 + $0x90] sm:$0xff]
  %v46 = vld [vmem:[%s0 + $0x98] sm:$0xff]
  %v47 = vld [vmem:[%s0 + $0xa0] sm:$0xff]
  %v48 = vld [vmem:[%s0 + $0xa8] sm:$0xff]
  %v49 = vld [vmem:[%s0 + $0xb0] sm:$0xff]
  %v50 = vld [vmem:[%s0 + $0xb8] sm:$0xff]
  %v51 = vld [vmem:[%s0 + $0xc0] sm:$0xff]
  %v52 = vld [vmem:[%s0 + $0xc8] sm:$0xff]
  %v53 = vld [vmem:[%s0 + $0xd0] sm:$0xff]
  %v54 = vld [vmem:[%s0 + $0xd8] sm:$0xff]
  %v55 = vld [vmem:[%s0 + $0xe0] sm:$0xff]
  %v56 = vld [vmem:[%s0 + $0xe8] sm:$0xff]
  %v57 = vld [vmem:[%s0 + $0xf0] sm:$0xff]
  %v58 = vld [vmem:[%s0 + $0xf8] sm:$0xff]
  %v59 = vld [vmem:[%s1] sm:$0xf]
  %v60 = vld [vmem:[%s1 + $0x4] sm:$0xf]
  %v61 = vld [vmem:[%s1 + $0x8] sm:$0xf]
  %v62 = vld [vmem:[%s1 + $0xc] sm:$0xf]
  %v63 = vld [vmem:[%s1 + $0x10] sm:$0xf]
  %v64 = vld [vmem:[%s1 + $0x14] sm:$0xf]
  %v65 = vld [vmem:[%s1 + $0x18] sm:$0xf]
  %v66 = vld [vmem:[%s1 + $0x1c] sm:$0xf]
  %v67 = vld [vmem:[%s1 + $0x20] sm:$0xf]
  %v68 = vld [vmem:[%s1 + $0x24] sm:$0xf]
  %v69 = vld [vmem:[%s1 + $0x28] sm:$0xf]
  %v70 = vld [vmem:[%s1 + $0x2c] sm:$0xf]
  %v71 = vld [vmem:[%s1 + $0x30] sm:$0xf]
  %v72 = vld [vmem:[%s1 + $0x34] sm:$0xf]
  %v73 = vld [vmem:[%s1 + $0x38] sm:$0xf]
  %v74 = vld [vmem:[%s1 + $0x3c] sm:$0xf]
  %v75 = vld [vmem:[%s1 + $0x40] sm:$0xf]
  %v76 = vld [vmem:[%s1 + $0x44] sm:$0xf]
  %v77 = vld [vmem:[%s1 + $0x48] sm:$0xf]
  %v78 = vld [vmem:[%s1 + $0x4c] sm:$0xf]
  %v79 = vld [vmem:[%s1 + $0x50] sm:$0xf]
  %v80 = vld [vmem:[%s1 + $0x54] sm:$0xf]
  %v81 = vld [vmem:[%s1 + $0x58] sm:$0xf]
  %v82 = vld [vmem:[%s1 + $0x5c] sm:$0xf]
  %v83 = vld [vmem:[%s1 + $0x60] sm:$0xf]
  %v84 = vld [vmem:[%s1 + $0x64] sm:$0xf]
  %v85 = vld [vmem:[%s1 + $0x68] sm:$0xf]
  %v86 = vld [vmem:[%s1 + $0x6c] sm:$0xf]
  %v87 = vld [vmem:[%s1 + $0x70] sm:$0xf]
  %v88 = vld [vmem:[%s1 + $0x74] sm:$0xf]
  %v89 = vld [vmem:[%s1 + $0x78] sm:$0xf]
  %v90 = vld [vmem:[%s1 + $0x7c] sm:$0xf]
  %v91 = vld [vmem:[%s1 + $0x80] sm:$0xf]
  %v92 = vld [vmem:[%s1 + $0x84] sm:$0xf]
  %v93 = vld [vmem:[%s1 + $0x88] sm:$0xf]
  %v94 = vld [vmem:[%s1 + $0x8c] sm:$0xf]
  %v95 = vld [vmem:[%s1 + $0x90] sm:$0xf]
  %v96 = vld [vmem:[%s1 + $0x94] sm:$0xf]
  %v97 = vld [vmem:[%s1 + $0x98] sm:$0xf]
  %v98 = vld [vmem:[%s1 + $0x9c] sm:$0xf]
  %v99 = vld [vmem:[%s1 + $0xa0] sm:$0xf]
  %v100 = vld [vmem:[%s1 + $0xa4] sm:$0xf]
  %v101 = vld [vmem:[%s1 + $0xa8] sm:$0xf]
  %v102 = vld [vmem:[%s1 + $0xac] sm:$0xf]
  %v103 = vld [vmem:[%s1 + $0xb0] sm:$0xf]
  %v104 = vld [vmem:[%s1 + $0xb4] sm:$0xf]
  %v105 = vld [vmem:[%s1 + $0xb8] sm:$0xf]
  %v106 = vld [vmem:[%s1 + $0xbc] sm:$0xf]
  %v107 = vld [vmem:[%s1 + $0xc0] sm:$0xf]
  %v108 = vld [vmem:[%s1 + $0xc4] sm:$0xf]
  %v109 = vld [vmem:[%s1 + $0xc8] sm:$0xf]
  %v110 = vld [vmem:[%s1 + $0xcc] sm:$0xf]
  %v111 = vld [vmem:[%s1 + $0xd0] sm:$0xf]
  %v112 = vld [vmem:[%s1 + $0xd4] sm:$0xf]
  %v113 = vld [vmem:[%s2] sm:$0x1]
  %v115 = vlaneseq
  %v116 = vshrl.u32 %v115, 7
  %v117 = vsub.s32 0, %v116
  %v118 = vrot.slane %v113, %v117
  %v152 = vunpack.c.l.b16 %v27
  %v153 = vunpack.c.h.b16 %v27
  %v154 = vunpack.c.l.b16 %v28
  %v155 = vunpack.c.h.b16 %v28
  %v156 = vunpack.c.l.b16 %v29
  %v157 = vunpack.c.h.b16 %v29
  %v158 = vunpack.c.l.b16 %v30
  %v159 = vunpack.c.h.b16 %v30
  %v160 = vunpack.c.l.b16 %v31
  %v161 = vunpack.c.h.b16 %v31
  %v162 = vunpack.c.l.b16 %v32
  %v163 = vunpack.c.h.b16 %v32
  %v164 = vunpack.c.l.b16 %v33
  %v165 = vunpack.c.h.b16 %v33
  %v166 = vunpack.c.l.b16 %v34
  %v167 = vunpack.c.h.b16 %v34
  %v168 = vunpack.c.l.b16 %v35
  %v169 = vunpack.c.h.b16 %v35
  %v170 = vunpack.c.l.b16 %v36
  %v171 = vunpack.c.h.b16 %v36
  %v172 = vunpack.c.l.b16 %v37
  %v173 = vunpack.c.h.b16 %v37
  %v174 = vunpack.c.l.b16 %v38
  %v175 = vunpack.c.h.b16 %v38
  %v176 = vunpack.c.l.b16 %v39
  %v177 = vunpack.c.h.b16 %v39
  %v178 = vunpack.c.l.b16 %v40
  %v179 = vunpack.c.h.b16 %v40
  %v180 = vunpack.c.l.b16 %v41
  %v181 = vunpack.c.h.b16 %v41
  %v182 = vunpack.c.l.b16 %v42
  %v183 = vunpack.c.h.b16 %v42
  %v184 = vunpack.c.l.b16 %v43
  %v185 = vunpack.c.h.b16 %v43
  %v186 = vunpack.c.l.b16 %v44
  %v187 = vunpack.c.h.b16 %v44
  %v188 = vunpack.c.l.b16 %v45
  %v189 = vunpack.c.h.b16 %v45
  %v190 = vunpack.c.l.b16 %v46
  %v191 = vunpack.c.h.b16 %v46
  %v192 = vunpack.c.l.b16 %v47
  %v193 = vunpack.c.h.b16 %v47
  %v194 = vunpack.c.l.b16 %v48
  %v195 = vunpack.c.h.b16 %v48
  %v196 = vunpack.c.l.b16 %v49
  %v197 = vunpack.c.h.b16 %v49
  %v198 = vunpack.c.l.b16 %v50
  %v199 = vunpack.c.h.b16 %v50
  %v200 = vunpack.c.l.b16 %v51
  %v201 = vunpack.c.h.b16 %v51
  %v202 = vunpack.c.l.b16 %v52
  %v203 = vunpack.c.h.b16 %v52
  %v204 = vunpack.c.l.b16 %v53
  %v205 = vunpack.c.h.b16 %v53
  %v206 = vunpack.c.l.b16 %v54
  %v207 = vunpack.c.h.b16 %v54
  %v208 = vunpack.c.l.b16 %v55
  %v209 = vunpack.c.h.b16 %v55
  %v210 = vunpack.c.l.b16 %v56
  %v211 = vunpack.c.h.b16 %v56
  %v212 = vunpack.c.l.b16 %v57
  %v213 = vunpack.c.h.b16 %v57
  %v214 = vunpack.c.l.b16 %v58
  %v215 = vunpack.c.h.b16 %v58
  %v216 = vpack.c.b16 %v156, %v152
  %v217 = vpack.c.b16 %v157, %v153
  %v218 = vpack.c.b16 %v158, %v154
  %v219 = vpack.c.b16 %v159, %v155
  %v220 = vpack.c.b16 %v164, %v160
  %v221 = vpack.c.b16 %v165, %v161
  %v222 = vpack.c.b16 %v166, %v162
  %v223 = vpack.c.b16 %v167, %v163
  %v224 = vpack.c.b16 %v172, %v168
  %v225 = vpack.c.b16 %v173, %v169
  %v226 = vpack.c.b16 %v174, %v170
  %v227 = vpack.c.b16 %v175, %v171
  %v228 = vpack.c.b16 %v180, %v176
  %v229 = vpack.c.b16 %v181, %v177
  %v230 = vpack.c.b16 %v182, %v178
  %v231 = vpack.c.b16 %v183, %v179
  %v232 = vpack.c.b16 %v188, %v184
  %v233 = vpack.c.b16 %v189, %v185
  %v234 = vpack.c.b16 %v190, %v186
  %v235 = vpack.c.b16 %v191, %v187
  %v236 = vpack.c.b16 %v196, %v192
  %v237 = vpack.c.b16 %v197, %v193
  %v238 = vpack.c.b16 %v198, %v194
  %v239 = vpack.c.b16 %v199, %v195
  %v240 = vpack.c.b16 %v204, %v200
  %v241 = vpack.c.b16 %v205, %v201
  %v242 = vpack.c.b16 %v206, %v202
  %v243 = vpack.c.b16 %v207, %v203
  %v244 = vpack.c.b16 %v212, %v208
  %v245 = vpack.c.b16 %v213, %v209
  %v246 = vpack.c.b16 %v214, %v210
  %v247 = vpack.c.b16 %v215, %v211
  %v326 = vunpack.c.l.b16 %v59
  %v327 = vunpack.c.l.b16 %v60
  %v328 = vunpack.c.l.b16 %v61
  %v329 = vunpack.c.l.b16 %v62
  %v330 = vunpack.c.l.b16 %v63
  %v331 = vunpack.c.l.b16 %v64
  %v332 = vunpack.c.l.b16 %v65
  %v333 = vunpack.c.l.b16 %v66
  %v334 = vunpack.c.l.b16 %v67
  %v335 = vunpack.c.l.b16 %v68
  %v336 = vunpack.c.l.b16 %v69
  %v337 = vunpack.c.l.b16 %v70
  %v338 = vunpack.c.l.b16 %v71
  %v339 = vunpack.c.l.b16 %v72
  %v340 = vunpack.c.l.b16 %v73
  %v341 = vunpack.c.l.b16 %v74
  %v342 = vunpack.c.l.b16 %v75
  %v343 = vunpack.c.l.b16 %v76
  %v344 = vunpack.c.l.b16 %v77
  %v345 = vunpack.c.l.b16 %v78
  %v346 = vunpack.c.l.b16 %v79
  %v347 = vunpack.c.l.b16 %v80
  %v348 = vunpack.c.l.b16 %v81
  %v349 = vunpack.c.l.b16 %v82
  %v350 = vunpack.c.l.b16 %v83
  %v351 = vunpack.c.l.b16 %v84
  %v352 = vunpack.c.l.b16 %v85
  %v353 = vunpack.c.l.b16 %v86
  %v354 = vunpack.c.l.b16 %v87
  %v355 = vunpack.c.l.b16 %v88
  %v356 = vunpack.c.l.b16 %v89
  %v357 = vunpack.c.l.b16 %v90
  %v358 = vunpack.c.l.b16 %v91
  %v359 = vunpack.c.l.b16 %v92
  %v360 = vunpack.c.l.b16 %v93
  %v361 = vunpack.c.l.b16 %v94
  %v362 = vunpack.c.l.b16 %v95
  %v363 = vunpack.c.l.b16 %v96
  %v364 = vunpack.c.l.b16 %v97
  %v365 = vunpack.c.l.b16 %v98
  %v366 = vunpack.c.l.b16 %v99
  %v367 = vunpack.c.l.b16 %v100
  %v368 = vunpack.c.l.b16 %v101
  %v369 = vunpack.c.l.b16 %v102
  %v370 = vunpack.c.l.b16 %v103
  %v371 = vunpack.c.l.b16 %v104
  %v372 = vunpack.c.l.b16 %v105
  %v373 = vunpack.c.l.b16 %v106
  %v374 = vunpack.c.l.b16 %v107
  %v375 = vunpack.c.l.b16 %v108
  %v376 = vunpack.c.l.b16 %v109
  %v377 = vunpack.c.l.b16 %v110
  %v378 = vunpack.c.l.b16 %v111
  %v379 = vunpack.c.l.b16 %v112
  %v380 = vpack.c.b16 %v327, %v326
  %v381 = vpack.c.b16 %v329, %v328
  %v382 = vpack.c.b16 %v331, %v330
  %v383 = vpack.c.b16 %v333, %v332
  %v384 = vpack.c.b16 %v335, %v334
  %v385 = vpack.c.b16 %v337, %v336
  %v386 = vpack.c.b16 %v339, %v338
  %v387 = vpack.c.b16 %v341, %v340
  %v388 = vpack.c.b16 %v343, %v342
  %v389 = vpack.c.b16 %v345, %v344
  %v390 = vpack.c.b16 %v347, %v346
  %v391 = vpack.c.b16 %v349, %v348
  %v392 = vpack.c.b16 %v351, %v350
  %v393 = vpack.c.b16 %v353, %v352
  %v394 = vpack.c.b16 %v355, %v354
  %v395 = vpack.c.b16 %v357, %v356
  %v396 = vpack.c.b16 %v359, %v358
  %v397 = vpack.c.b16 %v361, %v360
  %v398 = vpack.c.b16 %v363, %v362
  %v399 = vpack.c.b16 %v365, %v364
  %v400 = vpack.c.b16 %v367, %v366
  %v401 = vpack.c.b16 %v369, %v368
  %v402 = vpack.c.b16 %v371, %v370
  %v403 = vpack.c.b16 %v373, %v372
  %v404 = vpack.c.b16 %v375, %v374
  %v405 = vpack.c.b16 %v377, %v376
  %v406 = vpack.c.b16 %v379, %v378
  %vm434 = vcmask 392192
  %v436 = vsel %vm434, %v219, 0
  %v439 = vsel %vm434, %v223, 0
  %v442 = vsel %vm434, %v227, 0
  %v445 = vsel %vm434, %v231, 0
  %v448 = vsel %vm434, %v235, 0
  %v451 = vsel %vm434, %v239, 0
  %v454 = vsel %vm434, %v243, 0
  %v457 = vsel %vm434, %v247, 0
  %459 = vmatprep.subr.bf16.mxu0 0
  %460 = vmatpush1.bf16.msra.mxu0 %v380
  %461 = vmatprep.subr.bf16.mxu0 0
  %462 = vmatpush1.bf16.msra.mxu0 %v381
  %463 = vmatprep.subr.bf16.mxu0 0
  %464 = vmatpush1.bf16.msra.mxu0 %v382
  %465 = vmatprep.subr.bf16.mxu0 0
  %466 = vmatpush1.bf16.msra.mxu0 %v383
  %467 = vmatprep.subr.bf16.mxu0 0
  %468 = vmatpush1.bf16.msra.mxu0 %v384
  %469 = vmatprep.subr.bf16.mxu0 0
  %470 = vmatpush1.bf16.msra.mxu0 %v385
  %471 = vmatprep.subr.bf16.mxu0 0
  %472 = vmatpush1.bf16.msra.mxu0 %v386
  %473 = vmatprep.subr.bf16.mxu0 0
  %474 = vmatpush1.bf16.msra.mxu0 %v387
  %475 = vmatprep.subr.bf16.mxu0 0
  %476 = vmatpush1.bf16.msra.mxu0 %v388
  %477 = vmatprep.subr.bf16.mxu0 0
  %478 = vmatpush1.bf16.msra.mxu0 %v389
  %479 = vmatprep.subr.bf16.mxu0 0
  %480 = vmatpush1.bf16.msra.mxu0 %v390
  %481 = vmatprep.subr.bf16.mxu0 0
  %482 = vmatpush1.bf16.msra.mxu0 %v391
  %483 = vmatprep.subr.bf16.mxu0 0
  %484 = vmatpush1.bf16.msra.mxu0 %v392
  %485 = vmatprep.subr.bf16.mxu0 0
  %486 = vmatpush1.bf16.msra.mxu0 %v393
  %487 = vmatprep.subr.bf16.mxu0 0
  %488 = vmatpush1.bf16.msra.mxu0 %v394
  %489 = vmatprep.subr.bf16.mxu0 0
  %490 = vmatpush1.bf16.msra.mxu0 %v395
  %491 = vmatprep.mubr.bf16.mxu0 %v217
  %492 = vmatmul.mubr.bf16.gmra.mrb[0].mxu0 %v216
  %v493 = vpop.f32.mrb[0].mxu0
  %v494 = vadd.f32 %v118, %v493
  %v495 = vpop.f32.mrb[0].mxu0
  %v496 = vpop.f32.mrb[0].mxu0
  %v497 = vadd.f32 %v118, %v496
  %v498 = vpop.f32.mrb[0].mxu0
  %499 = vmatprep.mubr.bf16.mxu0 %v221
  %500 = vmatmul.mubr.bf16.gmra.mrb[0].mxu0 %v220
  %v501 = vpop.f32.mrb[0].mxu0
  %v502 = vadd.f32 %v118, %v501
  %v503 = vpop.f32.mrb[0].mxu0
  %v504 = vpop.f32.mrb[0].mxu0
  %v505 = vadd.f32 %v118, %v504
  %v506 = vpop.f32.mrb[0].mxu0
  %507 = vmatprep.mubr.bf16.mxu0 %v225
  %508 = vmatmul.mubr.bf16.gmra.mrb[0].mxu0 %v224
  %v509 = vpop.f32.mrb[0].mxu0
  %v510 = vadd.f32 %v118, %v509
  %v511 = vpop.f32.mrb[0].mxu0
  %v512 = vpop.f32.mrb[0].mxu0
  %v513 = vadd.f32 %v118, %v512
  %v514 = vpop.f32.mrb[0].mxu0
  %515 = vmatprep.mubr.bf16.mxu0 %v229
  %516 = vmatmul.mubr.bf16.gmra.mrb[0].mxu0 %v228
  %v517 = vpop.f32.mrb[0].mxu0
  %v518 = vadd.f32 %v118, %v517
  %v519 = vpop.f32.mrb[0].mxu0
  %v520 = vpop.f32.mrb[0].mxu0
  %v521 = vadd.f32 %v118, %v520
  %v522 = vpop.f32.mrb[0].mxu0
  %523 = vmatprep.mubr.bf16.mxu0 %v233
  %524 = vmatmul.mubr.bf16.gmra.mrb[0].mxu0 %v232
  %v525 = vpop.f32.mrb[0].mxu0
  %v526 = vadd.f32 %v118, %v525
  %v527 = vpop.f32.mrb[0].mxu0
  %v528 = vpop.f32.mrb[0].mxu0
  %v529 = vadd.f32 %v118, %v528
  %v530 = vpop.f32.mrb[0].mxu0
  %531 = vmatprep.mubr.bf16.mxu0 %v237
  %532 = vmatmul.mubr.bf16.gmra.mrb[0].mxu0 %v236
  %v533 = vpop.f32.mrb[0].mxu0
  %v534 = vadd.f32 %v118, %v533
  %v535 = vpop.f32.mrb[0].mxu0
  %v536 = vpop.f32.mrb[0].mxu0
  %v537 = vadd.f32 %v118, %v536
  %v538 = vpop.f32.mrb[0].mxu0
  %539 = vmatprep.mubr.bf16.mxu0 %v241
  %540 = vmatmul.mubr.bf16.gmra.mrb[0].mxu0 %v240
  %v541 = vpop.f32.mrb[0].mxu0
  %v542 = vadd.f32 %v118, %v541
  %v543 = vpop.f32.mrb[0].mxu0
  %v544 = vpop.f32.mrb[0].mxu0
  %v545 = vadd.f32 %v118, %v544
  %v546 = vpop.f32.mrb[0].mxu0
  %547 = vmatprep.mubr.bf16.mxu0 %v245
  %548 = vmatmul.mubr.bf16.gmra.mrb[0].mxu0 %v244
  %v549 = vpop.f32.mrb[0].mxu0
  %v550 = vadd.f32 %v118, %v549
  %v551 = vpop.f32.mrb[0].mxu0
  %v552 = vpop.f32.mrb[0].mxu0
  %v553 = vadd.f32 %v118, %v552
  %v554 = vpop.f32.mrb[0].mxu0
  %555 = vdwg.mxu0
  %556 = vmatprep.subr.bf16.mxu0 0
  %557 = vmatpush1.bf16.msra.mxu0 %v396
  %558 = vmatprep.subr.bf16.mxu0 0
  %559 = vmatpush1.bf16.msra.mxu0 %v397
  %560 = vmatprep.subr.bf16.mxu0 0
  %561 = vmatpush1.bf16.msra.mxu0 %v398
  %562 = vmatprep.subr.bf16.mxu0 0
  %563 = vmatpush1.bf16.msra.mxu0 %v399
  %564 = vmatprep.subr.bf16.mxu0 0
  %565 = vmatpush1.bf16.msra.mxu0 %v400
  %566 = vmatprep.subr.bf16.mxu0 0
  %567 = vmatpush1.bf16.msra.mxu0 %v401
  %568 = vmatprep.subr.bf16.mxu0 0
  %569 = vmatpush1.bf16.msra.mxu0 %v402
  %570 = vmatprep.subr.bf16.mxu0 0
  %571 = vmatpush1.bf16.msra.mxu0 %v403
  %572 = vmatprep.subr.bf16.mxu0 0
  %573 = vmatpush1.bf16.msra.mxu0 %v404
  %574 = vmatprep.subr.bf16.mxu0 0
  %575 = vmatpush1.bf16.msra.mxu0 %v405
  %576 = vmatprep.subr.bf16.mxu0 0
  %577 = vmatpush1.bf16.msra.mxu0 %v406
  %578 = vmatprep.subr.bf16.mxu0 0
  %579 = vmatpush1.bf16.msra.mxu0 0
  %580 = vmatprep.subr.bf16.mxu0 0
  %581 = vmatpush1.bf16.msra.mxu0 0
  %582 = vmatprep.subr.bf16.mxu0 0
  %583 = vmatpush1.bf16.msra.mxu0 0
  %584 = vmatprep.subr.bf16.mxu0 0
  %585 = vmatpush1.bf16.msra.mxu0 0
  %586 = vmatprep.subr.bf16.mxu0 0
  %587 = vmatpush1.bf16.msra.mxu0 0
  %588 = vmatprep.mubr.bf16.mxu0 %v436
  %589 = vmatmul.mubr.bf16.gmra.mrb[0].mxu0 %v218
  %v590 = vpop.f32.mrb[0].mxu0
  %v591 = vadd.f32 %v494, %v590
  %v592 = vpop.f32.mrb[0].mxu0
  %v593 = vpop.f32.mrb[0].mxu0
  %v594 = vadd.f32 %v497, %v593
  %v595 = vpop.f32.mrb[0].mxu0
  %596 = vmatprep.mubr.bf16.mxu0 %v439
  %597 = vmatmul.mubr.bf16.gmra.mrb[0].mxu0 %v222
  %v598 = vpop.f32.mrb[0].mxu0
  %v599 = vadd.f32 %v502, %v598
  %v600 = vpop.f32.mrb[0].mxu0
  %v601 = vpop.f32.mrb[0].mxu0
  %v602 = vadd.f32 %v505, %v601
  %v603 = vpop.f32.mrb[0].mxu0
  %604 = vmatprep.mubr.bf16.mxu0 %v442
  %605 = vmatmul.mubr.bf16.gmra.mrb[0].mxu0 %v226
  %v606 = vpop.f32.mrb[0].mxu0
  %v607 = vadd.f32 %v510, %v606
  %v608 = vpop.f32.mrb[0].mxu0
  %v609 = vpop.f32.mrb[0].mxu0
  %v610 = vadd.f32 %v513, %v609
  %v611 = vpop.f32.mrb[0].mxu0
  %612 = vmatprep.mubr.bf16.mxu0 %v445
  %613 = vmatmul.mubr.bf16.gmra.mrb[0].mxu0 %v230
  %v614 = vpop.f32.mrb[0].mxu0
  %v615 = vadd.f32 %v518, %v614
  %v616 = vpop.f32.mrb[0].mxu0
  %v617 = vpop.f32.mrb[0].mxu0
  %v618 = vadd.f32 %v521, %v617
  %v619 = vpop.f32.mrb[0].mxu0
  %620 = vmatprep.mubr.bf16.mxu0 %v448
  %621 = vmatmul.mubr.bf16.gmra.mrb[0].mxu0 %v234
  %v622 = vpop.f32.mrb[0].mxu0
  %v623 = vadd.f32 %v526, %v622
  %v624 = vpop.f32.mrb[0].mxu0
  %v625 = vpop.f32.mrb[0].mxu0
  %v626 = vadd.f32 %v529, %v625
  %v627 = vpop.f32.mrb[0].mxu0
  %628 = vmatprep.mubr.bf16.mxu0 %v451
  %629 = vmatmul.mubr.bf16.gmra.mrb[0].mxu0 %v238
  %v630 = vpop.f32.mrb[0].mxu0
  %v631 = vadd.f32 %v534, %v630
  %v632 = vpop.f32.mrb[0].mxu0
  %v633 = vpop.f32.mrb[0].mxu0
  %v634 = vadd.f32 %v537, %v633
  %v635 = vpop.f32.mrb[0].mxu0
  %636 = vmatprep.mubr.bf16.mxu0 %v454
  %637 = vmatmul.mubr.bf16.gmra.mrb[0].mxu0 %v242
  %v638 = vpop.f32.mrb[0].mxu0
  %v639 = vadd.f32 %v542, %v638
  %v640 = vpop.f32.mrb[0].mxu0
  %v641 = vpop.f32.mrb[0].mxu0
  %v642 = vadd.f32 %v545, %v641
  %v643 = vpop.f32.mrb[0].mxu0
  %644 = vmatprep.mubr.bf16.mxu0 %v457
  %645 = vmatmul.mubr.bf16.gmra.mrb[0].mxu0 %v246
  %v646 = vpop.f32.mrb[0].mxu0
  %v647 = vadd.f32 %v550, %v646
  %v648 = vpop.f32.mrb[0].mxu0
  %v649 = vpop.f32.mrb[0].mxu0
  %v650 = vadd.f32 %v553, %v649
  %v651 = vpop.f32.mrb[0].mxu0
  %652 = vdwg.mxu0
  %v653 = vmax.f32 %v591, 0.0
  %v654 = vmax.f32 %v594, 0.0
  %v655 = vmax.f32 %v599, 0.0
  %v656 = vmax.f32 %v602, 0.0
  %v657 = vmax.f32 %v607, 0.0
  %v658 = vmax.f32 %v610, 0.0
  %v659 = vmax.f32 %v615, 0.0
  %v660 = vmax.f32 %v618, 0.0
  %v661 = vmax.f32 %v623, 0.0
  %v662 = vmax.f32 %v626, 0.0
  %v663 = vmax.f32 %v631, 0.0
  %v664 = vmax.f32 %v634, 0.0
  %v665 = vmax.f32 %v639, 0.0
  %v666 = vmax.f32 %v642, 0.0
  %v667 = vmax.f32 %v647, 0.0
  %v668 = vmax.f32 %v650, 0.0
  %vm669 = vcmask 261120
  %670 = vst.msk [vmem:[#allocation2] sm:$0xff] %vm669, %v653
  %671 = vst.msk [vmem:[#allocation2 + $0x8] sm:$0xff] %vm669, %v654
  %672 = vst.msk [vmem:[#allocation2 + $0x10] sm:$0xff] %vm669, %v655
  %673 = vst.msk [vmem:[#allocation2 + $0x18] sm:$0xff] %vm669, %v656
  %674 = vst.msk [vmem:[#allocation2 + $0x20] sm:$0xff] %vm669, %v657
  %675 = vst.msk [vmem:[#allocation2 + $0x28] sm:$0xff] %vm669, %v658
  %676 = vst.msk [vmem:[#allocation2 + $0x30] sm:$0xff] %vm669, %v659
  %677 = vst.msk [vmem:[#allocation2 + $0x38] sm:$0xff] %vm669, %v660
  %678 = vst.msk [vmem:[#allocation2 + $0x40] sm:$0xff] %vm669, %v661
  %679 = vst.msk [vmem:[#allocation2 + $0x48] sm:$0xff] %vm669, %v662
  %680 = vst.msk [vmem:[#allocation2 + $0x50] sm:$0xff] %vm669, %v663
  %681 = vst.msk [vmem:[#allocation2 + $0x58] sm:$0xff] %vm669, %v664
  %682 = vst.msk [vmem:[#allocation2 + $0x60] sm:$0xff] %vm669, %v665
  %683 = vst.msk [vmem:[#allocation2 + $0x68] sm:$0xff] %vm669, %v666
  %684 = vst.msk [vmem:[#allocation2 + $0x70] sm:$0xff] %vm669, %v667
  %685 = vst.msk [vmem:[#allocation2 + $0x78] sm:$0xff] %vm669, %v668
  %v686 = vld [vmem:[#allocation2] ss:$16 sm:$0x3]
  %v687 = vld [vmem:[#allocation2] ss:$16 sm:$0xc]
  %v688 = vor.u32 %v686, %v687
  %v689 = vld [vmem:[#allocation2] ss:$16 sm:$0x30]
  %v690 = vor.u32 %v688, %v689
  %v691 = vld [vmem:[#allocation2] ss:$16 sm:$0xc0]
  %v692 = vor.u32 %v690, %v691
  %s693 = scalar_lea.vmem [#allocation2], 1
  %v694 = vld [vmem:[%s693] ss:$16 sm:$0x3]
  %v695 = vld [vmem:[%s693] ss:$16 sm:$0xc]
  %v696 = vor.u32 %v694, %v695
  %v697 = vld [vmem:[%s693] ss:$16 sm:$0x30]
  %v698 = vor.u32 %v696, %v697
  %v699 = vld [vmem:[%s693] ss:$16 sm:$0xc0]
  %v700 = vor.u32 %v698, %v699
  %s701 = scalar_lea.vmem [#allocation2], 2
  %v702 = vld [vmem:[%s701] ss:$16 sm:$0x3]
  %v703 = vld [vmem:[%s701] ss:$16 sm:$0xc]
  %v704 = vor.u32 %v702, %v703
  %v705 = vld [vmem:[%s701] ss:$16 sm:$0x30]
  %v706 = vor.u32 %v704, %v705
  %v707 = vld [vmem:[%s701] ss:$16 sm:$0xc0]
  %v708 = vor.u32 %v706, %v707
  %s709 = scalar_lea.vmem [#allocation2], 3
  %v710 = vld [vmem:[%s709] ss:$16 sm:$0x3]
  %v711 = vld [vmem:[%s709] ss:$16 sm:$0xc]
  %v712 = vor.u32 %v710, %v711
  %v713 = vld [vmem:[%s709] ss:$16 sm:$0x30]
  %v714 = vor.u32 %v712, %v713
  %v715 = vld [vmem:[%s709] ss:$16 sm:$0xc0]
  %v716 = vor.u32 %v714, %v715
  %s717 = scalar_lea.vmem [#allocation2], 4
  %v718 = vld [vmem:[%s717] ss:$16 sm:$0x3]
  %v719 = vld [vmem:[%s717] ss:$16 sm:$0xc]
  %v720 = vor.u32 %v718, %v719
  %v721 = vld [vmem:[%s717] ss:$16 sm:$0x30]
  %v722 = vor.u32 %v720, %v721
  %v723 = vld [vmem:[%s717] ss:$16 sm:$0xc0]
  %v724 = vor.u32 %v722, %v723
  %s725 = scalar_lea.vmem [#allocation2], 5
  %v726 = vld [vmem:[%s725] ss:$16 sm:$0x3]
  %v727 = vld [vmem:[%s725] ss:$16 sm:$0xc]
  %v728 = vor.u32 %v726, %v727
  %v729 = vld [vmem:[%s725] ss:$16 sm:$0x30]
  %v730 = vor.u32 %v728, %v729
  %v731 = vld [vmem:[%s725] ss:$16 sm:$0xc0]
  %v732 = vor.u32 %v730, %v731
  %s733 = scalar_lea.vmem [#allocation2], 6
  %v734 = vld [vmem:[%s733] ss:$16 sm:$0x3]
  %v735 = vld [vmem:[%s733] ss:$16 sm:$0xc]
  %v736 = vor.u32 %v734, %v735
  %v737 = vld [vmem:[%s733] ss:$16 sm:$0x30]
  %v738 = vor.u32 %v736, %v737
  %v739 = vld [vmem:[%s733] ss:$16 sm:$0xc0]
  %v740 = vor.u32 %v738, %v739
  %s741 = scalar_lea.vmem [#allocation2], 7
  %v742 = vld [vmem:[%s741] ss:$16 sm:$0x3]
  %v743 = vld [vmem:[%s741] ss:$16 sm:$0xc]
  %v744 = vor.u32 %v742, %v743
  %v745 = vld [vmem:[%s741] ss:$16 sm:$0x30]
  %v746 = vor.u32 %v744, %v745
  %v747 = vld [vmem:[%s741] ss:$16 sm:$0xc0]
  %v748 = vor.u32 %v746, %v747
  %s749 = scalar_lea.vmem [#allocation2], 8
  %v750 = vld [vmem:[%s749] ss:$16 sm:$0x3]
  %v751 = vld [vmem:[%s749] ss:$16 sm:$0xc]
  %v752 = vor.u32 %v750, %v751
  %v753 = vld [vmem:[%s749] ss:$16 sm:$0x30]
  %v754 = vor.u32 %v752, %v753
  %v755 = vld [vmem:[%s749] ss:$16 sm:$0xc0]
  %v756 = vor.u32 %v754, %v755
  %s757 = scalar_lea.vmem [#allocation2], 9
  %v758 = vld [vmem:[%s757] ss:$16 sm:$0x3]
  %v759 = vld [vmem:[%s757] ss:$16 sm:$0xc]
  %v760 = vor.u32 %v758, %v759
  %v761 = vld [vmem:[%s757] ss:$16 sm:$0x30]
  %v762 = vor.u32 %v760, %v761
  %v763 = vld [vmem:[%s757] ss:$16 sm:$0xc0]
  %v764 = vor.u32 %v762, %v763
  %s765 = scalar_lea.vmem [#allocation2], 10
  %v766 = vld [vmem:[%s765] ss:$16 sm:$0x3]
  %v767 = vld [vmem:[%s765] ss:$16 sm:$0xc]
  %v768 = vor.u32 %v766, %v767
  %v769 = vld [vmem:[%s765] ss:$16 sm:$0x30]
  %v770 = vor.u32 %v768, %v769
  %v771 = vld [vmem:[%s765] ss:$16 sm:$0xc0]
  %v772 = vor.u32 %v770, %v771
  %s773 = scalar_lea.vmem [#allocation2], 11
  %v774 = vld [vmem:[%s773] ss:$16 sm:$0x3]
  %v775 = vld [vmem:[%s773] ss:$16 sm:$0xc]
  %v776 = vor.u32 %v774, %v775
  %v777 = vld [vmem:[%s773] ss:$16 sm:$0x30]
  %v778 = vor.u32 %v776, %v777
  %v779 = vld [vmem:[%s773] ss:$16 sm:$0xc0]
  %v780 = vor.u32 %v778, %v779
  %s781 = scalar_lea.vmem [#allocation2], 12
  %v782 = vld [vmem:[%s781] ss:$16 sm:$0x3]
  %v783 = vld [vmem:[%s781] ss:$16 sm:$0xc]
  %v784 = vor.u32 %v782, %v783
  %v785 = vld [vmem:[%s781] ss:$16 sm:$0x30]
  %v786 = vor.u32 %v784, %v785
  %v787 = vld [vmem:[%s781] ss:$16 sm:$0xc0]
  %v788 = vor.u32 %v786, %v787
  %s789 = scalar_lea.vmem [#allocation2], 13
  %v790 = vld [vmem:[%s789] ss:$16 sm:$0x3]
  %v791 = vld [vmem:[%s789] ss:$16 sm:$0xc]
  %v792 = vor.u32 %v790, %v791
  %v793 = vld [vmem:[%s789] ss:$16 sm:$0x30]
  %v794 = vor.u32 %v792, %v793
  %v795 = vld [vmem:[%s789] ss:$16 sm:$0xc0]
  %v796 = vor.u32 %v794, %v795
  %s797 = scalar_lea.vmem [#allocation2], 14
  %v798 = vld [vmem:[%s797] ss:$16 sm:$0x3]
  %v799 = vld [vmem:[%s797] ss:$16 sm:$0xc]
  %v800 = vor.u32 %v798, %v799
  %v801 = vld [vmem:[%s797] ss:$16 sm:$0x30]
  %v802 = vor.u32 %v800, %v801
  %v803 = vld [vmem:[%s797] ss:$16 sm:$0xc0]
  %v804 = vor.u32 %v802, %v803
  %s805 = scalar_lea.vmem [#allocation2], 15
  %v806 = vld [vmem:[%s805] ss:$16 sm:$0x3]
  %v807 = vld [vmem:[%s805] ss:$16 sm:$0xc]
  %v808 = vor.u32 %v806, %v807
  %v809 = vld [vmem:[%s805] ss:$16 sm:$0x30]
  %v810 = vor.u32 %v808, %v809
  %v811 = vld [vmem:[%s805] ss:$16 sm:$0xc0]
  %v812 = vor.u32 %v810, %v811
  %v813 = vmax.f32 %v692, %v700
  %v814 = vmax.f32 %v724, %v732
  %v815 = vmax.f32 %v813, %v814
  %v816 = vmax.f32 %v708, %v716
  %v817 = vmax.f32 %v740, %v748
  %v818 = vmax.f32 %v816, %v817
  %v819 = vmax.f32 %v756, %v764
  %v820 = vmax.f32 %v788, %v796
  %v821 = vmax.f32 %v819, %v820
  %v822 = vmax.f32 %v772, %v780
  %v823 = vmax.f32 %v804, %v812
  %v824 = vmax.f32 %v822, %v823
  %v825 = vmax.f32 %v815, %v818
  %v826 = vmax.f32 %v821, %v824
  %v827 = vmax.f32 %v825, %v826
  %829 = vrot.lane.b32.xlu0 %v815, 32
  %v830 = vpop.permute.xlu0 %829
  %833 = vrot.lane.b32.xlu0 %v818, 64
  %v834 = vpop.permute.xlu0 %833
  %837 = vrot.lane.b32.xlu0 %v821, 96
  %v838 = vpop.permute.xlu0 %837
  %841 = vrot.lane.b32.xlu0 %v692, 32
  %v842 = vpop.permute.xlu0 %841
  %845 = vrot.lane.b32.xlu0 %v700, 64
  %v846 = vpop.permute.xlu0 %845
  %849 = vrot.lane.b32.xlu0 %v708, 96
  %v850 = vpop.permute.xlu0 %849
  %853 = vrot.lane.b32.xlu0 %v724, 32
  %v854 = vpop.permute.xlu0 %853
  %857 = vrot.lane.b32.xlu0 %v732, 64
  %v858 = vpop.permute.xlu0 %857
  %861 = vrot.lane.b32.xlu0 %v740, 96
  %v862 = vpop.permute.xlu0 %861
  %865 = vrot.lane.b32.xlu0 %v756, 32
  %v866 = vpop.permute.xlu0 %865
  %869 = vrot.lane.b32.xlu0 %v764, 64
  %v870 = vpop.permute.xlu0 %869
  %873 = vrot.lane.b32.xlu0 %v772, 96
  %v874 = vpop.permute.xlu0 %873
  %v876 = vsel %vm669, %v827, %v830
  %vm877 = vcmask 523264
  %v878 = vsel %vm877, %v876, %v834
  %vm879 = vcmask 785408
  %v880 = vsel %vm879, %v878, %v838
  %v881 = vsel %vm669, %v824, %v842
  %v882 = vsel %vm877, %v881, %v846
  %v883 = vsel %vm879, %v882, %v850
  %v884 = vsel %vm669, %v716, %v854
  %v885 = vsel %vm877, %v884, %v858
  %v886 = vsel %vm879, %v885, %v862
  %v887 = vsel %vm669, %v748, %v866
  %v888 = vsel %vm877, %v887, %v870
  %v889 = vsel %vm879, %v888, %v874
  %891 = vrot.lane.b32.xlu0 %v788, 32
  %v892 = vpop.permute.xlu0 %891
  %895 = vrot.lane.b32.xlu0 %v796, 64
  %v896 = vpop.permute.xlu0 %895
  %899 = vrot.lane.b32.xlu0 %v804, 96
  %v900 = vpop.permute.xlu0 %899
  %v902 = vsel %vm669, %v780, %v892
  %v903 = vsel %vm877, %v902, %v896
  %v904 = vsel %vm879, %v903, %v900
  %v905 = vpack.c.bf16 %v880, %v880
  %v906 = vpack.c.bf16 %v883, %v883
  %v907 = vpack.c.bf16 %v886, %v886
  %v908 = vpack.c.bf16 %v889, %v889
  %v909 = vpack.c.bf16 %v904, %v904
  %v910 = vpack.c.bf16 %v812, %v812
  %v911 = vld [vmem:[%s3] sm:$0xff]
  %v912 = vld [vmem:[%s3 + $0x8] sm:$0xff]
  %v913 = vld [vmem:[%s3 + $0x10] sm:$0xff]
  %v914 = vld [vmem:[%s3 + $0x18] sm:$0xff]
  %v915 = vld [vmem:[%s3 + $0x20] sm:$0xff]
  %v916 = vld [vmem:[%s3 + $0x28] sm:$0xff]
  %v917 = vld [vmem:[%s3 + $0x30] sm:$0xff]
  %v918 = vld [vmem:[%s3 + $0x38] sm:$0xff]
  %v919 = vld [vmem:[%s3 + $0x40] sm:$0xff]
  %v920 = vld [vmem:[%s3 + $0x48] sm:$0xff]
  %v921 = vld [vmem:[%s3 + $0x50] sm:$0xff]
  %v922 = vld [vmem:[%s3 + $0x58] sm:$0xff]
  %v923 = vld [vmem:[%s3 + $0x60] sm:$0xff]
  %v924 = vld [vmem:[%s3 + $0x68] sm:$0xff]
  %v925 = vld [vmem:[%s3 + $0x70] sm:$0xff]
  %v926 = vld [vmem:[%s3 + $0x78] sm:$0xff]
  %v927 = vld [vmem:[%s3 + $0x80] sm:$0xff]
  %v928 = vld [vmem:[%s3 + $0x88] sm:$0xff]
  %v929 = vld [vmem:[%s3 + $0x90] sm:$0xff]
  %v930 = vld [vmem:[%s3 + $0x98] sm:$0xff]
  %v931 = vld [vmem:[%s3 + $0xa0] sm:$0xff]
  %v932 = vld [vmem:[%s3 + $0xa8] sm:$0xff]
  %v933 = vld [vmem:[%s3 + $0xb0] sm:$0xff]
  %v934 = vld [vmem:[%s3 + $0xb8] sm:$0xff]
  %v935 = vld [vmem:[%s3 + $0xc0] sm:$0xff]
  %v936 = vld [vmem:[%s3 + $0xc8] sm:$0xff]
  %v937 = vld [vmem:[%s3 + $0xd0] sm:$0xff]
  %v938 = vld [vmem:[%s3 + $0xd8] sm:$0xff]
  %v939 = vld [vmem:[%s3 + $0xe0] sm:$0xff]
  %v940 = vld [vmem:[%s3 + $0xe8] sm:$0xff]
  %v941 = vld [vmem:[%s3 + $0xf0] sm:$0xff]
  %v942 = vld [vmem:[%s3 + $0xf8] sm:$0xff]
  %v943 = vld [vmem:[%s3 + $0x100] sm:$0xff]
  %v944 = vld [vmem:[%s3 + $0x108] sm:$0xff]
  %v945 = vld [vmem:[%s3 + $0x110] sm:$0xff]
  %v946 = vld [vmem:[%s3 + $0x118] sm:$0xff]
  %v947 = vld [vmem:[%s3 + $0x120] sm:$0xff]
  %v948 = vld [vmem:[%s3 + $0x128] sm:$0xff]
  %v949 = vld [vmem:[%s3 + $0x130] sm:$0xff]
  %v950 = vld [vmem:[%s3 + $0x138] sm:$0xff]
  %v951 = vld [vmem:[%s3 + $0x140] sm:$0xff]
  %v952 = vld [vmem:[%s3 + $0x148] sm:$0xff]
  %v953 = vld [vmem:[%s3 + $0x150] sm:$0xff]
  %v954 = vld [vmem:[%s3 + $0x158] sm:$0xff]
  %v955 = vld [vmem:[%s3 + $0x160] sm:$0xff]
  %v956 = vld [vmem:[%s3 + $0x168] sm:$0xff]
  %v957 = vld [vmem:[%s3 + $0x170] sm:$0xff]
  %v958 = vld [vmem:[%s3 + $0x178] sm:$0xff]
  %v959 = vld [vmem:[%s3 + $0x180] sm:$0xff]
  %v960 = vld [vmem:[%s3 + $0x188] sm:$0xff]
  %v961 = vld [vmem:[%s3 + $0x190] sm:$0xff]
  %v962 = vld [vmem:[%s3 + $0x198] sm:$0xff]
  %v963 = vld [vmem:[%s3 + $0x1a0] sm:$0xff]
  %v964 = vld [vmem:[%s3 + $0x1a8] sm:$0xff]
  %v965 = vld [vmem:[%s3 + $0x1b0] sm:$0xff]
  %v966 = vld [vmem:[%s3 + $0x1b8] sm:$0xff]
  %v967 = vld [vmem:[%s3 + $0x1c0] sm:$0xff]
  %v968 = vld [vmem:[%s3 + $0x1c8] sm:$0xff]
  %v969 = vld [vmem:[%s3 + $0x1d0] sm:$0xff]
  %v970 = vld [vmem:[%s3 + $0x1d8] sm:$0xff]
  %v971 = vld [vmem:[%s3 + $0x1e0] sm:$0xff]
  %v972 = vld [vmem:[%s3 + $0x1e8] sm:$0xff]
  %v973 = vld [vmem:[%s3 + $0x1f0] sm:$0xff]
  %v974 = vld [vmem:[%s3 + $0x1f8] sm:$0xff]
  %v975 = vld [vmem:[%s3 + $0x200] sm:$0xff]
  %v976 = vld [vmem:[%s3 + $0x208] sm:$0xff]
  %v977 = vld [vmem:[%s3 + $0x210] sm:$0xff]
  %v978 = vld [vmem:[%s3 + $0x218] sm:$0xff]
  %v979 = vld [vmem:[%s3 + $0x220] sm:$0xff]
  %v980 = vld [vmem:[%s3 + $0x228] sm:$0xff]
  %v981 = vld [vmem:[%s3 + $0x230] sm:$0xff]
  %v982 = vld [vmem:[%s3 + $0x238] sm:$0xff]
  %v983 = vld [vmem:[%s3 + $0x240] sm:$0xff]
  %v984 = vld [vmem:[%s3 + $0x248] sm:$0xff]
  %v985 = vld [vmem:[%s3 + $0x250] sm:$0xff]
  %v986 = vld [vmem:[%s3 + $0x258] sm:$0xff]
  %v987 = vld [vmem:[%s3 + $0x260] sm:$0xff]
  %v988 = vld [vmem:[%s3 + $0x268] sm:$0xff]
  %v989 = vld [vmem:[%s3 + $0x270] sm:$0xff]
  %v990 = vld [vmem:[%s3 + $0x278] sm:$0xff]
  %v991 = vld [vmem:[%s3 + $0x280] sm:$0xff]
  %v992 = vld [vmem:[%s3 + $0x288] sm:$0xff]
  %v993 = vld [vmem:[%s3 + $0x290] sm:$0xff]
  %v994 = vld [vmem:[%s3 + $0x298] sm:$0xff]
  %v995 = vld [vmem:[%s4] sm:$0x3]
  %v997 = vlaneseq
  %v998 = vshrl.u32 %v997, 7
  %v999 = vsub.s32 0, %v998
  %v1000 = vrot.slane %v995, %v999
  %v1001 = vlaneseq
  %v1002 = vshrl.u32 %v1001, 7
  %v1003 = vsub.s32 1, %v1002
  %v1004 = vrot.slane %v995, %v1003
  %v1091 = vunpack.c.l.b16 %v911
  %v1092 = vunpack.c.h.b16 %v911
  %v1093 = vunpack.c.l.b16 %v912
  %v1094 = vunpack.c.h.b16 %v912
  %v1095 = vunpack.c.l.b16 %v913
  %v1096 = vunpack.c.h.b16 %v913
  %v1097 = vunpack.c.l.b16 %v914
  %v1098 = vunpack.c.h.b16 %v914
  %v1099 = vunpack.c.l.b16 %v915
  %v1100 = vunpack.c.h.b16 %v915
  %v1101 = vunpack.c.l.b16 %v916
  %v1102 = vunpack.c.h.b16 %v916
  %v1103 = vunpack.c.l.b16 %v917
  %v1104 = vunpack.c.h.b16 %v917
  %v1105 = vunpack.c.l.b16 %v918
  %v1106 = vunpack.c.h.b16 %v918
  %v1107 = vunpack.c.l.b16 %v919
  %v1108 = vunpack.c.h.b16 %v919
  %v1109 = vunpack.c.l.b16 %v920
  %v1110 = vunpack.c.h.b16 %v920
  %v1111 = vunpack.c.l.b16 %v921
  %v1112 = vunpack.c.h.b16 %v921
  %v1113 = vunpack.c.l.b16 %v922
  %v1114 = vunpack.c.h.b16 %v922
  %v1115 = vunpack.c.l.b16 %v923
  %v1116 = vunpack.c.h.b16 %v923
  %v1117 = vunpack.c.l.b16 %v924
  %v1118 = vunpack.c.h.b16 %v924
  %v1119 = vunpack.c.l.b16 %v925
  %v1120 = vunpack.c.h.b16 %v925
  %v1121 = vunpack.c.l.b16 %v926
  %v1122 = vunpack.c.h.b16 %v926
  %v1123 = vunpack.c.l.b16 %v927
  %v1124 = vunpack.c.h.b16 %v927
  %v1125 = vunpack.c.l.b16 %v928
  %v1126 = vunpack.c.h.b16 %v928
  %v1127 = vunpack.c.l.b16 %v929
  %v1128 = vunpack.c.h.b16 %v929
  %v1129 = vunpack.c.l.b16 %v930
  %v1130 = vunpack.c.h.b16 %v930
  %v1131 = vunpack.c.l.b16 %v931
  %v1132 = vunpack.c.h.b16 %v931
  %v1133 = vunpack.c.l.b16 %v932
  %v1134 = vunpack.c.h.b16 %v932
  %v1135 = vunpack.c.l.b16 %v933
  %v1136 = vunpack.c.h.b16 %v933
  %v1137 = vunpack.c.l.b16 %v934
  %v1138 = vunpack.c.h.b16 %v934
  %v1139 = vunpack.c.l.b16 %v935
  %v1140 = vunpack.c.h.b16 %v935
  %v1141 = vunpack.c.l.b16 %v936
  %v1142 = vunpack.c.h.b16 %v936
  %v1143 = vunpack.c.l.b16 %v937
  %v1144 = vunpack.c.h.b16 %v937
  %v1145 = vunpack.c.l.b16 %v938
  %v1146 = vunpack.c.h.b16 %v938
  %v1147 = vunpack.c.l.b16 %v939
  %v1148 = vunpack.c.h.b16 %v939
  %v1149 = vunpack.c.l.b16 %v940
  %v1150 = vunpack.c.h.b16 %v940
  %v1151 = vunpack.c.l.b16 %v941
  %v1152 = vunpack.c.h.b16 %v941
  %v1153 = vunpack.c.l.b16 %v942
  %v1154 = vunpack.c.h.b16 %v942
  %v1155 = vunpack.c.l.b16 %v943
  %v1156 = vunpack.c.h.b16 %v943
  %v1157 = vunpack.c.l.b16 %v944
  %v1158 = vunpack.c.h.b16 %v944
  %v1159 = vunpack.c.l.b16 %v945
  %v1160 = vunpack.c.h.b16 %v945
  %v1161 = vunpack.c.l.b16 %v946
  %v1162 = vunpack.c.h.b16 %v946
  %v1163 = vunpack.c.l.b16 %v947
  %v1164 = vunpack.c.h.b16 %v947
  %v1165 = vunpack.c.l.b16 %v948
  %v1166 = vunpack.c.h.b16 %v948
  %v1167 = vunpack.c.l.b16 %v949
  %v1168 = vunpack.c.h.b16 %v949
  %v1169 = vunpack.c.l.b16 %v950
  %v1170 = vunpack.c.h.b16 %v950
  %v1171 = vunpack.c.l.b16 %v951
  %v1172 = vunpack.c.h.b16 %v951
  %v1173 = vunpack.c.l.b16 %v952
  %v1174 = vunpack.c.h.b16 %v952
  %v1175 = vunpack.c.l.b16 %v953
  %v1176 = vunpack.c.h.b16 %v953
  %v1177 = vunpack.c.l.b16 %v954
  %v1178 = vunpack.c.h.b16 %v954
  %v1179 = vunpack.c.l.b16 %v955
  %v1180 = vunpack.c.h.b16 %v955
  %v1181 = vunpack.c.l.b16 %v956
  %v1182 = vunpack.c.h.b16 %v956
  %v1183 = vunpack.c.l.b16 %v957
  %v1184 = vunpack.c.h.b16 %v957
  %v1185 = vunpack.c.l.b16 %v958
  %v1186 = vunpack.c.h.b16 %v958
  %v1187 = vunpack.c.l.b16 %v959
  %v1188 = vunpack.c.h.b16 %v959
  %v1189 = vunpack.c.l.b16 %v960
  %v1190 = vunpack.c.h.b16 %v960
  %v1191 = vunpack.c.l.b16 %v961
  %v1192 = vunpack.c.h.b16 %v961
  %v1193 = vunpack.c.l.b16 %v962
  %v1194 = vunpack.c.h.b16 %v962
  %v1195 = vunpack.c.l.b16 %v963
  %v1196 = vunpack.c.h.b16 %v963
  %v1197 = vunpack.c.l.b16 %v964
  %v1198 = vunpack.c.h.b16 %v964
  %v1199 = vunpack.c.l.b16 %v965
  %v1200 = vunpack.c.h.b16 %v965
  %v1201 = vunpack.c.l.b16 %v966
  %v1202 = vunpack.c.h.b16 %v966
  %v1203 = vunpack.c.l.b16 %v967
  %v1204 = vunpack.c.h.b16 %v967
  %v1205 = vunpack.c.l.b16 %v968
  %v1206 = vunpack.c.h.b16 %v968
  %v1207 = vunpack.c.l.b16 %v969
  %v1208 = vunpack.c.h.b16 %v969
  %v1209 = vunpack.c.l.b16 %v970
  %v1210 = vunpack.c.h.b16 %v970
  %v1211 = vunpack.c.l.b16 %v971
  %v1212 = vunpack.c.h.b16 %v971
  %v1213 = vunpack.c.l.b16 %v972
  %v1214 = vunpack.c.h.b16 %v972
  %v1215 = vunpack.c.l.b16 %v973
  %v1216 = vunpack.c.h.b16 %v973
  %v1217 = vunpack.c.l.b16 %v974
  %v1218 = vunpack.c.h.b16 %v974
  %v1219 = vunpack.c.l.b16 %v975
  %v1220 = vunpack.c.h.b16 %v975
  %v1221 = vunpack.c.l.b16 %v976
  %v1222 = vunpack.c.h.b16 %v976
  %v1223 = vunpack.c.l.b16 %v977
  %v1224 = vunpack.c.h.b16 %v977
  %v1225 = vunpack.c.l.b16 %v978
  %v1226 = vunpack.c.h.b16 %v978
  %v1227 = vunpack.c.l.b16 %v979
  %v1228 = vunpack.c.h.b16 %v979
  %v1229 = vunpack.c.l.b16 %v980
  %v1230 = vunpack.c.h.b16 %v980
  %v1231 = vunpack.c.l.b16 %v981
  %v1232 = vunpack.c.h.b16 %v981
  %v1233 = vunpack.c.l.b16 %v982
  %v1234 = vunpack.c.h.b16 %v982
  %v1235 = vunpack.c.l.b16 %v983
  %v1236 = vunpack.c.h.b16 %v983
  %v1237 = vunpack.c.l.b16 %v984
  %v1238 = vunpack.c.h.b16 %v984
  %v1239 = vunpack.c.l.b16 %v985
  %v1240 = vunpack.c.h.b16 %v985
  %v1241 = vunpack.c.l.b16 %v986
  %v1242 = vunpack.c.h.b16 %v986
  %v1243 = vunpack.c.l.b16 %v987
  %v1244 = vunpack.c.h.b16 %v987
  %v1245 = vunpack.c.l.b16 %v988
  %v1246 = vunpack.c.h.b16 %v988
  %v1247 = vunpack.c.l.b16 %v989
  %v1248 = vunpack.c.h.b16 %v989
  %v1249 = vunpack.c.l.b16 %v990
  %v1250 = vunpack.c.h.b16 %v990
  %v1251 = vunpack.c.l.b16 %v991
  %v1252 = vunpack.c.h.b16 %v991
  %v1253 = vunpack.c.l.b16 %v992
  %v1254 = vunpack.c.h.b16 %v992
  %v1255 = vunpack.c.l.b16 %v993
  %v1256 = vunpack.c.h.b16 %v993
  %v1257 = vunpack.c.l.b16 %v994
  %v1258 = vunpack.c.h.b16 %v994
  %v1259 = vpack.c.b16 %v1093, %v1091
  %v1260 = vpack.c.b16 %v1094, %v1092
  %v1261 = vpack.c.b16 %v1097, %v1095
  %v1262 = vpack.c.b16 %v1098, %v1096
  %v1263 = vpack.c.b16 %v1101, %v1099
  %v1264 = vpack.c.b16 %v1102, %v1100
  %v1265 = vpack.c.b16 %v1105, %v1103
  %v1266 = vpack.c.b16 %v1106, %v1104
  %v1267 = vpack.c.b16 %v1109, %v1107
  %v1268 = vpack.c.b16 %v1110, %v1108
  %v1269 = vpack.c.b16 %v1113, %v1111
  %v1270 = vpack.c.b16 %v1114, %v1112
  %v1271 = vpack.c.b16 %v1117, %v1115
  %v1272 = vpack.c.b16 %v1118, %v1116
  %v1273 = vpack.c.b16 %v1121, %v1119
  %v1274 = vpack.c.b16 %v1122, %v1120
  %v1275 = vpack.c.b16 %v1125, %v1123
  %v1276 = vpack.c.b16 %v1126, %v1124
  %v1277 = vpack.c.b16 %v1129, %v1127
  %v1278 = vpack.c.b16 %v1130, %v1128
  %v1279 = vpack.c.b16 %v1133, %v1131
  %v1280 = vpack.c.b16 %v1134, %v1132
  %v1281 = vpack.c.b16 %v1137, %v1135
  %v1282 = vpack.c.b16 %v1138, %v1136
  %v1283 = vpack.c.b16 %v1141, %v1139
  %v1284 = vpack.c.b16 %v1142, %v1140
  %v1285 = vpack.c.b16 %v1145, %v1143
  %v1286 = vpack.c.b16 %v1146, %v1144
  %v1287 = vpack.c.b16 %v1149, %v1147
  %v1288 = vpack.c.b16 %v1150, %v1148
  %v1289 = vpack.c.b16 %v1153, %v1151
  %v1290 = vpack.c.b16 %v1154, %v1152
  %v1291 = vpack.c.b16 %v1157, %v1155
  %v1292 = vpack.c.b16 %v1158, %v1156
  %v1293 = vpack.c.b16 %v1161, %v1159
  %v1294 = vpack.c.b16 %v1162, %v1160
  %v1295 = vpack.c.b16 %v1165, %v1163
  %v1296 = vpack.c.b16 %v1166, %v1164
  %v1297 = vpack.c.b16 %v1169, %v1167
  %v1298 = vpack.c.b16 %v1170, %v1168
  %v1299 = vpack.c.b16 %v1173, %v1171
  %v1300 = vpack.c.b16 %v1174, %v1172
  %v1301 = vpack.c.b16 %v1177, %v1175
  %v1302 = vpack.c.b16 %v1178, %v1176
  %v1303 = vpack.c.b16 %v1181, %v1179
  %v1304 = vpack.c.b16 %v1182, %v1180
  %v1305 = vpack.c.b16 %v1185, %v1183
  %v1306 = vpack.c.b16 %v1186, %v1184
  %v1307 = vpack.c.b16 %v1189, %v1187
  %v1308 = vpack.c.b16 %v1190, %v1188
  %v1309 = vpack.c.b16 %v1193, %v1191
  %v1310 = vpack.c.b16 %v1194, %v1192
  %v1311 = vpack.c.b16 %v1197, %v1195
  %v1312 = vpack.c.b16 %v1198, %v1196
  %v1313 = vpack.c.b16 %v1201, %v1199
  %v1314 = vpack.c.b16 %v1202, %v1200
  %v1315 = vpack.c.b16 %v1205, %v1203
  %v1316 = vpack.c.b16 %v1206, %v1204
  %v1317 = vpack.c.b16 %v1209, %v1207
  %v1318 = vpack.c.b16 %v1210, %v1208
  %v1319 = vpack.c.b16 %v1213, %v1211
  %v1320 = vpack.c.b16 %v1214, %v1212
  %v1321 = vpack.c.b16 %v1217, %v1215
  %v1322 = vpack.c.b16 %v1218, %v1216
  %v1323 = vpack.c.b16 %v1221, %v1219
  %v1324 = vpack.c.b16 %v1222, %v1220
  %v1325 = vpack.c.b16 %v1225, %v1223
  %v1326 = vpack.c.b16 %v1226, %v1224
  %v1327 = vpack.c.b16 %v1229, %v1227
  %v1328 = vpack.c.b16 %v1230, %v1228
  %v1329 = vpack.c.b16 %v1233, %v1231
  %v1330 = vpack.c.b16 %v1234, %v1232
  %v1331 = vpack.c.b16 %v1237, %v1235
  %v1332 = vpack.c.b16 %v1238, %v1236
  %v1333 = vpack.c.b16 %v1241, %v1239
  %v1334 = vpack.c.b16 %v1242, %v1240
  %v1335 = vpack.c.b16 %v1245, %v1243
  %v1336 = vpack.c.b16 %v1246, %v1244
  %v1337 = vpack.c.b16 %v1249, %v1247
  %v1338 = vpack.c.b16 %v1250, %v1248
  %v1339 = vpack.c.b16 %v1253, %v1251
  %v1340 = vpack.c.b16 %v1254, %v1252
  %v1341 = vpack.c.b16 %v1257, %v1255
  %v1342 = vpack.c.b16 %v1258, %v1256
  %v1428 = vsel %vm669, %v910, 0
  %1430 = vmatprep.subr.bf16.mxu0 %v1260
  %1431 = vmatpush1.bf16.msra.mxu0 %v1259
  %1432 = vmatprep.subr.bf16.mxu0 %v1262
  %1433 = vmatpush1.bf16.msra.mxu0 %v1261
  %1434 = vmatprep.subr.bf16.mxu0 %v1264
  %1435 = vmatpush1.bf16.msra.mxu0 %v1263
  %1436 = vmatprep.subr.bf16.mxu0 %v1266
  %1437 = vmatpush1.bf16.msra.mxu0 %v1265
  %1438 = vmatprep.subr.bf16.mxu0 %v1268
  %1439 = vmatpush1.bf16.msra.mxu0 %v1267
  %1440 = vmatprep.subr.bf16.mxu0 %v1270
  %1441 = vmatpush1.bf16.msra.mxu0 %v1269
  %1442 = vmatprep.subr.bf16.mxu0 %v1272
  %1443 = vmatpush1.bf16.msra.mxu0 %v1271
  %1444 = vmatprep.subr.bf16.mxu0 %v1274
  %1445 = vmatpush1.bf16.msra.mxu0 %v1273
  %1446 = vmatprep.subr.bf16.mxu0 %v1276
  %1447 = vmatpush1.bf16.msra.mxu0 %v1275
  %1448 = vmatprep.subr.bf16.mxu0 %v1278
  %1449 = vmatpush1.bf16.msra.mxu0 %v1277
  %1450 = vmatprep.subr.bf16.mxu0 %v1280
  %1451 = vmatpush1.bf16.msra.mxu0 %v1279
  %1452 = vmatprep.subr.bf16.mxu0 %v1282
  %1453 = vmatpush1.bf16.msra.mxu0 %v1281
  %1454 = vmatprep.subr.bf16.mxu0 %v1284
  %1455 = vmatpush1.bf16.msra.mxu0 %v1283
  %1456 = vmatprep.subr.bf16.mxu0 %v1286
  %1457 = vmatpush1.bf16.msra.mxu0 %v1285
  %1458 = vmatprep.subr.bf16.mxu0 %v1288
  %1459 = vmatpush1.bf16.msra.mxu0 %v1287
  %1460 = vmatprep.subr.bf16.mxu0 %v1290
  %1461 = vmatpush1.bf16.msra.mxu0 %v1289
  %1462 = vmatprep.mubr.bf16.mxu0 %v906
  %1463 = vmatmul.mubr.bf16.gmra.mrb[0].mxu0 %v905
  %v1464 = vpop.f32.mrb[0].mxu0
  %v1465 = vadd.f32 %v1000, %v1464
  %v1466 = vpop.f32.mrb[0].mxu0
  %v1467 = vadd.f32 %v1004, %v1466
  %v1468 = vpop.f32.mrb[0].mxu0
  %v1469 = vpop.f32.mrb[0].mxu0
  %1470 = vdwg.mxu0
  %1471 = vmatprep.subr.bf16.mxu0 %v1292
  %1472 = vmatpush1.bf16.msra.mxu0 %v1291
  %1473 = vmatprep.subr.bf16.mxu0 %v1294
  %1474 = vmatpush1.bf16.msra.mxu0 %v1293
  %1475 = vmatprep.subr.bf16.mxu0 %v1296
  %1476 = vmatpush1.bf16.msra.mxu0 %v1295
  %1477 = vmatprep.subr.bf16.mxu0 %v1298
  %1478 = vmatpush1.bf16.msra.mxu0 %v1297
  %1479 = vmatprep.subr.bf16.mxu0 %v1300
  %1480 = vmatpush1.bf16.msra.mxu0 %v1299
  %1481 = vmatprep.subr.bf16.mxu0 %v1302
  %1482 = vmatpush1.bf16.msra.mxu0 %v1301
  %1483 = vmatprep.subr.bf16.mxu0 %v1304
  %1484 = vmatpush1.bf16.msra.mxu0 %v1303
  %1485 = vmatprep.subr.bf16.mxu0 %v1306
  %1486 = vmatpush1.bf16.msra.mxu0 %v1305
  %1487 = vmatprep.subr.bf16.mxu0 %v1308
  %1488 = vmatpush1.bf16.msra.mxu0 %v1307
  %1489 = vmatprep.subr.bf16.mxu0 %v1310
  %1490 = vmatpush1.bf16.msra.mxu0 %v1309
  %1491 = vmatprep.subr.bf16.mxu0 %v1312
  %1492 = vmatpush1.bf16.msra.mxu0 %v1311
  %1493 = vmatprep.subr.bf16.mxu0 %v1314
  %1494 = vmatpush1.bf16.msra.mxu0 %v1313
  %1495 = vmatprep.subr.bf16.mxu0 %v1316
  %1496 = vmatpush1.bf16.msra.mxu0 %v1315
  %1497 = vmatprep.subr.bf16.mxu0 %v1318
  %1498 = vmatpush1.bf16.msra.mxu0 %v1317
  %1499 = vmatprep.subr.bf16.mxu0 %v1320
  %1500 = vmatpush1.bf16.msra.mxu0 %v1319
  %1501 = vmatprep.subr.bf16.mxu0 %v1322
  %1502 = vmatpush1.bf16.msra.mxu0 %v1321
  %1503 = vmatprep.mubr.bf16.mxu0 %v908
  %1504 = vmatmul.mubr.bf16.gmra.mrb[0].mxu0 %v907
  %v1505 = vpop.f32.mrb[0].mxu0
  %v1506 = vadd.f32 %v1465, %v1505
  %v1507 = vpop.f32.mrb[0].mxu0
  %v1508 = vadd.f32 %v1467, %v1507
  %v1509 = vpop.f32.mrb[0].mxu0
  %v1510 = vpop.f32.mrb[0].mxu0
  %1511 = vdwg.mxu0
  %1512 = vmatprep.subr.bf16.mxu0 %v1324
  %1513 = vmatpush1.bf16.msra.mxu0 %v1323
  %1514 = vmatprep.subr.bf16.mxu0 %v1326
  %1515 = vmatpush1.bf16.msra.mxu0 %v1325
  %1516 = vmatprep.subr.bf16.mxu0 %v1328
  %1517 = vmatpush1.bf16.msra.mxu0 %v1327
  %1518 = vmatprep.subr.bf16.mxu0 %v1330
  %1519 = vmatpush1.bf16.msra.mxu0 %v1329
  %1520 = vmatprep.subr.bf16.mxu0 %v1332
  %1521 = vmatpush1.bf16.msra.mxu0 %v1331
  %1522 = vmatprep.subr.bf16.mxu0 %v1334
  %1523 = vmatpush1.bf16.msra.mxu0 %v1333
  %1524 = vmatprep.subr.bf16.mxu0 %v1336
  %1525 = vmatpush1.bf16.msra.mxu0 %v1335
  %1526 = vmatprep.subr.bf16.mxu0 %v1338
  %1527 = vmatpush1.bf16.msra.mxu0 %v1337
  %1528 = vmatprep.subr.bf16.mxu0 %v1340
  %1529 = vmatpush1.bf16.msra.mxu0 %v1339
  %1530 = vmatprep.subr.bf16.mxu0 %v1342
  %1531 = vmatpush1.bf16.msra.mxu0 %v1341
  %1532 = vmatprep.subr.bf16.mxu0 0
  %1533 = vmatpush1.bf16.msra.mxu0 0
  %1534 = vmatprep.subr.bf16.mxu0 0
  %1535 = vmatpush1.bf16.msra.mxu0 0
  %1536 = vmatprep.subr.bf16.mxu0 0
  %1537 = vmatpush1.bf16.msra.mxu0 0
  %1538 = vmatprep.subr.bf16.mxu0 0
  %1539 = vmatpush1.bf16.msra.mxu0 0
  %1540 = vmatprep.subr.bf16.mxu0 0
  %1541 = vmatpush1.bf16.msra.mxu0 0
  %1542 = vmatprep.subr.bf16.mxu0 0
  %1543 = vmatpush1.bf16.msra.mxu0 0
  %1544 = vmatprep.mubr.bf16.mxu0 %v1428
  %1545 = vmatmul.mubr.bf16.gmra.mrb[0].mxu0 %v909
  %v1546 = vpop.f32.mrb[0].mxu0
  %v1547 = vadd.f32 %v1506, %v1546
  %v1548 = vpop.f32.mrb[0].mxu0
  %v1549 = vadd.f32 %v1508, %v1548
  %v1550 = vpop.f32.mrb[0].mxu0
  %v1551 = vpop.f32.mrb[0].mxu0
  %1552 = vdwg.mxu0
  %v1553 = vmax.f32 %v1547, 0.0
  %v1554 = vmax.f32 %v1549, 0.0
  %v1555 = vpack.c.bf16 %v1553, %v1553
  %v1556 = vpack.c.bf16 %v1554, %v1554
  %v1557 = vld [vmem:[%s5] sm:$0xf]
  %v1558 = vld [vmem:[%s5 + $0x4] sm:$0xf]
  %v1559 = vld [vmem:[%s5 + $0x8] sm:$0xf]
  %v1560 = vld [vmem:[%s5 + $0xc] sm:$0xf]
  %v1561 = vld [vmem:[%s5 + $0x10] sm:$0xf]
  %v1562 = vld [vmem:[%s5 + $0x14] sm:$0xf]
  %v1563 = vld [vmem:[%s5 + $0x18] sm:$0xf]
  %v1564 = vld [vmem:[%s5 + $0x1c] sm:$0xf]
  %v1565 = vld [vmem:[%s5 + $0x20] sm:$0xf]
  %v1566 = vld [vmem:[%s5 + $0x24] sm:$0xf]
  %v1567 = vld [vmem:[%s5 + $0x28] sm:$0xf]
  %v1568 = vld [vmem:[%s5 + $0x2c] sm:$0xf]
  %v1569 = vld [vmem:[%s5 + $0x30] sm:$0xf]
  %v1570 = vld [vmem:[%s5 + $0x34] sm:$0xf]
  %v1571 = vld [vmem:[%s5 + $0x38] sm:$0xf]
  %v1572 = vld [vmem:[%s5 + $0x3c] sm:$0xf]
  %v1573 = vld [vmem:[%s5 + $0x40] sm:$0xf]
  %v1574 = vld [vmem:[%s5 + $0x44] sm:$0xf]
  %v1575 = vld [vmem:[%s5 + $0x48] sm:$0xf]
  %v1576 = vld [vmem:[%s5 + $0x4c] sm:$0xf]
  %v1577 = vld [vmem:[%s5 + $0x50] sm:$0xf]
  %v1578 = vld [vmem:[%s5 + $0x54] sm:$0xf]
  %v1579 = vld [vmem:[%s5 + $0x58] sm:$0xf]
  %v1580 = vld [vmem:[%s5 + $0x5c] sm:$0xf]
  %v1581 = vld [vmem:[%s5 + $0x60] sm:$0xf]
  %v1582 = vld [vmem:[%s6] sm:$0x1]
  %v1584 = vlaneseq
  %v1585 = vshrl.u32 %v1584, 7
  %v1586 = vsub.s32 0, %v1585
  %v1587 = vrot.slane %v1582, %v1586
  %v1614 = vunpack.c.l.b16 %v1557
  %v1615 = vunpack.c.l.b16 %v1558
  %v1616 = vunpack.c.l.b16 %v1559
  %v1617 = vunpack.c.l.b16 %v1560
  %v1618 = vunpack.c.l.b16 %v1561
  %v1619 = vunpack.c.l.b16 %v1562
  %v1620 = vunpack.c.l.b16 %v1563
  %v1621 = vunpack.c.l.b16 %v1564
  %v1622 = vunpack.c.l.b16 %v1565
  %v1623 = vunpack.c.l.b16 %v1566
  %v1624 = vunpack.c.l.b16 %v1567
  %v1625 = vunpack.c.l.b16 %v1568
  %v1626 = vunpack.c.l.b16 %v1569
  %v1627 = vunpack.c.l.b16 %v1570
  %v1628 = vunpack.c.l.b16 %v1571
  %v1629 = vunpack.c.l.b16 %v1572
  %v1630 = vunpack.c.l.b16 %v1573
  %v1631 = vunpack.c.l.b16 %v1574
  %v1632 = vunpack.c.l.b16 %v1575
  %v1633 = vunpack.c.l.b16 %v1576
  %v1634 = vunpack.c.l.b16 %v1577
  %v1635 = vunpack.c.l.b16 %v1578
  %v1636 = vunpack.c.l.b16 %v1579
  %v1637 = vunpack.c.l.b16 %v1580
  %v1638 = vunpack.c.l.b16 %v1581
  %v1639 = vpack.c.b16 %v1615, %v1614
  %v1640 = vpack.c.b16 %v1617, %v1616
  %v1641 = vpack.c.b16 %v1619, %v1618
  %v1642 = vpack.c.b16 %v1621, %v1620
  %v1643 = vpack.c.b16 %v1623, %v1622
  %v1644 = vpack.c.b16 %v1625, %v1624
  %v1645 = vpack.c.b16 %v1627, %v1626
  %v1646 = vpack.c.b16 %v1629, %v1628
  %v1647 = vpack.c.b16 %v1631, %v1630
  %v1648 = vpack.c.b16 %v1633, %v1632
  %v1649 = vpack.c.b16 %v1635, %v1634
  %v1650 = vpack.c.b16 %v1637, %v1636
  %v1651 = vpack.c.b16 %v1638, %v1638
  %vm1664 = vcmask 588800
  %v1666 = vsel %vm1664, %v1556, 0
  %vm1668 = vcmask 1043456
  %v1670 = vsel %vm1668, %v1651, 0
  %1672 = vmatprep.subr.bf16.mxu0 0
  %1673 = vmatpush1.bf16.msra.mxu0 %v1639
  %1674 = vmatprep.subr.bf16.mxu0 0
  %1675 = vmatpush1.bf16.msra.mxu0 %v1640
  %1676 = vmatprep.subr.bf16.mxu0 0
  %1677 = vmatpush1.bf16.msra.mxu0 %v1641
  %1678 = vmatprep.subr.bf16.mxu0 0
  %1679 = vmatpush1.bf16.msra.mxu0 %v1642
  %1680 = vmatprep.subr.bf16.mxu0 0
  %1681 = vmatpush1.bf16.msra.mxu0 %v1643
  %1682 = vmatprep.subr.bf16.mxu0 0
  %1683 = vmatpush1.bf16.msra.mxu0 %v1644
  %1684 = vmatprep.subr.bf16.mxu0 0
  %1685 = vmatpush1.bf16.msra.mxu0 %v1645
  %1686 = vmatprep.subr.bf16.mxu0 0
  %1687 = vmatpush1.bf16.msra.mxu0 %v1646
  %1688 = vmatprep.subr.bf16.mxu0 0
  %1689 = vmatpush1.bf16.msra.mxu0 %v1647
  %1690 = vmatprep.subr.bf16.mxu0 0
  %1691 = vmatpush1.bf16.msra.mxu0 %v1648
  %1692 = vmatprep.subr.bf16.mxu0 0
  %1693 = vmatpush1.bf16.msra.mxu0 %v1649
  %1694 = vmatprep.subr.bf16.mxu0 0
  %1695 = vmatpush1.bf16.msra.mxu0 %v1650
  %1696 = vmatprep.subr.bf16.mxu0 0
  %1697 = vmatpush1.bf16.msra.mxu0 %v1670
  %1698 = vmatprep.subr.bf16.mxu0 0
  %1699 = vmatpush1.bf16.msra.mxu0 0
  %1700 = vmatprep.subr.bf16.mxu0 0
  %1701 = vmatpush1.bf16.msra.mxu0 0
  %1702 = vmatprep.subr.bf16.mxu0 0
  %1703 = vmatpush1.bf16.msra.mxu0 0
  %1704 = vmatprep.mubr.bf16.mxu0 %v1666
  %1705 = vmatmul.mubr.bf16.gmra.mrb[0].mxu0 %v1555
  %v1706 = vpop.f32.mrb[0].mxu0
  %v1707 = vadd.f32 %v1587, %v1706
  %v1708 = vpop.f32.mrb[0].mxu0
  %v1709 = vpop.f32.mrb[0].mxu0
  %v1710 = vpop.f32.mrb[0].mxu0
  %1711 = vdwg.mxu0
  %vm1712 = vcmask 39936
  %v1713 = vsel %vm1712, %v1707, -inf
  %1714 = vmax.xlane.f32.xlu0 %v1713
  %v1715 = vpop.xlane.xlu0 %1714
  %v1716 = vsub.f32 %v1707, %v1715
  %v1717 = vmul.f32 %v1716, 1.442695
  %v1718 = vpow.pop %v1717
  %v1719 = vsel %vm1712, %v1718, 0.0
  %1720 = vadd.xlane.f32.xlu0 %v1719
  %v1721 = vpop.xlane.xlu0 %1720
  %v1722 = vrcp.pop %v1721
  %v1723 = vmul.f32 %v1721, %v1722
  %v1724 = vsub.f32 2.0, %v1723
  %v1725 = vmul.f32 %v1722, %v1724
  %v1726 = vmul.f32 %v1718, %v1725
  %1727 = vst.msk [vmem:[%s7] sm:$0xff] %vm1712, %v1726
  // Predicated region
  $region30: #{net_forward.5} parent=0 // pred_check
    _
  $region31: #{net_forward.5} parent=0 // pred_check_branch
    %1729 = sbr.rel (0) target = $region33
  $region32: #{net_forward.5} parent=0 // pred_region
    _
  $region33: #{net_forward.5} parent=0 // pred_fallthru
    _
  // Predicated region
  $region34: #{net_forward.5} parent=0 // pred_check
    _
  $region35: #{net_forward.5} parent=0 // pred_check_branch
    %1731 = sbr.rel (0) target = $region37
  $region36: #{net_forward.5} parent=0 // pred_region
    _
  $region37: #{net_forward.5} parent=0 // pred_fallthru
    _

</llo_original>
